<compile_context>
chip_gen: v5e
topology: v5e:2x2
jax: 0.10.0
libtpu: 0.0.40
codegen_flags: <defaults>
</compile_context>

<pallas_src>
import jax
import jax.numpy as jnp
from jax.experimental import pallas as pl
from jax.experimental.pallas import tpu as pltpu

H, W = 16, 16
CONV_OUT = 16
FLAT = H * W                     # "321536" analogue (H*W for N=1)
AUDIO_DIM = 32                   # audio_input_shape
NUM_SUB = 4
SUB_DIM = AUDIO_DIM // NUM_SUB   # sub_embedding_size
TEXT_DIM = SUB_DIM               # text_input_shape (must equal sub_embedding_size)
TEXT_IN = 64                     # "3072" analogue
T_SEQ = 8                        # number of text rows
K_TOP = 5

_NEG_BIG = -1e30
_POS_BIG = 1e30
_IDX_BIG = 1 << 30


def _softplus(z):
    # log(1 + exp(z)), numerically stable (matches PyTorch BCE-with-logits form).
    return jnp.maximum(z, 0.0) + jnp.log1p(jnp.exp(-jnp.abs(z)))


# ---------------------------------------------------------------------------
# Single fused Pallas kernel: conv -> dense_audio / dense_text -> alignment
# softmax -> top/bottom-k -> BCE-with-logits mean.
# ---------------------------------------------------------------------------
def fused_kernel(patches_ref, convw_ref, convb_ref,
                 wa_ref, ba_ref,
                 text_ref, wt_ref, bt_ref,
                 audio_ref, textemb_ref, loss_ref):
    # --- audio_conv1 as matmul + bias + ReLU, lane-dense (16, 256) output -----
    conv = jnp.dot(convw_ref[...], patches_ref[...],
                   preferred_element_type=jnp.float32)           # (16, H*W)
    conv = jnp.maximum(conv + convb_ref[...], 0.0)
    # TODO(synk): Dropout(p=0.5) is treated as eval-mode identity (deterministic fwd).
    # conv already equals x.view(16, -1) for N=1 -> no transpose needed.

    # --- dense_audio: (16,256) @ (256,32) + bias ------------------------------
    audio_emb = jnp.dot(conv, wa_ref[...],
                        preferred_element_type=jnp.float32) + ba_ref[...]   # (16, 32)
    audio_ref[...] = audio_emb

    # --- dense_text: (8,64) @ (64,8) + bias -----------------------------------
    text_emb = jnp.dot(text_ref[...], wt_ref[...],
                       preferred_element_type=jnp.float32) + bt_ref[...]    # (8, 8)
    textemb_ref[...] = text_emb

    # --- alignment scores for all 4 sub-embeddings, stacked (4, 16, 8) --------
    # sub @ text_emb.T without an explicit transpose (contract last-last).
    scores = jnp.stack(
        [jax.lax.dot_general(
            audio_emb[:, s * SUB_DIM:(s + 1) * SUB_DIM], text_emb,
            (((1,), (1,)), ((), ())),
            preferred_element_type=jnp.float32)
         for s in range(NUM_SUB)],
        axis=0)                                                             # (4, 16, 8)

    # softmax over the text axis (dim=1 in torch), vectorized across the 4 subs.
    m = jnp.max(scores, axis=-1, keepdims=True)
    e = jnp.exp(scores - m)
    probs = e * pl.reciprocal(jnp.sum(e, axis=-1, keepdims=True), approx=True)

    row_i = jax.lax.broadcasted_iota(jnp.int32, (NUM_SUB, CONV_OUT, T_SEQ), 1)
    col_i = jax.lax.broadcasted_iota(jnp.int32, (NUM_SUB, CONV_OUT, T_SEQ), 2)
    flat_idx = row_i * T_SEQ + col_i                                        # (4, 16, 8)

    def _rmax(t):  # per-sub max over the (16, 8) block -> (4, 1, 1)
        return jnp.max(jnp.max(t, axis=2, keepdims=True), axis=1, keepdims=True)

    def _rmin(t):  # per-sub min over the (16, 8) block -> (4, 1, 1)
        return jnp.min(jnp.min(t, axis=2, keepdims=True), axis=1, keepdims=True)

    # top-K positives (label 1 -> softplus(-p)) and bottom-K negatives
    # (label 0 -> softplus(p)) via iterative max/min + first-occurrence masking;
    # each iteration handles all 4 subs at once (VPU/XLU only).
    cur_hi = probs
    cur_lo = probs
    loss_vec = jnp.zeros((NUM_SUB, 1, 1), jnp.float32)
    for _ in range(K_TOP):
        mx = _rmax(cur_hi)
        sel_hi = _rmin(jnp.where(cur_hi == mx, flat_idx, _IDX_BIG))
        cur_hi = jnp.where(flat_idx == sel_hi, _NEG_BIG, cur_hi)

        mn = _rmin(cur_lo)
        sel_lo = _rmin(jnp.where(cur_lo == mn, flat_idx, _IDX_BIG))
        cur_lo = jnp.where(flat_idx == sel_lo, _POS_BIG, cur_lo)

        loss_vec = loss_vec + _softplus(-mx) + _softplus(mn)

    n_samples = 2.0 * NUM_SUB * K_TOP
    loss_ref[...] = jnp.zeros((1, 1), jnp.float32) + jnp.sum(loss_vec) / n_samples


# ---------------------------------------------------------------------------
# Forward pass (mirrors ModalityAlignmentModel_2.forward)
# ---------------------------------------------------------------------------
def forward(params, x, text_features, epoch=0):
    del epoch  # unused, as in the PyTorch forward

    # im2col patch extraction is pure index glue; built directly as (9, H*W)
    # so the in-kernel conv matmul produces a lane-dense (16, H*W) output.
    xp = jnp.pad(x[0, 0], ((1, 1), (1, 1)))                  # (H+2, W+2)
    patches = jnp.stack(
        [xp[dh:dh + H, dw:dw + W].reshape(-1) for dh in range(3) for dw in range(3)],
        axis=0,
    ).astype(jnp.float32)                                    # (9, H*W)

    conv_w = params['conv_w'].reshape(CONV_OUT, 9).astype(jnp.float32)
    conv_b = params['conv_b'].reshape(CONV_OUT, 1).astype(jnp.float32)
    wa_t = params['wa_t'].astype(jnp.float32)                # (FLAT, AUDIO_DIM)
    ba = params['ba'].reshape(1, AUDIO_DIM).astype(jnp.float32)
    wt_t = params['wt_t'].astype(jnp.float32)                # (TEXT_IN, TEXT_DIM)
    bt = params['bt'].reshape(1, TEXT_DIM).astype(jnp.float32)
    tf = text_features.astype(jnp.float32)

    cost = pl.CostEstimate(
        flops=2 * (CONV_OUT * 9 * FLAT
                   + CONV_OUT * FLAT * AUDIO_DIM
                   + T_SEQ * TEXT_IN * TEXT_DIM
                   + NUM_SUB * CONV_OUT * SUB_DIM * T_SEQ),
        transcendentals=NUM_SUB * CONV_OUT * T_SEQ + 4 * NUM_SUB * K_TOP,
        bytes_accessed=4 * (9 * FLAT + CONV_OUT * 9 + CONV_OUT
                            + FLAT * AUDIO_DIM + AUDIO_DIM
                            + T_SEQ * TEXT_IN + TEXT_IN * TEXT_DIM + TEXT_DIM
                            + CONV_OUT * AUDIO_DIM + T_SEQ * TEXT_DIM + 1),
    )

    audio_emb, text_emb, loss = pl.pallas_call(
        fused_kernel,
        out_shape=(
            jax.ShapeDtypeStruct((CONV_OUT, AUDIO_DIM), jnp.float32),
            jax.ShapeDtypeStruct((T_SEQ, TEXT_DIM), jnp.float32),
            jax.ShapeDtypeStruct((1, 1), jnp.float32),
        ),
        grid=(1,),
        in_specs=[
            pl.BlockSpec((9, FLAT), lambda i: (0, 0)),
            pl.BlockSpec((CONV_OUT, 9), lambda i: (0, 0)),
            pl.BlockSpec((CONV_OUT, 1), lambda i: (0, 0)),
            pl.BlockSpec((FLAT, AUDIO_DIM), lambda i: (0, 0)),
            pl.BlockSpec((1, AUDIO_DIM), lambda i: (0, 0)),
            pl.BlockSpec((T_SEQ, TEXT_IN), lambda i: (0, 0)),
            pl.BlockSpec((TEXT_IN, TEXT_DIM), lambda i: (0, 0)),
            pl.BlockSpec((1, TEXT_DIM), lambda i: (0, 0)),
        ],
        out_specs=(
            pl.BlockSpec((CONV_OUT, AUDIO_DIM), lambda i: (0, 0)),
            pl.BlockSpec((T_SEQ, TEXT_DIM), lambda i: (0, 0)),
            pl.BlockSpec((1, 1), lambda i: (0, 0)),
        ),
        compiler_params=pltpu.CompilerParams(dimension_semantics=("arbitrary",)),
        cost_estimate=cost,
    )(patches, conv_w, conv_b, wa_t, ba, tf, wt_t, bt)

    return audio_emb, text_emb, loss[0, 0]


# ---------------------------------------------------------------------------
# Deterministic parameter init (shapes from __init__, scaled like torch defaults).
# Dense weights are stored pre-transposed (K, N) so no XLA transpose is needed
# between the host glue and the fused kernel.
# ---------------------------------------------------------------------------
def init_params(key):
    ks = jax.random.split(key, 6)

    def u(k, shape, fan_in):
        bound = 1.0 / jnp.sqrt(jnp.float32(fan_in))
        return jax.random.uniform(k, shape, jnp.float32, -bound, bound)

    return dict(
        conv_w=u(ks[0], (CONV_OUT, 1, 3, 3), 9),
        conv_b=u(ks[1], (CONV_OUT,), 9),
        wa_t=u(ks[2], (FLAT, AUDIO_DIM), FLAT),       # dense_audio weight, (K, N)
        ba=u(ks[3], (AUDIO_DIM,), FLAT),
        wt_t=u(ks[4], (TEXT_IN, TEXT_DIM), TEXT_IN),  # dense_text weight, (K, N)
        bt=u(ks[5], (TEXT_DIM,), TEXT_IN),
    )


if __name__ == "__main__":
    key = jax.random.PRNGKey(0)
    k_param, k_x, k_t = jax.random.split(key, 3)

    params = init_params(k_param)
    x = jax.random.normal(k_x, (1, 1, H, W), jnp.float32)            # NCHW audio input
    text_features = jax.random.normal(k_t, (T_SEQ, TEXT_IN), jnp.float32)

    fwd = jax.jit(forward)
    audio_emb, text_emb, loss = fwd(params, x, text_features, 0)
    jax.block_until_ready((audio_emb, text_emb, loss))

    assert audio_emb.shape == (CONV_OUT, AUDIO_DIM)
    assert text_emb.shape == (T_SEQ, TEXT_DIM)
    assert loss.shape == ()
    assert bool(jnp.isfinite(loss))
    print("KERNEL_OK")
</pallas_src>

<mosaic_0001>
module attributes {stable_mosaic.version = 11 : i64} {
  func.func @fused_kernel(%arg0: i32, %arg1: memref<9x256xf32, #tpu.memory_space<vmem>>, %arg2: memref<16x9xf32, #tpu.memory_space<vmem>>, %arg3: memref<16x1xf32, #tpu.memory_space<vmem>>, %arg4: memref<256x32xf32, #tpu.memory_space<vmem>>, %arg5: memref<1x32xf32, #tpu.memory_space<vmem>>, %arg6: memref<8x64xf32, #tpu.memory_space<vmem>>, %arg7: memref<64x8xf32, #tpu.memory_space<vmem>>, %arg8: memref<1x8xf32, #tpu.memory_space<vmem>>, %arg9: memref<16x32xf32, #tpu.memory_space<vmem>>, %arg10: memref<8x8xf32, #tpu.memory_space<vmem>>, %arg11: memref<1x1xf32, #tpu.memory_space<vmem>>) attributes {dimension_semantics = [#tpu.dimension_semantics<arbitrary>], iteration_bounds = array<i64: 1>, scalar_prefetch = 0 : i64, scratch_operands = 0 : i64, tpu.core_type = #tpu.core_type<tc>, window_params = [{pipeline_mode = #tpu.pipeline_mode<synchronous>, transform_indices = @transform_0, window_bounds = array<i64: 9, 256>}, {pipeline_mode = #tpu.pipeline_mode<synchronous>, transform_indices = @transform_1, window_bounds = array<i64: 16, 9>}, {pipeline_mode = #tpu.pipeline_mode<synchronous>, transform_indices = @transform_2, window_bounds = array<i64: 16, 1>}, {pipeline_mode = #tpu.pipeline_mode<synchronous>, transform_indices = @transform_3, window_bounds = array<i64: 256, 32>}, {pipeline_mode = #tpu.pipeline_mode<synchronous>, transform_indices = @transform_4, window_bounds = array<i64: 1, 32>}, {pipeline_mode = #tpu.pipeline_mode<synchronous>, transform_indices = @transform_5, window_bounds = array<i64: 8, 64>}, {pipeline_mode = #tpu.pipeline_mode<synchronous>, transform_indices = @transform_6, window_bounds = array<i64: 64, 8>}, {pipeline_mode = #tpu.pipeline_mode<synchronous>, transform_indices = @transform_7, window_bounds = array<i64: 1, 8>}, {pipeline_mode = #tpu.pipeline_mode<synchronous>, transform_indices = @transform_8, window_bounds = array<i64: 16, 32>}, {pipeline_mode = #tpu.pipeline_mode<synchronous>, transform_indices = @transform_9, window_bounds = array<i64: 8, 8>}, {pipeline_mode = #tpu.pipeline_mode<synchronous>, transform_indices = @transform_10, window_bounds = array<i64: 1, 1>}]} {
    %c0 = arith.constant 0 : index
    %c0_0 = arith.constant 0 : index
    %0 = vector.load %arg2[%c0, %c0_0] : memref<16x9xf32, #tpu.memory_space<vmem>>, vector<16x9xf32>
    %c0_1 = arith.constant 0 : index
    %c0_2 = arith.constant 0 : index
    %1 = vector.load %arg1[%c0_1, %c0_2] : memref<9x256xf32, #tpu.memory_space<vmem>>, vector<9x256xf32>
    %cst = arith.constant dense<0.000000e+00> : vector<16x256xf32>
    %2 = tpu.matmul %0, %1, %cst {dimension_numbers = #tpu.dot_dimension_numbers<[1], [0], [0], [1], [0, 0, 1, 1], [], []>} : vector<16x9xf32>, vector<9x256xf32>, vector<16x256xf32> -> vector<16x256xf32>
    %c0_3 = arith.constant 0 : index
    %c0_4 = arith.constant 0 : index
    %3 = vector.load %arg3[%c0_3, %c0_4] : memref<16x1xf32, #tpu.memory_space<vmem>>, vector<16x1xf32>
    %4 = vector.broadcast %3 : vector<16x1xf32> to vector<16x256xf32>
    %5 = arith.addf %2, %4 : vector<16x256xf32>
    %cst_5 = arith.constant 0.000000e+00 : f32
    %6 = vector.broadcast %cst_5 : f32 to vector<16x256xf32>
    %7 = arith.maximumf %5, %6 : vector<16x256xf32>
    %c0_6 = arith.constant 0 : index
    %c0_7 = arith.constant 0 : index
    %8 = vector.load %arg4[%c0_6, %c0_7] : memref<256x32xf32, #tpu.memory_space<vmem>>, vector<256x32xf32>
    %cst_8 = arith.constant dense<0.000000e+00> : vector<16x32xf32>
    %9 = tpu.matmul %7, %8, %cst_8 {dimension_numbers = #tpu.dot_dimension_numbers<[1], [0], [0], [1], [0, 0, 1, 1], [], []>} : vector<16x256xf32>, vector<256x32xf32>, vector<16x32xf32> -> vector<16x32xf32>
    %c0_9 = arith.constant 0 : index
    %c0_10 = arith.constant 0 : index
    %10 = vector.load %arg5[%c0_9, %c0_10] : memref<1x32xf32, #tpu.memory_space<vmem>>, vector<1x32xf32>
    %11 = vector.broadcast %10 : vector<1x32xf32> to vector<16x32xf32>
    %12 = arith.addf %9, %11 : vector<16x32xf32>
    %c0_11 = arith.constant 0 : index
    %c0_12 = arith.constant 0 : index
    %13 = vector.load %arg9[%c0_11, %c0_12] : memref<16x32xf32, #tpu.memory_space<vmem>>, vector<16x32xf32>
    tpu.vector_store %arg9[%c0_11, %c0_12], %12 {strides = array<i32>} : memref<16x32xf32, #tpu.memory_space<vmem>>, vector<16x32xf32>,
    %c0_13 = arith.constant 0 : index
    %c0_14 = arith.constant 0 : index
    %14 = vector.load %arg6[%c0_13, %c0_14] : memref<8x64xf32, #tpu.memory_space<vmem>>, vector<8x64xf32>
    %c0_15 = arith.constant 0 : index
    %c0_16 = arith.constant 0 : index
    %15 = vector.load %arg7[%c0_15, %c0_16] : memref<64x8xf32, #tpu.memory_space<vmem>>, vector<64x8xf32>
    %cst_17 = arith.constant dense<0.000000e+00> : vector<8x8xf32>
    %16 = tpu.matmul %14, %15, %cst_17 {dimension_numbers = #tpu.dot_dimension_numbers<[1], [0], [0], [1], [0, 0, 1, 1], [], []>} : vector<8x64xf32>, vector<64x8xf32>, vector<8x8xf32> -> vector<8x8xf32>
    %c0_18 = arith.constant 0 : index
    %c0_19 = arith.constant 0 : index
    %17 = vector.load %arg8[%c0_18, %c0_19] : memref<1x8xf32, #tpu.memory_space<vmem>>, vector<1x8xf32>
    %18 = vector.broadcast %17 : vector<1x8xf32> to vector<8x8xf32>
    %19 = arith.addf %16, %18 : vector<8x8xf32>
    %c0_20 = arith.constant 0 : index
    %c0_21 = arith.constant 0 : index
    %20 = vector.load %arg10[%c0_20, %c0_21] : memref<8x8xf32, #tpu.memory_space<vmem>>, vector<8x8xf32>
    tpu.vector_store %arg10[%c0_20, %c0_21], %19 {strides = array<i32>} : memref<8x8xf32, #tpu.memory_space<vmem>>, vector<8x8xf32>,
    %21 = vector.extract_strided_slice %12 {offsets = [0, 0], sizes = [16, 8], strides = [1, 1]} : vector<16x32xf32> to vector<16x8xf32>
    %cst_22 = arith.constant dense<0.000000e+00> : vector<16x8xf32>
    %22 = tpu.matmul %21, %19, %cst_22 {dimension_numbers = #tpu.dot_dimension_numbers<[1], [1], [0], [0], [0, 0, 1, 0], [], []>} : vector<16x8xf32>, vector<8x8xf32>, vector<16x8xf32> -> vector<16x8xf32>
    %23 = vector.extract_strided_slice %12 {offsets = [0, 8], sizes = [16, 8], strides = [1, 1]} : vector<16x32xf32> to vector<16x8xf32>
    %cst_23 = arith.constant dense<0.000000e+00> : vector<16x8xf32>
    %24 = tpu.matmul %23, %19, %cst_23 {dimension_numbers = #tpu.dot_dimension_numbers<[1], [1], [0], [0], [0, 0, 1, 0], [], []>} : vector<16x8xf32>, vector<8x8xf32>, vector<16x8xf32> -> vector<16x8xf32>
    %25 = vector.extract_strided_slice %12 {offsets = [0, 16], sizes = [16, 8], strides = [1, 1]} : vector<16x32xf32> to vector<16x8xf32>
    %cst_24 = arith.constant dense<0.000000e+00> : vector<16x8xf32>
    %26 = tpu.matmul %25, %19, %cst_24 {dimension_numbers = #tpu.dot_dimension_numbers<[1], [1], [0], [0], [0, 0, 1, 0], [], []>} : vector<16x8xf32>, vector<8x8xf32>, vector<16x8xf32> -> vector<16x8xf32>
    %27 = vector.extract_strided_slice %12 {offsets = [0, 24], sizes = [16, 8], strides = [1, 1]} : vector<16x32xf32> to vector<16x8xf32>
    %cst_25 = arith.constant dense<0.000000e+00> : vector<16x8xf32>
    %28 = tpu.matmul %27, %19, %cst_25 {dimension_numbers = #tpu.dot_dimension_numbers<[1], [1], [0], [0], [0, 0, 1, 0], [], []>} : vector<16x8xf32>, vector<8x8xf32>, vector<16x8xf32> -> vector<16x8xf32>
    %29 = vector.shape_cast %22 : vector<16x8xf32> to vector<1x16x8xf32>
    %30 = vector.shape_cast %24 : vector<16x8xf32> to vector<1x16x8xf32>
    %31 = vector.shape_cast %26 : vector<16x8xf32> to vector<1x16x8xf32>
    %32 = vector.shape_cast %28 : vector<16x8xf32> to vector<1x16x8xf32>
    %33 = tpu.concatenate %29, %30, %31, %32 in 0 : vector<1x16x8xf32>, vector<1x16x8xf32>, vector<1x16x8xf32>, vector<1x16x8xf32> -> vector<4x16x8xf32>
    %cst_26 = arith.constant dense<0xFF800000> : vector<4x16xf32>
    %34 = vector.multi_reduction <maximumf>, %33, %cst_26 [2] : vector<4x16x8xf32> to vector<4x16xf32>
    %35 = vector.shape_cast %34 : vector<4x16xf32> to vector<4x16x1xf32>
    %36 = vector.broadcast %35 : vector<4x16x1xf32> to vector<4x16x8xf32>
    %37 = arith.subf %33, %36 : vector<4x16x8xf32>
    %38 = math.exp %37 : vector<4x16x8xf32>
    %cst_27 = arith.constant dense<0.000000e+00> : vector<4x16xf32>
    %39 = vector.multi_reduction <add>, %38, %cst_27 [2] : vector<4x16x8xf32> to vector<4x16xf32>
    %40 = vector.shape_cast %39 : vector<4x16xf32> to vector<4x16x1xf32>
    %41 = tpu.reciprocal %40 {approx = true} : vector<4x16x1xf32> -> vector<4x16x1xf32>
    %42 = vector.broadcast %41 : vector<4x16x1xf32> to vector<4x16x8xf32>
    %43 = arith.mulf %38, %42 : vector<4x16x8xf32>
    %44 = tpu.iota {dimensions = array<i32: 1>} : vector<4x16x8xi32>
    %45 = tpu.iota {dimensions = array<i32: 2>} : vector<4x16x8xi32>
    %c8_i32 = arith.constant 8 : i32
    %46 = vector.broadcast %c8_i32 : i32 to vector<4x16x8xi32>
    %47 = arith.muli %44, %46 : vector<4x16x8xi32>
    %48 = arith.addi %47, %45 : vector<4x16x8xi32>
    %cst_28 = arith.constant 0.000000e+00 : f32
    %49 = vector.broadcast %cst_28 : f32 to vector<4x1x1xf32>
    %cst_29 = arith.constant dense<0xFF800000> : vector<4x16xf32>
    %50 = vector.multi_reduction <maximumf>, %43, %cst_29 [2] : vector<4x16x8xf32> to vector<4x16xf32>
    %51 = vector.shape_cast %50 : vector<4x16xf32> to vector<4x16x1xf32>
    %cst_30 = arith.constant dense<0xFF800000> : vector<4x1xf32>
    %52 = vector.multi_reduction <maximumf>, %51, %cst_30 [1] : vector<4x16x1xf32> to vector<4x1xf32>
    %53 = vector.shape_cast %52 : vector<4x1xf32> to vector<4x1x1xf32>
    %54 = vector.broadcast %53 : vector<4x1x1xf32> to vector<4x16x8xf32>
    %55 = arith.cmpf oeq, %43, %54 : vector<4x16x8xf32>
    %c1073741824_i32 = arith.constant 1073741824 : i32
    %56 = vector.broadcast %c1073741824_i32 : i32 to vector<4x16x8xi32>
    %57 = arith.select %55, %48, %56 : vector<4x16x8xi1>, vector<4x16x8xi32>
    %cst_31 = arith.constant dense<2147483647> : vector<4x16xi32>
    %58 = vector.multi_reduction <minsi>, %57, %cst_31 [2] : vector<4x16x8xi32> to vector<4x16xi32>
    %59 = vector.shape_cast %58 : vector<4x16xi32> to vector<4x16x1xi32>
    %cst_32 = arith.constant dense<2147483647> : vector<4x1xi32>
    %60 = vector.multi_reduction <minsi>, %59, %cst_32 [1] : vector<4x16x1xi32> to vector<4x1xi32>
    %61 = vector.shape_cast %60 : vector<4x1xi32> to vector<4x1x1xi32>
    %62 = vector.broadcast %61 : vector<4x1x1xi32> to vector<4x16x8xi32>
    %63 = arith.cmpi eq, %48, %62 : vector<4x16x8xi32>
    %cst_33 = arith.constant -1.000000e+30 : f32
    %64 = vector.broadcast %cst_33 : f32 to vector<4x16x8xf32>
    %65 = arith.select %63, %64, %43 : vector<4x16x8xi1>, vector<4x16x8xf32>
    %cst_34 = arith.constant dense<0x7F800000> : vector<4x16xf32>
    %66 = vector.multi_reduction <minimumf>, %43, %cst_34 [2] : vector<4x16x8xf32> to vector<4x16xf32>
    %67 = vector.shape_cast %66 : vector<4x16xf32> to vector<4x16x1xf32>
    %cst_35 = arith.constant dense<0x7F800000> : vector<4x1xf32>
    %68 = vector.multi_reduction <minimumf>, %67, %cst_35 [1] : vector<4x16x1xf32> to vector<4x1xf32>
    %69 = vector.shape_cast %68 : vector<4x1xf32> to vector<4x1x1xf32>
    %70 = vector.broadcast %69 : vector<4x1x1xf32> to vector<4x16x8xf32>
    %71 = arith.cmpf oeq, %43, %70 : vector<4x16x8xf32>
    %c1073741824_i32_36 = arith.constant 1073741824 : i32
    %72 = vector.broadcast %c1073741824_i32_36 : i32 to vector<4x16x8xi32>
    %73 = arith.select %71, %48, %72 : vector<4x16x8xi1>, vector<4x16x8xi32>
    %cst_37 = arith.constant dense<2147483647> : vector<4x16xi32>
    %74 = vector.multi_reduction <minsi>, %73, %cst_37 [2] : vector<4x16x8xi32> to vector<4x16xi32>
    %75 = vector.shape_cast %74 : vector<4x16xi32> to vector<4x16x1xi32>
    %cst_38 = arith.constant dense<2147483647> : vector<4x1xi32>
    %76 = vector.multi_reduction <minsi>, %75, %cst_38 [1] : vector<4x16x1xi32> to vector<4x1xi32>
    %77 = vector.shape_cast %76 : vector<4x1xi32> to vector<4x1x1xi32>
    %78 = vector.broadcast %77 : vector<4x1x1xi32> to vector<4x16x8xi32>
    %79 = arith.cmpi eq, %48, %78 : vector<4x16x8xi32>
    %cst_39 = arith.constant 1.000000e+30 : f32
    %80 = vector.broadcast %cst_39 : f32 to vector<4x16x8xf32>
    %81 = arith.select %79, %80, %43 : vector<4x16x8xi1>, vector<4x16x8xf32>
    %cst_40 = arith.constant 0.000000e+00 : f32
    %82 = vector.broadcast %cst_40 : f32 to vector<4x1x1xf32>
    %83 = arith.subf %82, %53 : vector<4x1x1xf32>
    %cst_41 = arith.constant 0.000000e+00 : f32
    %84 = vector.broadcast %cst_41 : f32 to vector<4x1x1xf32>
    %85 = arith.maximumf %83, %84 : vector<4x1x1xf32>
    %86 = math.absf %83 : vector<4x1x1xf32>
    %cst_42 = arith.constant 0.000000e+00 : f32
    %87 = vector.broadcast %cst_42 : f32 to vector<4x1x1xf32>
    %88 = arith.subf %87, %86 : vector<4x1x1xf32>
    %89 = math.exp %88 : vector<4x1x1xf32>
    %90 = math.log1p %89 : vector<4x1x1xf32>
    %91 = arith.addf %85, %90 : vector<4x1x1xf32>
    %92 = arith.addf %49, %91 : vector<4x1x1xf32>
    %cst_43 = arith.constant 0.000000e+00 : f32
    %93 = vector.broadcast %cst_43 : f32 to vector<4x1x1xf32>
    %94 = arith.maximumf %69, %93 : vector<4x1x1xf32>
    %95 = math.absf %69 : vector<4x1x1xf32>
    %cst_44 = arith.constant 0.000000e+00 : f32
    %96 = vector.broadcast %cst_44 : f32 to vector<4x1x1xf32>
    %97 = arith.subf %96, %95 : vector<4x1x1xf32>
    %98 = math.exp %97 : vector<4x1x1xf32>
    %99 = math.log1p %98 : vector<4x1x1xf32>
    %100 = arith.addf %94, %99 : vector<4x1x1xf32>
    %101 = arith.addf %92, %100 : vector<4x1x1xf32>
    %cst_45 = arith.constant dense<0xFF800000> : vector<4x16xf32>
    %102 = vector.multi_reduction <maximumf>, %65, %cst_45 [2] : vector<4x16x8xf32> to vector<4x16xf32>
    %103 = vector.shape_cast %102 : vector<4x16xf32> to vector<4x16x1xf32>
    %cst_46 = arith.constant dense<0xFF800000> : vector<4x1xf32>
    %104 = vector.multi_reduction <maximumf>, %103, %cst_46 [1] : vector<4x16x1xf32> to vector<4x1xf32>
    %105 = vector.shape_cast %104 : vector<4x1xf32> to vector<4x1x1xf32>
    %106 = vector.broadcast %105 : vector<4x1x1xf32> to vector<4x16x8xf32>
    %107 = arith.cmpf oeq, %65, %106 : vector<4x16x8xf32>
    %c1073741824_i32_47 = arith.constant 1073741824 : i32
    %108 = vector.broadcast %c1073741824_i32_47 : i32 to vector<4x16x8xi32>
    %109 = arith.select %107, %48, %108 : vector<4x16x8xi1>, vector<4x16x8xi32>
    %cst_48 = arith.constant dense<2147483647> : vector<4x16xi32>
    %110 = vector.multi_reduction <minsi>, %109, %cst_48 [2] : vector<4x16x8xi32> to vector<4x16xi32>
    %111 = vector.shape_cast %110 : vector<4x16xi32> to vector<4x16x1xi32>
    %cst_49 = arith.constant dense<2147483647> : vector<4x1xi32>
    %112 = vector.multi_reduction <minsi>, %111, %cst_49 [1] : vector<4x16x1xi32> to vector<4x1xi32>
    %113 = vector.shape_cast %112 : vector<4x1xi32> to vector<4x1x1xi32>
    %114 = vector.broadcast %113 : vector<4x1x1xi32> to vector<4x16x8xi32>
    %115 = arith.cmpi eq, %48, %114 : vector<4x16x8xi32>
    %cst_50 = arith.constant -1.000000e+30 : f32
    %116 = vector.broadcast %cst_50 : f32 to vector<4x16x8xf32>
    %117 = arith.select %115, %116, %65 : vector<4x16x8xi1>, vector<4x16x8xf32>
    %cst_51 = arith.constant dense<0x7F800000> : vector<4x16xf32>
    %118 = vector.multi_reduction <minimumf>, %81, %cst_51 [2] : vector<4x16x8xf32> to vector<4x16xf32>
    %119 = vector.shape_cast %118 : vector<4x16xf32> to vector<4x16x1xf32>
    %cst_52 = arith.constant dense<0x7F800000> : vector<4x1xf32>
    %120 = vector.multi_reduction <minimumf>, %119, %cst_52 [1] : vector<4x16x1xf32> to vector<4x1xf32>
    %121 = vector.shape_cast %120 : vector<4x1xf32> to vector<4x1x1xf32>
    %122 = vector.broadcast %121 : vector<4x1x1xf32> to vector<4x16x8xf32>
    %123 = arith.cmpf oeq, %81, %122 : vector<4x16x8xf32>
    %c1073741824_i32_53 = arith.constant 1073741824 : i32
    %124 = vector.broadcast %c1073741824_i32_53 : i32 to vector<4x16x8xi32>
    %125 = arith.select %123, %48, %124 : vector<4x16x8xi1>, vector<4x16x8xi32>
    %cst_54 = arith.constant dense<2147483647> : vector<4x16xi32>
    %126 = vector.multi_reduction <minsi>, %125, %cst_54 [2] : vector<4x16x8xi32> to vector<4x16xi32>
    %127 = vector.shape_cast %126 : vector<4x16xi32> to vector<4x16x1xi32>
    %cst_55 = arith.constant dense<2147483647> : vector<4x1xi32>
    %128 = vector.multi_reduction <minsi>, %127, %cst_55 [1] : vector<4x16x1xi32> to vector<4x1xi32>
    %129 = vector.shape_cast %128 : vector<4x1xi32> to vector<4x1x1xi32>
    %130 = vector.broadcast %129 : vector<4x1x1xi32> to vector<4x16x8xi32>
    %131 = arith.cmpi eq, %48, %130 : vector<4x16x8xi32>
    %cst_56 = arith.constant 1.000000e+30 : f32
    %132 = vector.broadcast %cst_56 : f32 to vector<4x16x8xf32>
    %133 = arith.select %131, %132, %81 : vector<4x16x8xi1>, vector<4x16x8xf32>
    %cst_57 = arith.constant 0.000000e+00 : f32
    %134 = vector.broadcast %cst_57 : f32 to vector<4x1x1xf32>
    %135 = arith.subf %134, %105 : vector<4x1x1xf32>
    %cst_58 = arith.constant 0.000000e+00 : f32
    %136 = vector.broadcast %cst_58 : f32 to vector<4x1x1xf32>
    %137 = arith.maximumf %135, %136 : vector<4x1x1xf32>
    %138 = math.absf %135 : vector<4x1x1xf32>
    %cst_59 = arith.constant 0.000000e+00 : f32
    %139 = vector.broadcast %cst_59 : f32 to vector<4x1x1xf32>
    %140 = arith.subf %139, %138 : vector<4x1x1xf32>
    %141 = math.exp %140 : vector<4x1x1xf32>
    %142 = math.log1p %141 : vector<4x1x1xf32>
    %143 = arith.addf %137, %142 : vector<4x1x1xf32>
    %144 = arith.addf %101, %143 : vector<4x1x1xf32>
    %cst_60 = arith.constant 0.000000e+00 : f32
    %145 = vector.broadcast %cst_60 : f32 to vector<4x1x1xf32>
    %146 = arith.maximumf %121, %145 : vector<4x1x1xf32>
    %147 = math.absf %121 : vector<4x1x1xf32>
    %cst_61 = arith.constant 0.000000e+00 : f32
    %148 = vector.broadcast %cst_61 : f32 to vector<4x1x1xf32>
    %149 = arith.subf %148, %147 : vector<4x1x1xf32>
    %150 = math.exp %149 : vector<4x1x1xf32>
    %151 = math.log1p %150 : vector<4x1x1xf32>
    %152 = arith.addf %146, %151 : vector<4x1x1xf32>
    %153 = arith.addf %144, %152 : vector<4x1x1xf32>
    %cst_62 = arith.constant dense<0xFF800000> : vector<4x16xf32>
    %154 = vector.multi_reduction <maximumf>, %117, %cst_62 [2] : vector<4x16x8xf32> to vector<4x16xf32>
    %155 = vector.shape_cast %154 : vector<4x16xf32> to vector<4x16x1xf32>
    %cst_63 = arith.constant dense<0xFF800000> : vector<4x1xf32>
    %156 = vector.multi_reduction <maximumf>, %155, %cst_63 [1] : vector<4x16x1xf32> to vector<4x1xf32>
    %157 = vector.shape_cast %156 : vector<4x1xf32> to vector<4x1x1xf32>
    %158 = vector.broadcast %157 : vector<4x1x1xf32> to vector<4x16x8xf32>
    %159 = arith.cmpf oeq, %117, %158 : vector<4x16x8xf32>
    %c1073741824_i32_64 = arith.constant 1073741824 : i32
    %160 = vector.broadcast %c1073741824_i32_64 : i32 to vector<4x16x8xi32>
    %161 = arith.select %159, %48, %160 : vector<4x16x8xi1>, vector<4x16x8xi32>
    %cst_65 = arith.constant dense<2147483647> : vector<4x16xi32>
    %162 = vector.multi_reduction <minsi>, %161, %cst_65 [2] : vector<4x16x8xi32> to vector<4x16xi32>
    %163 = vector.shape_cast %162 : vector<4x16xi32> to vector<4x16x1xi32>
    %cst_66 = arith.constant dense<2147483647> : vector<4x1xi32>
    %164 = vector.multi_reduction <minsi>, %163, %cst_66 [1] : vector<4x16x1xi32> to vector<4x1xi32>
    %165 = vector.shape_cast %164 : vector<4x1xi32> to vector<4x1x1xi32>
    %166 = vector.broadcast %165 : vector<4x1x1xi32> to vector<4x16x8xi32>
    %167 = arith.cmpi eq, %48, %166 : vector<4x16x8xi32>
    %cst_67 = arith.constant -1.000000e+30 : f32
    %168 = vector.broadcast %cst_67 : f32 to vector<4x16x8xf32>
    %169 = arith.select %167, %168, %117 : vector<4x16x8xi1>, vector<4x16x8xf32>
    %cst_68 = arith.constant dense<0x7F800000> : vector<4x16xf32>
    %170 = vector.multi_reduction <minimumf>, %133, %cst_68 [2] : vector<4x16x8xf32> to vector<4x16xf32>
    %171 = vector.shape_cast %170 : vector<4x16xf32> to vector<4x16x1xf32>
    %cst_69 = arith.constant dense<0x7F800000> : vector<4x1xf32>
    %172 = vector.multi_reduction <minimumf>, %171, %cst_69 [1] : vector<4x16x1xf32> to vector<4x1xf32>
    %173 = vector.shape_cast %172 : vector<4x1xf32> to vector<4x1x1xf32>
    %174 = vector.broadcast %173 : vector<4x1x1xf32> to vector<4x16x8xf32>
    %175 = arith.cmpf oeq, %133, %174 : vector<4x16x8xf32>
    %c1073741824_i32_70 = arith.constant 1073741824 : i32
    %176 = vector.broadcast %c1073741824_i32_70 : i32 to vector<4x16x8xi32>
    %177 = arith.select %175, %48, %176 : vector<4x16x8xi1>, vector<4x16x8xi32>
    %cst_71 = arith.constant dense<2147483647> : vector<4x16xi32>
    %178 = vector.multi_reduction <minsi>, %177, %cst_71 [2] : vector<4x16x8xi32> to vector<4x16xi32>
    %179 = vector.shape_cast %178 : vector<4x16xi32> to vector<4x16x1xi32>
    %cst_72 = arith.constant dense<2147483647> : vector<4x1xi32>
    %180 = vector.multi_reduction <minsi>, %179, %cst_72 [1] : vector<4x16x1xi32> to vector<4x1xi32>
    %181 = vector.shape_cast %180 : vector<4x1xi32> to vector<4x1x1xi32>
    %182 = vector.broadcast %181 : vector<4x1x1xi32> to vector<4x16x8xi32>
    %183 = arith.cmpi eq, %48, %182 : vector<4x16x8xi32>
    %cst_73 = arith.constant 1.000000e+30 : f32
    %184 = vector.broadcast %cst_73 : f32 to vector<4x16x8xf32>
    %185 = arith.select %183, %184, %133 : vector<4x16x8xi1>, vector<4x16x8xf32>
    %cst_74 = arith.constant 0.000000e+00 : f32
    %186 = vector.broadcast %cst_74 : f32 to vector<4x1x1xf32>
    %187 = arith.subf %186, %157 : vector<4x1x1xf32>
    %cst_75 = arith.constant 0.000000e+00 : f32
    %188 = vector.broadcast %cst_75 : f32 to vector<4x1x1xf32>
    %189 = arith.maximumf %187, %188 : vector<4x1x1xf32>
    %190 = math.absf %187 : vector<4x1x1xf32>
    %cst_76 = arith.constant 0.000000e+00 : f32
    %191 = vector.broadcast %cst_76 : f32 to vector<4x1x1xf32>
    %192 = arith.subf %191, %190 : vector<4x1x1xf32>
    %193 = math.exp %192 : vector<4x1x1xf32>
    %194 = math.log1p %193 : vector<4x1x1xf32>
    %195 = arith.addf %189, %194 : vector<4x1x1xf32>
    %196 = arith.addf %153, %195 : vector<4x1x1xf32>
    %cst_77 = arith.constant 0.000000e+00 : f32
    %197 = vector.broadcast %cst_77 : f32 to vector<4x1x1xf32>
    %198 = arith.maximumf %173, %197 : vector<4x1x1xf32>
    %199 = math.absf %173 : vector<4x1x1xf32>
    %cst_78 = arith.constant 0.000000e+00 : f32
    %200 = vector.broadcast %cst_78 : f32 to vector<4x1x1xf32>
    %201 = arith.subf %200, %199 : vector<4x1x1xf32>
    %202 = math.exp %201 : vector<4x1x1xf32>
    %203 = math.log1p %202 : vector<4x1x1xf32>
    %204 = arith.addf %198, %203 : vector<4x1x1xf32>
    %205 = arith.addf %196, %204 : vector<4x1x1xf32>
    %cst_79 = arith.constant dense<0xFF800000> : vector<4x16xf32>
    %206 = vector.multi_reduction <maximumf>, %169, %cst_79 [2] : vector<4x16x8xf32> to vector<4x16xf32>
    %207 = vector.shape_cast %206 : vector<4x16xf32> to vector<4x16x1xf32>
    %cst_80 = arith.constant dense<0xFF800000> : vector<4x1xf32>
    %208 = vector.multi_reduction <maximumf>, %207, %cst_80 [1] : vector<4x16x1xf32> to vector<4x1xf32>
    %209 = vector.shape_cast %208 : vector<4x1xf32> to vector<4x1x1xf32>
    %210 = vector.broadcast %209 : vector<4x1x1xf32> to vector<4x16x8xf32>
    %211 = arith.cmpf oeq, %169, %210 : vector<4x16x8xf32>
    %c1073741824_i32_81 = arith.constant 1073741824 : i32
    %212 = vector.broadcast %c1073741824_i32_81 : i32 to vector<4x16x8xi32>
    %213 = arith.select %211, %48, %212 : vector<4x16x8xi1>, vector<4x16x8xi32>
    %cst_82 = arith.constant dense<2147483647> : vector<4x16xi32>
    %214 = vector.multi_reduction <minsi>, %213, %cst_82 [2] : vector<4x16x8xi32> to vector<4x16xi32>
    %215 = vector.shape_cast %214 : vector<4x16xi32> to vector<4x16x1xi32>
    %cst_83 = arith.constant dense<2147483647> : vector<4x1xi32>
    %216 = vector.multi_reduction <minsi>, %215, %cst_83 [1] : vector<4x16x1xi32> to vector<4x1xi32>
    %217 = vector.shape_cast %216 : vector<4x1xi32> to vector<4x1x1xi32>
    %218 = vector.broadcast %217 : vector<4x1x1xi32> to vector<4x16x8xi32>
    %219 = arith.cmpi eq, %48, %218 : vector<4x16x8xi32>
    %cst_84 = arith.constant -1.000000e+30 : f32
    %220 = vector.broadcast %cst_84 : f32 to vector<4x16x8xf32>
    %221 = arith.select %219, %220, %169 : vector<4x16x8xi1>, vector<4x16x8xf32>
    %cst_85 = arith.constant dense<0x7F800000> : vector<4x16xf32>
    %222 = vector.multi_reduction <minimumf>, %185, %cst_85 [2] : vector<4x16x8xf32> to vector<4x16xf32>
    %223 = vector.shape_cast %222 : vector<4x16xf32> to vector<4x16x1xf32>
    %cst_86 = arith.constant dense<0x7F800000> : vector<4x1xf32>
    %224 = vector.multi_reduction <minimumf>, %223, %cst_86 [1] : vector<4x16x1xf32> to vector<4x1xf32>
    %225 = vector.shape_cast %224 : vector<4x1xf32> to vector<4x1x1xf32>
    %226 = vector.broadcast %225 : vector<4x1x1xf32> to vector<4x16x8xf32>
    %227 = arith.cmpf oeq, %185, %226 : vector<4x16x8xf32>
    %c1073741824_i32_87 = arith.constant 1073741824 : i32
    %228 = vector.broadcast %c1073741824_i32_87 : i32 to vector<4x16x8xi32>
    %229 = arith.select %227, %48, %228 : vector<4x16x8xi1>, vector<4x16x8xi32>
    %cst_88 = arith.constant dense<2147483647> : vector<4x16xi32>
    %230 = vector.multi_reduction <minsi>, %229, %cst_88 [2] : vector<4x16x8xi32> to vector<4x16xi32>
    %231 = vector.shape_cast %230 : vector<4x16xi32> to vector<4x16x1xi32>
    %cst_89 = arith.constant dense<2147483647> : vector<4x1xi32>
    %232 = vector.multi_reduction <minsi>, %231, %cst_89 [1] : vector<4x16x1xi32> to vector<4x1xi32>
    %233 = vector.shape_cast %232 : vector<4x1xi32> to vector<4x1x1xi32>
    %234 = vector.broadcast %233 : vector<4x1x1xi32> to vector<4x16x8xi32>
    %235 = arith.cmpi eq, %48, %234 : vector<4x16x8xi32>
    %cst_90 = arith.constant 1.000000e+30 : f32
    %236 = vector.broadcast %cst_90 : f32 to vector<4x16x8xf32>
    %237 = arith.select %235, %236, %185 : vector<4x16x8xi1>, vector<4x16x8xf32>
    %cst_91 = arith.constant 0.000000e+00 : f32
    %238 = vector.broadcast %cst_91 : f32 to vector<4x1x1xf32>
    %239 = arith.subf %238, %209 : vector<4x1x1xf32>
    %cst_92 = arith.constant 0.000000e+00 : f32
    %240 = vector.broadcast %cst_92 : f32 to vector<4x1x1xf32>
    %241 = arith.maximumf %239, %240 : vector<4x1x1xf32>
    %242 = math.absf %239 : vector<4x1x1xf32>
    %cst_93 = arith.constant 0.000000e+00 : f32
    %243 = vector.broadcast %cst_93 : f32 to vector<4x1x1xf32>
    %244 = arith.subf %243, %242 : vector<4x1x1xf32>
    %245 = math.exp %244 : vector<4x1x1xf32>
    %246 = math.log1p %245 : vector<4x1x1xf32>
    %247 = arith.addf %241, %246 : vector<4x1x1xf32>
    %248 = arith.addf %205, %247 : vector<4x1x1xf32>
    %cst_94 = arith.constant 0.000000e+00 : f32
    %249 = vector.broadcast %cst_94 : f32 to vector<4x1x1xf32>
    %250 = arith.maximumf %225, %249 : vector<4x1x1xf32>
    %251 = math.absf %225 : vector<4x1x1xf32>
    %cst_95 = arith.constant 0.000000e+00 : f32
    %252 = vector.broadcast %cst_95 : f32 to vector<4x1x1xf32>
    %253 = arith.subf %252, %251 : vector<4x1x1xf32>
    %254 = math.exp %253 : vector<4x1x1xf32>
    %255 = math.log1p %254 : vector<4x1x1xf32>
    %256 = arith.addf %250, %255 : vector<4x1x1xf32>
    %257 = arith.addf %248, %256 : vector<4x1x1xf32>
    %cst_96 = arith.constant dense<0xFF800000> : vector<4x16xf32>
    %258 = vector.multi_reduction <maximumf>, %221, %cst_96 [2] : vector<4x16x8xf32> to vector<4x16xf32>
    %259 = vector.shape_cast %258 : vector<4x16xf32> to vector<4x16x1xf32>
    %cst_97 = arith.constant dense<0xFF800000> : vector<4x1xf32>
    %260 = vector.multi_reduction <maximumf>, %259, %cst_97 [1] : vector<4x16x1xf32> to vector<4x1xf32>
    %261 = vector.shape_cast %260 : vector<4x1xf32> to vector<4x1x1xf32>
    %cst_98 = arith.constant dense<0x7F800000> : vector<4x16xf32>
    %262 = vector.multi_reduction <minimumf>, %237, %cst_98 [2] : vector<4x16x8xf32> to vector<4x16xf32>
    %263 = vector.shape_cast %262 : vector<4x16xf32> to vector<4x16x1xf32>
    %cst_99 = arith.constant dense<0x7F800000> : vector<4x1xf32>
    %264 = vector.multi_reduction <minimumf>, %263, %cst_99 [1] : vector<4x16x1xf32> to vector<4x1xf32>
    %265 = vector.shape_cast %264 : vector<4x1xf32> to vector<4x1x1xf32>
    %cst_100 = arith.constant 0.000000e+00 : f32
    %266 = vector.broadcast %cst_100 : f32 to vector<4x1x1xf32>
    %267 = arith.subf %266, %261 : vector<4x1x1xf32>
    %cst_101 = arith.constant 0.000000e+00 : f32
    %268 = vector.broadcast %cst_101 : f32 to vector<4x1x1xf32>
    %269 = arith.maximumf %267, %268 : vector<4x1x1xf32>
    %270 = math.absf %267 : vector<4x1x1xf32>
    %cst_102 = arith.constant 0.000000e+00 : f32
    %271 = vector.broadcast %cst_102 : f32 to vector<4x1x1xf32>
    %272 = arith.subf %271, %270 : vector<4x1x1xf32>
    %273 = math.exp %272 : vector<4x1x1xf32>
    %274 = math.log1p %273 : vector<4x1x1xf32>
    %275 = arith.addf %269, %274 : vector<4x1x1xf32>
    %276 = arith.addf %257, %275 : vector<4x1x1xf32>
    %cst_103 = arith.constant 0.000000e+00 : f32
    %277 = vector.broadcast %cst_103 : f32 to vector<4x1x1xf32>
    %278 = arith.maximumf %265, %277 : vector<4x1x1xf32>
    %279 = math.absf %265 : vector<4x1x1xf32>
    %cst_104 = arith.constant 0.000000e+00 : f32
    %280 = vector.broadcast %cst_104 : f32 to vector<4x1x1xf32>
    %281 = arith.subf %280, %279 : vector<4x1x1xf32>
    %282 = math.exp %281 : vector<4x1x1xf32>
    %283 = math.log1p %282 : vector<4x1x1xf32>
    %284 = arith.addf %278, %283 : vector<4x1x1xf32>
    %285 = arith.addf %276, %284 : vector<4x1x1xf32>
    %cst_105 = arith.constant 0.000000e+00 : f32
    %286 = vector.broadcast %cst_105 : f32 to vector<1x1xf32>
    %287 = vector.shape_cast %285 : vector<4x1x1xf32> to vector<1x4x1x1xf32>
    %cst_106 = arith.constant dense<0.000000e+00> : vector<1xf32>
    %288 = vector.multi_reduction <add>, %287, %cst_106 [1, 2, 3] : vector<1x4x1x1xf32> to vector<1xf32>
    %289 = vector.shape_cast %288 : vector<1xf32> to vector<1x1x1x1xf32>
    %290 = vector.extract %289[0, 0, 0, 0] : f32 from vector<1x1x1x1xf32>
    %cst_107 = arith.constant 4.000000e+01 : f32
    %291 = arith.divf %290, %cst_107 : f32
    %292 = vector.broadcast %291 : f32 to vector<1x1xf32>
    %293 = arith.addf %286, %292 : vector<1x1xf32>
    %c0_108 = arith.constant 0 : index
    %c0_109 = arith.constant 0 : index
    %294 = vector.load %arg11[%c0_108, %c0_109] : memref<1x1xf32, #tpu.memory_space<vmem>>, vector<1x1xf32>
    tpu.vector_store %arg11[%c0_108, %c0_109], %293 {strides = array<i32>} : memref<1x1xf32, #tpu.memory_space<vmem>>, vector<1x1xf32>,
    return
  }
  func.func @transform_0(%arg0: i32) -> (i32, i32) {
    %c0_i32 = arith.constant 0 : i32
    %c0_i32_0 = arith.constant 0 : i32
    %c0_i32_1 = arith.constant 0 : i32
    return %c0_i32, %c0_i32_0 : i32, i32
  }
  func.func @transform_1(%arg0: i32) -> (i32, i32) {
    %c0_i32 = arith.constant 0 : i32
    %c0_i32_0 = arith.constant 0 : i32
    %c0_i32_1 = arith.constant 0 : i32
    return %c0_i32, %c0_i32_0 : i32, i32
  }
  func.func @transform_2(%arg0: i32) -> (i32, i32) {
    %c0_i32 = arith.constant 0 : i32
    %c0_i32_0 = arith.constant 0 : i32
    %c0_i32_1 = arith.constant 0 : i32
    return %c0_i32, %c0_i32_0 : i32, i32
  }
  func.func @transform_3(%arg0: i32) -> (i32, i32) {
    %c0_i32 = arith.constant 0 : i32
    %c0_i32_0 = arith.constant 0 : i32
    %c0_i32_1 = arith.constant 0 : i32
    return %c0_i32, %c0_i32_0 : i32, i32
  }
  func.func @transform_4(%arg0: i32) -> (i32, i32) {
    %c0_i32 = arith.constant 0 : i32
    %c0_i32_0 = arith.constant 0 : i32
    %c0_i32_1 = arith.constant 0 : i32
    return %c0_i32, %c0_i32_0 : i32, i32
  }
  func.func @transform_5(%arg0: i32) -> (i32, i32) {
    %c0_i32 = arith.constant 0 : i32
    %c0_i32_0 = arith.constant 0 : i32
    %c0_i32_1 = arith.constant 0 : i32
    return %c0_i32, %c0_i32_0 : i32, i32
  }
  func.func @transform_6(%arg0: i32) -> (i32, i32) {
    %c0_i32 = arith.constant 0 : i32
    %c0_i32_0 = arith.constant 0 : i32
    %c0_i32_1 = arith.constant 0 : i32
    return %c0_i32, %c0_i32_0 : i32, i32
  }
  func.func @transform_7(%arg0: i32) -> (i32, i32) {
    %c0_i32 = arith.constant 0 : i32
    %c0_i32_0 = arith.constant 0 : i32
    %c0_i32_1 = arith.constant 0 : i32
    return %c0_i32, %c0_i32_0 : i32, i32
  }
  func.func @transform_8(%arg0: i32) -> (i32, i32) {
    %c0_i32 = arith.constant 0 : i32
    %c0_i32_0 = arith.constant 0 : i32
    %c0_i32_1 = arith.constant 0 : i32
    return %c0_i32, %c0_i32_0 : i32, i32
  }
  func.func @transform_9(%arg0: i32) -> (i32, i32) {
    %c0_i32 = arith.constant 0 : i32
    %c0_i32_0 = arith.constant 0 : i32
    %c0_i32_1 = arith.constant 0 : i32
    return %c0_i32, %c0_i32_0 : i32, i32
  }
  func.func @transform_10(%arg0: i32) -> (i32, i32) {
    %c0_i32 = arith.constant 0 : i32
    %c0_i32_0 = arith.constant 0 : i32
    %c0_i32_1 = arith.constant 0 : i32
    return %c0_i32, %c0_i32_0 : i32, i32
  }
}

</mosaic_0001>

<llo_original>
// kernel: forward.1
$region0: #{forward.1}
  #allocation0 [shape = 'u32[]', space=smem, size = 0x4, offset = 0x4, fixed_abs, tag = 'smem constant byte address 0x4 - core index']
  #allocation1 [shape = 'u32[72,128]{1,0:T(1,128)}', space=vmem, size = 0x9000, scoped, tag = 'internal scratch']
  %s0 = inlined_call_operand.vmem [shape: f32[9,256], index: 0, kind: input, shape index: {}]
  %s1 = inlined_call_operand.vmem [shape: f32[16,9], index: 1, kind: input, shape index: {}]
  %s2 = inlined_call_operand.vmem [shape: f32[16,1], index: 2, kind: input, shape index: {}]
  %s3 = inlined_call_operand.vmem [shape: f32[256,32], index: 3, kind: input, shape index: {}]
  %s4 = inlined_call_operand.vmem [shape: f32[1,32], index: 4, kind: input, shape index: {}]
  %s5 = inlined_call_operand.vmem [shape: f32[8,64], index: 5, kind: input, shape index: {}]
  %s6 = inlined_call_operand.vmem [shape: f32[64,8], index: 6, kind: input, shape index: {}]
  %s7 = inlined_call_operand.vmem [shape: f32[1,8], index: 7, kind: input, shape index: {}]
  %s8 = inlined_call_operand.hbm [shape: f32[16,32], index: 8, kind: output, shape index: {0}]
  %s9 = inlined_call_operand.hbm [shape: f32[8,8], index: 9, kind: output, shape index: {1}]
  %s10 = inlined_call_operand.hbm [shape: f32[1,1], index: 10, kind: output, shape index: {2}]
  %11 = xla_tuple %s8, %s9, %s10
  %s12 = sld [smem:[#allocation0]]
  $region58: #{forward.1} parent=0
    _
  %s14 = ssub.s32 1, %s12
  %s15 = scalar_select 0, %s14, %s12
  $region1: #{forward.1} parent=0
    #allocation2 [shape = 'u8[8192]{0}', space=vmem, size = 0x2000, scoped, tag = 'output window, operand 0, single buffered']
    #allocation3 [shape = 's32[1]{0}', space=sflag, size = 0x4, scoped, tag = 'scoped memory for forward.1']
    #allocation4 [shape = 'u8[4096]{0}', space=vmem, size = 0x1000, scoped, tag = 'output window, operand 1, single buffered']
    #allocation5 [shape = 's32[1]{0}', space=sflag, size = 0x4, scoped, tag = 'scoped memory for forward.1']
    #allocation6 [shape = 'u8[512]{0}', space=vmem, size = 0x400, scoped, tag = 'output window, operand 2, single buffered']
    %16 = vsyncpa [#allocation3], 0
    %17 = vsyncpa [#allocation5], 0
    // Predicated region
    $region2: #{forward.1} parent=1 // pred_check
      _
    $region3: #{forward.1} parent=1 // pred_check_branch
      %19 = sbr.rel (0) target = $region5
    $region4: #{forward.1} parent=1 // pred_region
      _
    $region5: #{forward.1} parent=1 // pred_fallthru
      _
    // Predicated region
    $region6: #{forward.1} parent=1 // pred_check
      _
    $region7: #{forward.1} parent=1 // pred_check_branch
      %21 = sbr.rel (0) target = $region9
    $region8: #{forward.1} parent=1 // pred_region
      _
    $region9: #{forward.1} parent=1 // pred_fallthru
      _
    // Predicated region
    $region10: #{forward.1} parent=1 // pred_check
      _
    $region11: #{forward.1} parent=1 // pred_check_branch
      %23 = sbr.rel (0) target = $region13
    $region12: #{forward.1} parent=1 // pred_region
      _
    $region13: #{forward.1} parent=1 // pred_fallthru
      _
    // Predicated region
    $region14: #{forward.1} parent=1 // pred_check
      _
    $region15: #{forward.1} parent=1 // pred_check_branch
      %25 = sbr.rel (0) target = $region17
    $region16: #{forward.1} parent=1 // pred_region
      _
    $region17: #{forward.1} parent=1 // pred_fallthru
      _
    // Predicated region
    $region18: #{forward.1} parent=1 // pred_check
      _
    $region19: #{forward.1} parent=1 // pred_check_branch
      %27 = sbr.rel (0) target = $region21
    $region20: #{forward.1} parent=1 // pred_region
      _
    $region21: #{forward.1} parent=1 // pred_fallthru
      _
    // Predicated region
    $region22: #{forward.1} parent=1 // pred_check
      _
    $region23: #{forward.1} parent=1 // pred_check_branch
      %29 = sbr.rel (0) target = $region25
    $region24: #{forward.1} parent=1 // pred_region
      _
    $region25: #{forward.1} parent=1 // pred_fallthru
      _
    // Predicated region
    $region26: #{forward.1} parent=1 // pred_check
      _
    $region27: #{forward.1} parent=1 // pred_check_branch
      %31 = sbr.rel (0) target = $region29
    $region28: #{forward.1} parent=1 // pred_region
      _
    $region29: #{forward.1} parent=1 // pred_fallthru
      _
    // Predicated region
    $region30: #{forward.1} parent=1 // pred_check
      _
    $region31: #{forward.1} parent=1 // pred_check_branch
      %33 = sbr.rel (0) target = $region33
    $region32: #{forward.1} parent=1 // pred_region
      _
    $region33: #{forward.1} parent=1 // pred_fallthru
      _
    %v34 = vld [vmem:[%s1] sm:$0xff]
    %v35 = vld [vmem:[%s1 + $0x8] sm:$0xff]
    %v36 = vld [vmem:[%s0] sm:$0xff]
    %v37 = vld [vmem:[%s0 + $0x8] sm:$0xff]
    %v38 = vld [vmem:[%s0 + $0x10] sm:$0x1]
    %v39 = vld [vmem:[%s0 + $0x18] sm:$0x1]
    %v40 = vld [vmem:[%s2] sm:$0xff]
    %v41 = vld [vmem:[%s2 + $0x8] sm:$0xff]
    %43 = vset.pattern.permute.xlu0 0
    %44 = vperm.xlu0 %43, %v40
    %v45 = vpop.permute.xlu0 %44
    %48 = vset.pattern.permute.xlu0 0
    %49 = vperm.xlu0 %48, %v41
    %v50 = vpop.permute.xlu0 %49
    %vm52 = vcmask 72704
    %v54 = vsel %vm52, %v34, 0
    %v57 = vsel %vm52, %v35, 0
    %vm59 = vcmask 1040384
    %v61 = vsel %vm59, %v38, 0
    %v64 = vsel %vm59, %v39, 0
    %66 = vmatpush.msra.mxu0 0.0
    %67 = vmatpush.msra.mxu0 0.0
    %68 = vmatpush.msra.mxu0 0.0
    %69 = vmatpush.msra.mxu0 0.0
    %70 = vmatpush.msra.mxu0 0.0
    %71 = vmatpush.msra.mxu0 0.0
    %72 = vmatpush.msra.mxu0 0.0
    %73 = vmatpush.msra.mxu0 0.0
    %74 = vmatpush.msra.mxu0 0.0
    %75 = vmatpush.msra.mxu0 0.0
    %76 = vmatpush.msra.mxu0 0.0
    %77 = vmatpush.msra.mxu0 0.0
    %78 = vmatpush.msra.mxu0 0.0
    %79 = vmatpush.msra.mxu0 0.0
    %80 = vmatpush.msra.mxu0 %v61
    %81 = vmatpush.msra.mxu0 %v36
    %82 = vmatmul.f32.gmra.mxu0 %v54
    %v83 = vpop.f32.mrf.mxu0
    %v84 = vadd.f32 %v45, %v83
    %85 = vmatmul.f32.gmra.mxu0 %v57
    %v86 = vpop.f32.mrf.mxu0
    %v87 = vadd.f32 %v50, %v86
    %88 = vdwg.mxu0
    %89 = vmatpush.msra.mxu0 0.0
    %90 = vmatpush.msra.mxu0 0.0
    %91 = vmatpush.msra.mxu0 0.0
    %92 = vmatpush.msra.mxu0 0.0
    %93 = vmatpush.msra.mxu0 0.0
    %94 = vmatpush.msra.mxu0 0.0
    %95 = vmatpush.msra.mxu0 0.0
    %96 = vmatpush.msra.mxu0 0.0
    %97 = vmatpush.msra.mxu0 0.0
    %98 = vmatpush.msra.mxu0 0.0
    %99 = vmatpush.msra.mxu0 0.0
    %100 = vmatpush.msra.mxu0 0.0
    %101 = vmatpush.msra.mxu0 0.0
    %102 = vmatpush.msra.mxu0 0.0
    %103 = vmatpush.msra.mxu0 %v64
    %104 = vmatpush.msra.mxu0 %v37
    %105 = vmatmul.f32.gmra.mxu0 %v54
    %v106 = vpop.f32.mrf.mxu0
    %v107 = vadd.f32 %v45, %v106
    %108 = vmatmul.f32.gmra.mxu0 %v57
    %v109 = vpop.f32.mrf.mxu0
    %v110 = vadd.f32 %v50, %v109
    %111 = vdwg.mxu0
    %v112 = vmax.f32 %v84, 0.0
    %v113 = vmax.f32 %v107, 0.0
    %v114 = vmax.f32 %v87, 0.0
    %v115 = vmax.f32 %v110, 0.0
    %v116 = vld [vmem:[%s3] sm:$0xff]
    %v117 = vld [vmem:[%s3 + $0x8] sm:$0xff]
    %v118 = vld [vmem:[%s3 + $0x10] sm:$0xff]
    %v119 = vld [vmem:[%s3 + $0x18] sm:$0xff]
    %v120 = vld [vmem:[%s3 + $0x20] sm:$0xff]
    %v121 = vld [vmem:[%s3 + $0x28] sm:$0xff]
    %v122 = vld [vmem:[%s3 + $0x30] sm:$0xff]
    %v123 = vld [vmem:[%s3 + $0x38] sm:$0xff]
    %v124 = vld [vmem:[%s3 + $0x40] sm:$0xff]
    %v125 = vld [vmem:[%s3 + $0x48] sm:$0xff]
    %v126 = vld [vmem:[%s3 + $0x50] sm:$0xff]
    %v127 = vld [vmem:[%s3 + $0x58] sm:$0xff]
    %v128 = vld [vmem:[%s3 + $0x60] sm:$0xff]
    %v129 = vld [vmem:[%s3 + $0x68] sm:$0xff]
    %v130 = vld [vmem:[%s3 + $0x70] sm:$0xff]
    %v131 = vld [vmem:[%s3 + $0x78] sm:$0xff]
    %v132 = vld [vmem:[%s3 + $0x80] sm:$0xff]
    %v133 = vld [vmem:[%s3 + $0x88] sm:$0xff]
    %v134 = vld [vmem:[%s3 + $0x90] sm:$0xff]
    %v135 = vld [vmem:[%s3 + $0x98] sm:$0xff]
    %v136 = vld [vmem:[%s3 + $0xa0] sm:$0xff]
    %v137 = vld [vmem:[%s3 + $0xa8] sm:$0xff]
    %v138 = vld [vmem:[%s3 + $0xb0] sm:$0xff]
    %v139 = vld [vmem:[%s3 + $0xb8] sm:$0xff]
    %v140 = vld [vmem:[%s3 + $0xc0] sm:$0xff]
    %v141 = vld [vmem:[%s3 + $0xc8] sm:$0xff]
    %v142 = vld [vmem:[%s3 + $0xd0] sm:$0xff]
    %v143 = vld [vmem:[%s3 + $0xd8] sm:$0xff]
    %v144 = vld [vmem:[%s3 + $0xe0] sm:$0xff]
    %v145 = vld [vmem:[%s3 + $0xe8] sm:$0xff]
    %v146 = vld [vmem:[%s3 + $0xf0] sm:$0xff]
    %v147 = vld [vmem:[%s3 + $0xf8] sm:$0xff]
    %v148 = vld [vmem:[%s4] sm:$0x1]
    %v150 = vperm.slane %v148, 0
    %152 = vmatpush.msra.mxu0 %v131
    %153 = vmatpush.msra.mxu0 %v130
    %154 = vmatpush.msra.mxu0 %v129
    %155 = vmatpush.msra.mxu0 %v128
    %156 = vmatpush.msra.mxu0 %v127
    %157 = vmatpush.msra.mxu0 %v126
    %158 = vmatpush.msra.mxu0 %v125
    %159 = vmatpush.msra.mxu0 %v124
    %160 = vmatpush.msra.mxu0 %v123
    %161 = vmatpush.msra.mxu0 %v122
    %162 = vmatpush.msra.mxu0 %v121
    %163 = vmatpush.msra.mxu0 %v120
    %164 = vmatpush.msra.mxu0 %v119
    %165 = vmatpush.msra.mxu0 %v118
    %166 = vmatpush.msra.mxu0 %v117
    %167 = vmatpush.msra.mxu0 %v116
    %168 = vmatmul.f32.gmra.mxu0 %v112
    %v169 = vpop.f32.mrf.mxu0
    %v170 = vadd.f32 %v150, %v169
    %171 = vmatmul.f32.gmra.mxu0 %v114
    %v172 = vpop.f32.mrf.mxu0
    %v173 = vadd.f32 %v150, %v172
    %174 = vdwg.mxu0
    %175 = vmatpush.msra.mxu0 %v147
    %176 = vmatpush.msra.mxu0 %v146
    %177 = vmatpush.msra.mxu0 %v145
    %178 = vmatpush.msra.mxu0 %v144
    %179 = vmatpush.msra.mxu0 %v143
    %180 = vmatpush.msra.mxu0 %v142
    %181 = vmatpush.msra.mxu0 %v141
    %182 = vmatpush.msra.mxu0 %v140
    %183 = vmatpush.msra.mxu0 %v139
    %184 = vmatpush.msra.mxu0 %v138
    %185 = vmatpush.msra.mxu0 %v137
    %186 = vmatpush.msra.mxu0 %v136
    %187 = vmatpush.msra.mxu0 %v135
    %188 = vmatpush.msra.mxu0 %v134
    %189 = vmatpush.msra.mxu0 %v133
    %190 = vmatpush.msra.mxu0 %v132
    %191 = vmatmul.f32.gmra.mxu0 %v113
    %v192 = vpop.f32.mrf.mxu0
    %v193 = vadd.f32 %v170, %v192
    %194 = vmatmul.f32.gmra.mxu0 %v115
    %v195 = vpop.f32.mrf.mxu0
    %v196 = vadd.f32 %v173, %v195
    %197 = vdwg.mxu0
    %vm198 = vcmask 261120
    %199 = vst.msk [vmem:[#allocation2] sm:$0xff] %vm198, %v193
    %200 = vst.msk [vmem:[#allocation2 + $0x8] sm:$0xff] %vm198, %v196
    %v201 = vld [vmem:[%s5] sm:$0xff]
    %v202 = vld [vmem:[%s6] sm:$0xff]
    %v203 = vld [vmem:[%s6 + $0x8] sm:$0xff]
    %v204 = vld [vmem:[%s6 + $0x10] sm:$0xff]
    %v205 = vld [vmem:[%s6 + $0x18] sm:$0xff]
    %v206 = vld [vmem:[%s6 + $0x20] sm:$0xff]
    %v207 = vld [vmem:[%s6 + $0x28] sm:$0xff]
    %v208 = vld [vmem:[%s6 + $0x30] sm:$0xff]
    %v209 = vld [vmem:[%s6 + $0x38] sm:$0xff]
    %v210 = vld [vmem:[%s7] sm:$0x1]
    %v212 = vperm.slane %v210, 0
    %vm214 = vcmask 523264
    %v216 = vsel %vm214, %v201, 0
    %218 = vmatpush.msra.mxu0 0.0
    %219 = vmatpush.msra.mxu0 0.0
    %220 = vmatpush.msra.mxu0 0.0
    %221 = vmatpush.msra.mxu0 0.0
    %222 = vmatpush.msra.mxu0 0.0
    %223 = vmatpush.msra.mxu0 0.0
    %224 = vmatpush.msra.mxu0 0.0
    %225 = vmatpush.msra.mxu0 0.0
    %226 = vmatpush.msra.mxu0 %v209
    %227 = vmatpush.msra.mxu0 %v208
    %228 = vmatpush.msra.mxu0 %v207
    %229 = vmatpush.msra.mxu0 %v206
    %230 = vmatpush.msra.mxu0 %v205
    %231 = vmatpush.msra.mxu0 %v204
    %232 = vmatpush.msra.mxu0 %v203
    %233 = vmatpush.msra.mxu0 %v202
    %234 = vmatmul.f32.gmra.mxu0 %v216
    %v235 = vpop.f32.mrf.mxu0
    %v236 = vadd.f32 %v212, %v235
    %237 = vdwg.mxu0
    %vm238 = vcmask 64512
    %239 = vst.msk [vmem:[#allocation4] sm:$0xff] %vm238, %v236
    %v241 = vsel %vm238, %v193, 0
    %v244 = vsel %vm238, %v196, 0
    %v247 = vsel %vm238, %v236, 0
    %249 = vmatpush.xpose.msra.mxu0 0.0
    %250 = vmatpush.xpose.msra.mxu0 0.0
    %251 = vmatpush.xpose.msra.mxu0 0.0
    %252 = vmatpush.xpose.msra.mxu0 0.0
    %253 = vmatpush.xpose.msra.mxu0 0.0
    %254 = vmatpush.xpose.msra.mxu0 0.0
    %255 = vmatpush.xpose.msra.mxu0 0.0
    %256 = vmatpush.xpose.msra.mxu0 0.0
    %257 = vmatpush.xpose.msra.mxu0 0.0
    %258 = vmatpush.xpose.msra.mxu0 0.0
    %259 = vmatpush.xpose.msra.mxu0 0.0
    %260 = vmatpush.xpose.msra.mxu0 0.0
    %261 = vmatpush.xpose.msra.mxu0 0.0
    %262 = vmatpush.xpose.msra.mxu0 0.0
    %263 = vmatpush.xpose.msra.mxu0 0.0
    %264 = vmatpush.xpose.msra.mxu0 %v247
    %265 = vmatmul.f32.gmra.mxu0 %v241
    %v266 = vpop.f32.mrf.mxu0
    %v267 = vadd.f32 0.0, %v266
    %268 = vmatmul.f32.gmra.mxu0 %v244
    %v269 = vpop.f32.mrf.mxu0
    %v270 = vadd.f32 0.0, %v269
    %271 = vdwg.mxu0
    %272 = vrot.lane.b32.xlu0 %v193, 120
    %v273 = vpop.permute.xlu0 %272
    %274 = vrot.lane.b32.xlu0 %v196, 120
    %v275 = vpop.permute.xlu0 %274
    %v276 = vsel %vm238, %v273, 0
    %v278 = vsel %vm238, %v275, 0
    %280 = vmatpush.xpose.msra.mxu0 0.0
    %281 = vmatpush.xpose.msra.mxu0 0.0
    %282 = vmatpush.xpose.msra.mxu0 0.0
    %283 = vmatpush.xpose.msra.mxu0 0.0
    %284 = vmatpush.xpose.msra.mxu0 0.0
    %285 = vmatpush.xpose.msra.mxu0 0.0
    %286 = vmatpush.xpose.msra.mxu0 0.0
    %287 = vmatpush.xpose.msra.mxu0 0.0
    %288 = vmatpush.xpose.msra.mxu0 0.0
    %289 = vmatpush.xpose.msra.mxu0 0.0
    %290 = vmatpush.xpose.msra.mxu0 0.0
    %291 = vmatpush.xpose.msra.mxu0 0.0
    %292 = vmatpush.xpose.msra.mxu0 0.0
    %293 = vmatpush.xpose.msra.mxu0 0.0
    %294 = vmatpush.xpose.msra.mxu0 0.0
    %295 = vmatpush.xpose.msra.mxu0 %v247
    %296 = vmatmul.f32.gmra.mxu0 %v276
    %v297 = vpop.f32.mrf.mxu0
    %v298 = vadd.f32 0.0, %v297
    %299 = vmatmul.f32.gmra.mxu0 %v278
    %v300 = vpop.f32.mrf.mxu0
    %v301 = vadd.f32 0.0, %v300
    %302 = vdwg.mxu0
    %303 = vrot.lane.b32.xlu0 %v193, 112
    %v304 = vpop.permute.xlu0 %303
    %305 = vrot.lane.b32.xlu0 %v196, 112
    %v306 = vpop.permute.xlu0 %305
    %v307 = vsel %vm238, %v304, 0
    %v309 = vsel %vm238, %v306, 0
    %311 = vmatpush.xpose.msra.mxu0 0.0
    %312 = vmatpush.xpose.msra.mxu0 0.0
    %313 = vmatpush.xpose.msra.mxu0 0.0
    %314 = vmatpush.xpose.msra.mxu0 0.0
    %315 = vmatpush.xpose.msra.mxu0 0.0
    %316 = vmatpush.xpose.msra.mxu0 0.0
    %317 = vmatpush.xpose.msra.mxu0 0.0
    %318 = vmatpush.xpose.msra.mxu0 0.0
    %319 = vmatpush.xpose.msra.mxu0 0.0
    %320 = vmatpush.xpose.msra.mxu0 0.0
    %321 = vmatpush.xpose.msra.mxu0 0.0
    %322 = vmatpush.xpose.msra.mxu0 0.0
    %323 = vmatpush.xpose.msra.mxu0 0.0
    %324 = vmatpush.xpose.msra.mxu0 0.0
    %325 = vmatpush.xpose.msra.mxu0 0.0
    %326 = vmatpush.xpose.msra.mxu0 %v247
    %327 = vmatmul.f32.gmra.mxu0 %v307
    %v328 = vpop.f32.mrf.mxu0
    %v329 = vadd.f32 0.0, %v328
    %330 = vmatmul.f32.gmra.mxu0 %v309
    %v331 = vpop.f32.mrf.mxu0
    %v332 = vadd.f32 0.0, %v331
    %333 = vdwg.mxu0
    %334 = vrot.lane.b32.xlu0 %v193, 104
    %v335 = vpop.permute.xlu0 %334
    %336 = vrot.lane.b32.xlu0 %v196, 104
    %v337 = vpop.permute.xlu0 %336
    %v338 = vsel %vm238, %v335, 0
    %v340 = vsel %vm238, %v337, 0
    %342 = vmatpush.xpose.msra.mxu0 0.0
    %343 = vmatpush.xpose.msra.mxu0 0.0
    %344 = vmatpush.xpose.msra.mxu0 0.0
    %345 = vmatpush.xpose.msra.mxu0 0.0
    %346 = vmatpush.xpose.msra.mxu0 0.0
    %347 = vmatpush.xpose.msra.mxu0 0.0
    %348 = vmatpush.xpose.msra.mxu0 0.0
    %349 = vmatpush.xpose.msra.mxu0 0.0
    %350 = vmatpush.xpose.msra.mxu0 0.0
    %351 = vmatpush.xpose.msra.mxu0 0.0
    %352 = vmatpush.xpose.msra.mxu0 0.0
    %353 = vmatpush.xpose.msra.mxu0 0.0
    %354 = vmatpush.xpose.msra.mxu0 0.0
    %355 = vmatpush.xpose.msra.mxu0 0.0
    %356 = vmatpush.xpose.msra.mxu0 0.0
    %357 = vmatpush.xpose.msra.mxu0 %v247
    %358 = vmatmul.f32.gmra.mxu0 %v338
    %v359 = vpop.f32.mrf.mxu0
    %v360 = vadd.f32 0.0, %v359
    %361 = vmatmul.f32.gmra.mxu0 %v340
    %v362 = vpop.f32.mrf.mxu0
    %v363 = vadd.f32 0.0, %v362
    %364 = vdwg.mxu0
    %v365 = vsel %vm238, %v267, -inf
    %366 = vmax.xlane.f32.xlu0 %v365
    %v367 = vpop.xlane.xlu0 %366
    %v368 = vsel %vm238, %v270, -inf
    %369 = vmax.xlane.f32.xlu0 %v368
    %v370 = vpop.xlane.xlu0 %369
    %v371 = vsel %vm238, %v298, -inf
    %372 = vmax.xlane.f32.xlu0 %v371
    %v373 = vpop.xlane.xlu0 %372
    %v374 = vsel %vm238, %v301, -inf
    %375 = vmax.xlane.f32.xlu0 %v374
    %v376 = vpop.xlane.xlu0 %375
    %v377 = vsel %vm238, %v329, -inf
    %378 = vmax.xlane.f32.xlu0 %v377
    %v379 = vpop.xlane.xlu0 %378
    %v380 = vsel %vm238, %v332, -inf
    %381 = vmax.xlane.f32.xlu0 %v380
    %v382 = vpop.xlane.xlu0 %381
    %v383 = vsel %vm238, %v360, -inf
    %384 = vmax.xlane.f32.xlu0 %v383
    %v385 = vpop.xlane.xlu0 %384
    %v386 = vsel %vm238, %v363, -inf
    %387 = vmax.xlane.f32.xlu0 %v386
    %v388 = vpop.xlane.xlu0 %387
    %v389 = vsub.f32 %v267, %v367
    %v390 = vsub.f32 %v270, %v370
    %v391 = vsub.f32 %v298, %v373
    %v392 = vsub.f32 %v301, %v376
    %v393 = vsub.f32 %v329, %v379
    %v394 = vsub.f32 %v332, %v382
    %v395 = vsub.f32 %v360, %v385
    %v396 = vsub.f32 %v363, %v388
    %v397 = vmul.f32 %v389, 1.442695
    %v398 = vpow.pop %v397
    %v399 = vmul.f32 %v390, 1.442695
    %v400 = vpow.pop %v399
    %v401 = vmul.f32 %v391, 1.442695
    %v402 = vpow.pop %v401
    %v403 = vmul.f32 %v392, 1.442695
    %v404 = vpow.pop %v403
    %v405 = vmul.f32 %v393, 1.442695
    %v406 = vpow.pop %v405
    %v407 = vmul.f32 %v394, 1.442695
    %v408 = vpow.pop %v407
    %v409 = vmul.f32 %v395, 1.442695
    %v410 = vpow.pop %v409
    %v411 = vmul.f32 %v396, 1.442695
    %v412 = vpow.pop %v411
    %v413 = vsel %vm238, %v398, 0.0
    %414 = vadd.xlane.f32.xlu0 %v413
    %v415 = vpop.xlane.xlu0 %414
    %v416 = vsel %vm238, %v400, 0.0
    %417 = vadd.xlane.f32.xlu0 %v416
    %v418 = vpop.xlane.xlu0 %417
    %v419 = vsel %vm238, %v402, 0.0
    %420 = vadd.xlane.f32.xlu0 %v419
    %v421 = vpop.xlane.xlu0 %420
    %v422 = vsel %vm238, %v404, 0.0
    %423 = vadd.xlane.f32.xlu0 %v422
    %v424 = vpop.xlane.xlu0 %423
    %v425 = vsel %vm238, %v406, 0.0
    %426 = vadd.xlane.f32.xlu0 %v425
    %v427 = vpop.xlane.xlu0 %426
    %v428 = vsel %vm238, %v408, 0.0
    %429 = vadd.xlane.f32.xlu0 %v428
    %v430 = vpop.xlane.xlu0 %429
    %v431 = vsel %vm238, %v410, 0.0
    %432 = vadd.xlane.f32.xlu0 %v431
    %v433 = vpop.xlane.xlu0 %432
    %v434 = vsel %vm238, %v412, 0.0
    %435 = vadd.xlane.f32.xlu0 %v434
    %v436 = vpop.xlane.xlu0 %435
    %v437 = vrcp.pop %v415
    %v438 = vrcp.pop %v418
    %v439 = vrcp.pop %v421
    %v440 = vrcp.pop %v424
    %v441 = vrcp.pop %v427
    %v442 = vrcp.pop %v430
    %v443 = vrcp.pop %v433
    %v444 = vrcp.pop %v436
    %v445 = vmul.f32 %v398, %v437
    %v446 = vmul.f32 %v400, %v438
    %v447 = vmul.f32 %v402, %v439
    %v448 = vmul.f32 %v404, %v440
    %v449 = vmul.f32 %v406, %v441
    %v450 = vmul.f32 %v408, %v442
    %v451 = vmul.f32 %v410, %v443
    %v452 = vmul.f32 %v412, %v444
    %v453 = vlaneseq
    %v454 = vshrl.u32 %v453, 7
    %v455 = vadd.s32 %v454, 8
    %v456 = vlaneseq
    %v457 = vand.u32 %v456, 127
    %v458 = vmul.u32 %v454, 8
    %v459 = vmul.u32 %v455, 8
    %v460 = vadd.s32 %v458, %v457
    %v461 = vadd.s32 %v459, %v457
    %v462 = vsel %vm238, %v445, -inf
    %463 = vmax.xlane.f32.xlu0 %v462
    %v464 = vpop.xlane.xlu0 %463
    %v465 = vsel %vm238, %v446, -inf
    %466 = vmax.xlane.f32.xlu0 %v465
    %v467 = vpop.xlane.xlu0 %466
    %v468 = vsel %vm238, %v447, -inf
    %469 = vmax.xlane.f32.xlu0 %v468
    %v470 = vpop.xlane.xlu0 %469
    %v471 = vsel %vm238, %v448, -inf
    %472 = vmax.xlane.f32.xlu0 %v471
    %v473 = vpop.xlane.xlu0 %472
    %v474 = vsel %vm238, %v449, -inf
    %475 = vmax.xlane.f32.xlu0 %v474
    %v476 = vpop.xlane.xlu0 %475
    %v477 = vsel %vm238, %v450, -inf
    %478 = vmax.xlane.f32.xlu0 %v477
    %v479 = vpop.xlane.xlu0 %478
    %v480 = vsel %vm238, %v451, -inf
    %481 = vmax.xlane.f32.xlu0 %v480
    %v482 = vpop.xlane.xlu0 %481
    %v483 = vsel %vm238, %v452, -inf
    %484 = vmax.xlane.f32.xlu0 %v483
    %v485 = vpop.xlane.xlu0 %484
    %v486 = vmax.f32 %v464, %v467
    %v487 = vrot.slane %v486, 4
    %v488 = vmax.f32 %v486, %v487
    %v489 = vrot.slane %v488, 2
    %v490 = vmax.f32 %v488, %v489
    %v491 = vrot.slane %v490, 1
    %v492 = vmax.f32 %v490, %v491
    %v493 = vmax.f32 %v470, %v473
    %v494 = vrot.slane %v493, 4
    %v495 = vmax.f32 %v493, %v494
    %v496 = vrot.slane %v495, 2
    %v497 = vmax.f32 %v495, %v496
    %v498 = vrot.slane %v497, 1
    %v499 = vmax.f32 %v497, %v498
    %v500 = vmax.f32 %v476, %v479
    %v501 = vrot.slane %v500, 4
    %v502 = vmax.f32 %v500, %v501
    %v503 = vrot.slane %v502, 2
    %v504 = vmax.f32 %v502, %v503
    %v505 = vrot.slane %v504, 1
    %v506 = vmax.f32 %v504, %v505
    %v507 = vmax.f32 %v482, %v485
    %v508 = vrot.slane %v507, 4
    %v509 = vmax.f32 %v507, %v508
    %v510 = vrot.slane %v509, 2
    %v511 = vmax.f32 %v509, %v510
    %v512 = vrot.slane %v511, 1
    %v513 = vmax.f32 %v511, %v512
    %vm514 = vcmp.eq.f32.partialorder %v445, %v492
    %vm515 = vcmp.eq.f32.partialorder %v446, %v492
    %vm516 = vcmp.eq.f32.partialorder %v447, %v499
    %vm517 = vcmp.eq.f32.partialorder %v448, %v499
    %vm518 = vcmp.eq.f32.partialorder %v449, %v506
    %vm519 = vcmp.eq.f32.partialorder %v450, %v506
    %vm520 = vcmp.eq.f32.partialorder %v451, %v513
    %vm521 = vcmp.eq.f32.partialorder %v452, %v513
    %v522 = vsel %vm514, %v460, 1073741824
    %v523 = vsel %vm515, %v461, 1073741824
    %v524 = vsel %vm516, %v460, 1073741824
    %v525 = vsel %vm517, %v461, 1073741824
    %v526 = vsel %vm518, %v460, 1073741824
    %v527 = vsel %vm519, %v461, 1073741824
    %v528 = vsel %vm520, %v460, 1073741824
    %v529 = vsel %vm521, %v461, 1073741824
    %v530 = vsel %vm238, %v522, 2147483647
    %v531 = vand.u32 %v530, 65535
    %v532 = vshra.s32 %v530, 16
    %v533 = vcvt.s32.f32 %v531
    %v534 = vcvt.s32.f32 %v532
    %535 = vmin.xlane.f32.xlu0 %v534
    %v536 = vpop.xlane.xlu0 %535
    %vm537 = vcmp.eq.f32.partialorder %v534, %v536
    %v538 = vsel %vm537, %v533, inf
    %539 = vmin.xlane.f32.xlu0 %v538
    %v540 = vpop.xlane.xlu0 %539
    %v541 = vcvt.f32.s32 %v540
    %v542 = vcvt.f32.s32 %v536
    %v543 = vshll.u32 %v542, 16
    %v544 = vadd.s32 %v543, %v541
    %v545 = vsel %vm238, %v523, 2147483647
    %v546 = vand.u32 %v545, 65535
    %v547 = vshra.s32 %v545, 16
    %v548 = vcvt.s32.f32 %v546
    %v549 = vcvt.s32.f32 %v547
    %550 = vmin.xlane.f32.xlu0 %v549
    %v551 = vpop.xlane.xlu0 %550
    %vm552 = vcmp.eq.f32.partialorder %v549, %v551
    %v553 = vsel %vm552, %v548, inf
    %554 = vmin.xlane.f32.xlu0 %v553
    %v555 = vpop.xlane.xlu0 %554
    %v556 = vcvt.f32.s32 %v555
    %v557 = vcvt.f32.s32 %v551
    %v558 = vshll.u32 %v557, 16
    %v559 = vadd.s32 %v558, %v556
    %v560 = vsel %vm238, %v524, 2147483647
    %v561 = vand.u32 %v560, 65535
    %v562 = vshra.s32 %v560, 16
    %v563 = vcvt.s32.f32 %v561
    %v564 = vcvt.s32.f32 %v562
    %565 = vmin.xlane.f32.xlu0 %v564
    %v566 = vpop.xlane.xlu0 %565
    %vm567 = vcmp.eq.f32.partialorder %v564, %v566
    %v568 = vsel %vm567, %v563, inf
    %569 = vmin.xlane.f32.xlu0 %v568
    %v570 = vpop.xlane.xlu0 %569
    %v571 = vcvt.f32.s32 %v570
    %v572 = vcvt.f32.s32 %v566
    %v573 = vshll.u32 %v572, 16
    %v574 = vadd.s32 %v573, %v571
    %v575 = vsel %vm238, %v525, 2147483647
    %v576 = vand.u32 %v575, 65535
    %v577 = vshra.s32 %v575, 16
    %v578 = vcvt.s32.f32 %v576
    %v579 = vcvt.s32.f32 %v577
    %580 = vmin.xlane.f32.xlu0 %v579
    %v581 = vpop.xlane.xlu0 %580
    %vm582 = vcmp.eq.f32.partialorder %v579, %v581
    %v583 = vsel %vm582, %v578, inf
    %584 = vmin.xlane.f32.xlu0 %v583
    %v585 = vpop.xlane.xlu0 %584
    %v586 = vcvt.f32.s32 %v585
    %v587 = vcvt.f32.s32 %v581
    %v588 = vshll.u32 %v587, 16
    %v589 = vadd.s32 %v588, %v586
    %v590 = vsel %vm238, %v526, 2147483647
    %v591 = vand.u32 %v590, 65535
    %v592 = vshra.s32 %v590, 16
    %v593 = vcvt.s32.f32 %v591
    %v594 = vcvt.s32.f32 %v592
    %595 = vmin.xlane.f32.xlu0 %v594
    %v596 = vpop.xlane.xlu0 %595
    %vm597 = vcmp.eq.f32.partialorder %v594, %v596
    %v598 = vsel %vm597, %v593, inf
    %599 = vmin.xlane.f32.xlu0 %v598
    %v600 = vpop.xlane.xlu0 %599
    %v601 = vcvt.f32.s32 %v600
    %v602 = vcvt.f32.s32 %v596
    %v603 = vshll.u32 %v602, 16
    %v604 = vadd.s32 %v603, %v601
    %v605 = vsel %vm238, %v527, 2147483647
    %v606 = vand.u32 %v605, 65535
    %v607 = vshra.s32 %v605, 16
    %v608 = vcvt.s32.f32 %v606
    %v609 = vcvt.s32.f32 %v607
    %610 = vmin.xlane.f32.xlu0 %v609
    %v611 = vpop.xlane.xlu0 %610
    %vm612 = vcmp.eq.f32.partialorder %v609, %v611
    %v613 = vsel %vm612, %v608, inf
    %614 = vmin.xlane.f32.xlu0 %v613
    %v615 = vpop.xlane.xlu0 %614
    %v616 = vcvt.f32.s32 %v615
    %v617 = vcvt.f32.s32 %v611
    %v618 = vshll.u32 %v617, 16
    %v619 = vadd.s32 %v618, %v616
    %v620 = vsel %vm238, %v528, 2147483647
    %v621 = vand.u32 %v620, 65535
    %v622 = vshra.s32 %v620, 16
    %v623 = vcvt.s32.f32 %v621
    %v624 = vcvt.s32.f32 %v622
    %625 = vmin.xlane.f32.xlu0 %v624
    %v626 = vpop.xlane.xlu0 %625
    %vm627 = vcmp.eq.f32.partialorder %v624, %v626
    %v628 = vsel %vm627, %v623, inf
    %629 = vmin.xlane.f32.xlu0 %v628
    %v630 = vpop.xlane.xlu0 %629
    %v631 = vcvt.f32.s32 %v630
    %v632 = vcvt.f32.s32 %v626
    %v633 = vshll.u32 %v632, 16
    %v634 = vadd.s32 %v633, %v631
    %v635 = vsel %vm238, %v529, 2147483647
    %v636 = vand.u32 %v635, 65535
    %v637 = vshra.s32 %v635, 16
    %v638 = vcvt.s32.f32 %v636
    %v639 = vcvt.s32.f32 %v637
    %640 = vmin.xlane.f32.xlu0 %v639
    %v641 = vpop.xlane.xlu0 %640
    %vm642 = vcmp.eq.f32.partialorder %v639, %v641
    %v643 = vsel %vm642, %v638, inf
    %644 = vmin.xlane.f32.xlu0 %v643
    %v645 = vpop.xlane.xlu0 %644
    %v646 = vcvt.f32.s32 %v645
    %v647 = vcvt.f32.s32 %v641
    %v648 = vshll.u32 %v647, 16
    %v649 = vadd.s32 %v648, %v646
    %vm650 = vcmp.lt.s32.totalorder %v544, %v559
    %v651 = vsel %vm650, %v544, %v559
    %v652 = vrot.slane %v651, 4
    %vm653 = vcmp.lt.s32.totalorder %v651, %v652
    %v654 = vsel %vm653, %v651, %v652
    %v655 = vrot.slane %v654, 2
    %vm656 = vcmp.lt.s32.totalorder %v654, %v655
    %v657 = vsel %vm656, %v654, %v655
    %v658 = vrot.slane %v657, 1
    %vm659 = vcmp.lt.s32.totalorder %v657, %v658
    %v660 = vsel %vm659, %v657, %v658
    %vm661 = vcmp.lt.s32.totalorder %v574, %v589
    %v662 = vsel %vm661, %v574, %v589
    %v663 = vrot.slane %v662, 4
    %vm664 = vcmp.lt.s32.totalorder %v662, %v663
    %v665 = vsel %vm664, %v662, %v663
    %v666 = vrot.slane %v665, 2
    %vm667 = vcmp.lt.s32.totalorder %v665, %v666
    %v668 = vsel %vm667, %v665, %v666
    %v669 = vrot.slane %v668, 1
    %vm670 = vcmp.lt.s32.totalorder %v668, %v669
    %v671 = vsel %vm670, %v668, %v669
    %vm672 = vcmp.lt.s32.totalorder %v604, %v619
    %v673 = vsel %vm672, %v604, %v619
    %v674 = vrot.slane %v673, 4
    %vm675 = vcmp.lt.s32.totalorder %v673, %v674
    %v676 = vsel %vm675, %v673, %v674
    %v677 = vrot.slane %v676, 2
    %vm678 = vcmp.lt.s32.totalorder %v676, %v677
    %v679 = vsel %vm678, %v676, %v677
    %v680 = vrot.slane %v679, 1
    %vm681 = vcmp.lt.s32.totalorder %v679, %v680
    %v682 = vsel %vm681, %v679, %v680
    %vm683 = vcmp.lt.s32.totalorder %v634, %v649
    %v684 = vsel %vm683, %v634, %v649
    %v685 = vrot.slane %v684, 4
    %vm686 = vcmp.lt.s32.totalorder %v684, %v685
    %v687 = vsel %vm686, %v684, %v685
    %v688 = vrot.slane %v687, 2
    %vm689 = vcmp.lt.s32.totalorder %v687, %v688
    %v690 = vsel %vm689, %v687, %v688
    %v691 = vrot.slane %v690, 1
    %vm692 = vcmp.lt.s32.totalorder %v690, %v691
    %v693 = vsel %vm692, %v690, %v691
    %vm694 = vcmp.eq.s32.totalorder %v460, %v660
    %vm695 = vcmp.eq.s32.totalorder %v461, %v660
    %vm696 = vcmp.eq.s32.totalorder %v460, %v671
    %vm697 = vcmp.eq.s32.totalorder %v461, %v671
    %vm698 = vcmp.eq.s32.totalorder %v460, %v682
    %vm699 = vcmp.eq.s32.totalorder %v461, %v682
    %vm700 = vcmp.eq.s32.totalorder %v460, %v693
    %vm701 = vcmp.eq.s32.totalorder %v461, %v693
    %v702 = vsel %vm694, -1e+30, %v445
    %v703 = vsel %vm695, -1e+30, %v446
    %v704 = vsel %vm696, -1e+30, %v447
    %v705 = vsel %vm697, -1e+30, %v448
    %v706 = vsel %vm698, -1e+30, %v449
    %v707 = vsel %vm699, -1e+30, %v450
    %v708 = vsel %vm700, -1e+30, %v451
    %v709 = vsel %vm701, -1e+30, %v452
    %v710 = vsel %vm238, %v445, inf
    %711 = vmin.xlane.f32.xlu0 %v710
    %v712 = vpop.xlane.xlu0 %711
    %v713 = vsel %vm238, %v446, inf
    %714 = vmin.xlane.f32.xlu0 %v713
    %v715 = vpop.xlane.xlu0 %714
    %v716 = vsel %vm238, %v447, inf
    %717 = vmin.xlane.f32.xlu0 %v716
    %v718 = vpop.xlane.xlu0 %717
    %v719 = vsel %vm238, %v448, inf
    %720 = vmin.xlane.f32.xlu0 %v719
    %v721 = vpop.xlane.xlu0 %720
    %v722 = vsel %vm238, %v449, inf
    %723 = vmin.xlane.f32.xlu0 %v722
    %v724 = vpop.xlane.xlu0 %723
    %v725 = vsel %vm238, %v450, inf
    %726 = vmin.xlane.f32.xlu0 %v725
    %v727 = vpop.xlane.xlu0 %726
    %v728 = vsel %vm238, %v451, inf
    %729 = vmin.xlane.f32.xlu0 %v728
    %v730 = vpop.xlane.xlu0 %729
    %v731 = vsel %vm238, %v452, inf
    %732 = vmin.xlane.f32.xlu0 %v731
    %v733 = vpop.xlane.xlu0 %732
    %v734 = vmin.f32 %v712, %v715
    %v735 = vrot.slane %v734, 4
    %v736 = vmin.f32 %v734, %v735
    %v737 = vrot.slane %v736, 2
    %v738 = vmin.f32 %v736, %v737
    %v739 = vrot.slane %v738, 1
    %v740 = vmin.f32 %v738, %v739
    %v741 = vmin.f32 %v718, %v721
    %v742 = vrot.slane %v741, 4
    %v743 = vmin.f32 %v741, %v742
    %v744 = vrot.slane %v743, 2
    %v745 = vmin.f32 %v743, %v744
    %v746 = vrot.slane %v745, 1
    %v747 = vmin.f32 %v745, %v746
    %v748 = vmin.f32 %v724, %v727
    %v749 = vrot.slane %v748, 4
    %v750 = vmin.f32 %v748, %v749
    %v751 = vrot.slane %v750, 2
    %v752 = vmin.f32 %v750, %v751
    %v753 = vrot.slane %v752, 1
    %v754 = vmin.f32 %v752, %v753
    %v755 = vmin.f32 %v730, %v733
    %v756 = vrot.slane %v755, 4
    %v757 = vmin.f32 %v755, %v756
    %v758 = vrot.slane %v757, 2
    %v759 = vmin.f32 %v757, %v758
    %v760 = vrot.slane %v759, 1
    %v761 = vmin.f32 %v759, %v760
    %vm762 = vcmp.eq.f32.partialorder %v445, %v740
    %vm763 = vcmp.eq.f32.partialorder %v446, %v740
    %vm764 = vcmp.eq.f32.partialorder %v447, %v747
    %vm765 = vcmp.eq.f32.partialorder %v448, %v747
    %vm766 = vcmp.eq.f32.partialorder %v449, %v754
    %vm767 = vcmp.eq.f32.partialorder %v450, %v754
    %vm768 = vcmp.eq.f32.partialorder %v451, %v761
    %vm769 = vcmp.eq.f32.partialorder %v452, %v761
    %v770 = vsel %vm762, %v460, 1073741824
    %v771 = vsel %vm763, %v461, 1073741824
    %v772 = vsel %vm764, %v460, 1073741824
    %v773 = vsel %vm765, %v461, 1073741824
    %v774 = vsel %vm766, %v460, 1073741824
    %v775 = vsel %vm767, %v461, 1073741824
    %v776 = vsel %vm768, %v460, 1073741824
    %v777 = vsel %vm769, %v461, 1073741824
    %v778 = vsel %vm238, %v770, 2147483647
    %v779 = vand.u32 %v778, 65535
    %v780 = vshra.s32 %v778, 16
    %v781 = vcvt.s32.f32 %v779
    %v782 = vcvt.s32.f32 %v780
    %783 = vmin.xlane.f32.xlu0 %v782
    %v784 = vpop.xlane.xlu0 %783
    %vm785 = vcmp.eq.f32.partialorder %v782, %v784
    %v786 = vsel %vm785, %v781, inf
    %787 = vmin.xlane.f32.xlu0 %v786
    %v788 = vpop.xlane.xlu0 %787
    %v789 = vcvt.f32.s32 %v788
    %v790 = vcvt.f32.s32 %v784
    %v791 = vshll.u32 %v790, 16
    %v792 = vadd.s32 %v791, %v789
    %v793 = vsel %vm238, %v771, 2147483647
    %v794 = vand.u32 %v793, 65535
    %v795 = vshra.s32 %v793, 16
    %v796 = vcvt.s32.f32 %v794
    %v797 = vcvt.s32.f32 %v795
    %798 = vmin.xlane.f32.xlu0 %v797
    %v799 = vpop.xlane.xlu0 %798
    %vm800 = vcmp.eq.f32.partialorder %v797, %v799
    %v801 = vsel %vm800, %v796, inf
    %802 = vmin.xlane.f32.xlu0 %v801
    %v803 = vpop.xlane.xlu0 %802
    %v804 = vcvt.f32.s32 %v803
    %v805 = vcvt.f32.s32 %v799
    %v806 = vshll.u32 %v805, 16
    %v807 = vadd.s32 %v806, %v804
    %v808 = vsel %vm238, %v772, 2147483647
    %v809 = vand.u32 %v808, 65535
    %v810 = vshra.s32 %v808, 16
    %v811 = vcvt.s32.f32 %v809
    %v812 = vcvt.s32.f32 %v810
    %813 = vmin.xlane.f32.xlu0 %v812
    %v814 = vpop.xlane.xlu0 %813
    %vm815 = vcmp.eq.f32.partialorder %v812, %v814
    %v816 = vsel %vm815, %v811, inf
    %817 = vmin.xlane.f32.xlu0 %v816
    %v818 = vpop.xlane.xlu0 %817
    %v819 = vcvt.f32.s32 %v818
    %v820 = vcvt.f32.s32 %v814
    %v821 = vshll.u32 %v820, 16
    %v822 = vadd.s32 %v821, %v819
    %v823 = vsel %vm238, %v773, 2147483647
    %v824 = vand.u32 %v823, 65535
    %v825 = vshra.s32 %v823, 16
    %v826 = vcvt.s32.f32 %v824
    %v827 = vcvt.s32.f32 %v825
    %828 = vmin.xlane.f32.xlu0 %v827
    %v829 = vpop.xlane.xlu0 %828
    %vm830 = vcmp.eq.f32.partialorder %v827, %v829
    %v831 = vsel %vm830, %v826, inf
    %832 = vmin.xlane.f32.xlu0 %v831
    %v833 = vpop.xlane.xlu0 %832
    %v834 = vcvt.f32.s32 %v833
    %v835 = vcvt.f32.s32 %v829
    %v836 = vshll.u32 %v835, 16
    %v837 = vadd.s32 %v836, %v834
    %v838 = vsel %vm238, %v774, 2147483647
    %v839 = vand.u32 %v838, 65535
    %v840 = vshra.s32 %v838, 16
    %v841 = vcvt.s32.f32 %v839
    %v842 = vcvt.s32.f32 %v840
    %843 = vmin.xlane.f32.xlu0 %v842
    %v844 = vpop.xlane.xlu0 %843
    %vm845 = vcmp.eq.f32.partialorder %v842, %v844
    %v846 = vsel %vm845, %v841, inf
    %847 = vmin.xlane.f32.xlu0 %v846
    %v848 = vpop.xlane.xlu0 %847
    %v849 = vcvt.f32.s32 %v848
    %v850 = vcvt.f32.s32 %v844
    %v851 = vshll.u32 %v850, 16
    %v852 = vadd.s32 %v851, %v849
    %v853 = vsel %vm238, %v775, 2147483647
    %v854 = vand.u32 %v853, 65535
    %v855 = vshra.s32 %v853, 16
    %v856 = vcvt.s32.f32 %v854
    %v857 = vcvt.s32.f32 %v855
    %858 = vmin.xlane.f32.xlu0 %v857
    %v859 = vpop.xlane.xlu0 %858
    %vm860 = vcmp.eq.f32.partialorder %v857, %v859
    %v861 = vsel %vm860, %v856, inf
    %862 = vmin.xlane.f32.xlu0 %v861
    %v863 = vpop.xlane.xlu0 %862
    %v864 = vcvt.f32.s32 %v863
    %v865 = vcvt.f32.s32 %v859
    %v866 = vshll.u32 %v865, 16
    %v867 = vadd.s32 %v866, %v864
    %v868 = vsel %vm238, %v776, 2147483647
    %v869 = vand.u32 %v868, 65535
    %v870 = vshra.s32 %v868, 16
    %v871 = vcvt.s32.f32 %v869
    %v872 = vcvt.s32.f32 %v870
    %873 = vmin.xlane.f32.xlu0 %v872
    %v874 = vpop.xlane.xlu0 %873
    %vm875 = vcmp.eq.f32.partialorder %v872, %v874
    %v876 = vsel %vm875, %v871, inf
    %877 = vmin.xlane.f32.xlu0 %v876
    %v878 = vpop.xlane.xlu0 %877
    %v879 = vcvt.f32.s32 %v878
    %v880 = vcvt.f32.s32 %v874
    %v881 = vshll.u32 %v880, 16
    %v882 = vadd.s32 %v881, %v879
    %v883 = vsel %vm238, %v777, 2147483647
    %v884 = vand.u32 %v883, 65535
    %v885 = vshra.s32 %v883, 16
    %v886 = vcvt.s32.f32 %v884
    %v887 = vcvt.s32.f32 %v885
    %888 = vmin.xlane.f32.xlu0 %v887
    %v889 = vpop.xlane.xlu0 %888
    %vm890 = vcmp.eq.f32.partialorder %v887, %v889
    %v891 = vsel %vm890, %v886, inf
    %892 = vmin.xlane.f32.xlu0 %v891
    %v893 = vpop.xlane.xlu0 %892
    %v894 = vcvt.f32.s32 %v893
    %v895 = vcvt.f32.s32 %v889
    %v896 = vshll.u32 %v895, 16
    %v897 = vadd.s32 %v896, %v894
    %vm898 = vcmp.lt.s32.totalorder %v792, %v807
    %v899 = vsel %vm898, %v792, %v807
    %v900 = vrot.slane %v899, 4
    %vm901 = vcmp.lt.s32.totalorder %v899, %v900
    %v902 = vsel %vm901, %v899, %v900
    %v903 = vrot.slane %v902, 2
    %vm904 = vcmp.lt.s32.totalorder %v902, %v903
    %v905 = vsel %vm904, %v902, %v903
    %v906 = vrot.slane %v905, 1
    %vm907 = vcmp.lt.s32.totalorder %v905, %v906
    %v908 = vsel %vm907, %v905, %v906
    %vm909 = vcmp.lt.s32.totalorder %v822, %v837
    %v910 = vsel %vm909, %v822, %v837
    %v911 = vrot.slane %v910, 4
    %vm912 = vcmp.lt.s32.totalorder %v910, %v911
    %v913 = vsel %vm912, %v910, %v911
    %v914 = vrot.slane %v913, 2
    %vm915 = vcmp.lt.s32.totalorder %v913, %v914
    %v916 = vsel %vm915, %v913, %v914
    %v917 = vrot.slane %v916, 1
    %vm918 = vcmp.lt.s32.totalorder %v916, %v917
    %v919 = vsel %vm918, %v916, %v917
    %vm920 = vcmp.lt.s32.totalorder %v852, %v867
    %v921 = vsel %vm920, %v852, %v867
    %v922 = vrot.slane %v921, 4
    %vm923 = vcmp.lt.s32.totalorder %v921, %v922
    %v924 = vsel %vm923, %v921, %v922
    %v925 = vrot.slane %v924, 2
    %vm926 = vcmp.lt.s32.totalorder %v924, %v925
    %v927 = vsel %vm926, %v924, %v925
    %v928 = vrot.slane %v927, 1
    %vm929 = vcmp.lt.s32.totalorder %v927, %v928
    %v930 = vsel %vm929, %v927, %v928
    %vm931 = vcmp.lt.s32.totalorder %v882, %v897
    %v932 = vsel %vm931, %v882, %v897
    %v933 = vrot.slane %v932, 4
    %vm934 = vcmp.lt.s32.totalorder %v932, %v933
    %v935 = vsel %vm934, %v932, %v933
    %v936 = vrot.slane %v935, 2
    %vm937 = vcmp.lt.s32.totalorder %v935, %v936
    %v938 = vsel %vm937, %v935, %v936
    %v939 = vrot.slane %v938, 1
    %vm940 = vcmp.lt.s32.totalorder %v938, %v939
    %v941 = vsel %vm940, %v938, %v939
    %vm942 = vcmp.eq.s32.totalorder %v460, %v908
    %vm943 = vcmp.eq.s32.totalorder %v461, %v908
    %vm944 = vcmp.eq.s32.totalorder %v460, %v919
    %vm945 = vcmp.eq.s32.totalorder %v461, %v919
    %vm946 = vcmp.eq.s32.totalorder %v460, %v930
    %vm947 = vcmp.eq.s32.totalorder %v461, %v930
    %vm948 = vcmp.eq.s32.totalorder %v460, %v941
    %vm949 = vcmp.eq.s32.totalorder %v461, %v941
    %v950 = vsel %vm942, 1e+30, %v445
    %v951 = vsel %vm943, 1e+30, %v446
    %v952 = vsel %vm944, 1e+30, %v447
    %v953 = vsel %vm945, 1e+30, %v448
    %v954 = vsel %vm946, 1e+30, %v449
    %v955 = vsel %vm947, 1e+30, %v450
    %v956 = vsel %vm948, 1e+30, %v451
    %v957 = vsel %vm949, 1e+30, %v452
    %v958 = vsub.f32 0.0, %v492
    %v959 = vsub.f32 0.0, %v499
    %v960 = vsub.f32 0.0, %v506
    %v961 = vsub.f32 0.0, %v513
    %v962 = vmax.f32 %v958, 0.0
    %v963 = vmax.f32 %v959, 0.0
    %v964 = vmax.f32 %v960, 0.0
    %v965 = vmax.f32 %v961, 0.0
    %v966 = vand.u32 2147483647, %v958
    %v967 = vand.u32 2147483647, %v959
    %v968 = vand.u32 2147483647, %v960
    %v969 = vand.u32 2147483647, %v961
    %v970 = vsub.f32 0.0, %v966
    %v971 = vsub.f32 0.0, %v967
    %v972 = vsub.f32 0.0, %v968
    %v973 = vsub.f32 0.0, %v969
    %v974 = vmul.f32 %v970, 1.442695
    %v975 = vpow.pop %v974
    %v976 = vmul.f32 %v971, 1.442695
    %v977 = vpow.pop %v976
    %v978 = vmul.f32 %v972, 1.442695
    %v979 = vpow.pop %v978
    %v980 = vmul.f32 %v973, 1.442695
    %v981 = vpow.pop %v980
    %v982 = vadd.f32 %v975, 1.0
    %v983 = vlog2.pop %v982
    %v984 = vmul.f32 %v983, 0.6931472
    %v985 = vmul.f32 -0.5, %v975
    %v986 = vadd.f32 %v985, 1.0
    %v987 = vmul.f32 %v986, %v975
    %v988 = vand.u32 2147483647, %v975
    %vm989 = vcmp.lt.f32.partialorder %v988, 0.0004427343
    %v990 = vsel %vm989, %v987, %v984
    %v991 = vadd.f32 %v977, 1.0
    %v992 = vlog2.pop %v991
    %v993 = vmul.f32 %v992, 0.6931472
    %v994 = vmul.f32 -0.5, %v977
    %v995 = vadd.f32 %v994, 1.0
    %v996 = vmul.f32 %v995, %v977
    %v997 = vand.u32 2147483647, %v977
    %vm998 = vcmp.lt.f32.partialorder %v997, 0.0004427343
    %v999 = vsel %vm998, %v996, %v993
    %v1000 = vadd.f32 %v979, 1.0
    %v1001 = vlog2.pop %v1000
    %v1002 = vmul.f32 %v1001, 0.6931472
    %v1003 = vmul.f32 -0.5, %v979
    %v1004 = vadd.f32 %v1003, 1.0
    %v1005 = vmul.f32 %v1004, %v979
    %v1006 = vand.u32 2147483647, %v979
    %vm1007 = vcmp.lt.f32.partialorder %v1006, 0.0004427343
    %v1008 = vsel %vm1007, %v1005, %v1002
    %v1009 = vadd.f32 %v981, 1.0
    %v1010 = vlog2.pop %v1009
    %v1011 = vmul.f32 %v1010, 0.6931472
    %v1012 = vmul.f32 -0.5, %v981
    %v1013 = vadd.f32 %v1012, 1.0
    %v1014 = vmul.f32 %v1013, %v981
    %v1015 = vand.u32 2147483647, %v981
    %vm1016 = vcmp.lt.f32.partialorder %v1015, 0.0004427343
    %v1017 = vsel %vm1016, %v1014, %v1011
    %v1018 = vadd.f32 %v962, %v990
    %v1019 = vadd.f32 %v963, %v999
    %v1020 = vadd.f32 %v964, %v1008
    %v1021 = vadd.f32 %v965, %v1017
    %v1022 = vadd.f32 %v1018, 0.0
    %v1023 = vadd.f32 %v1019, 0.0
    %v1024 = vadd.f32 %v1020, 0.0
    %v1025 = vadd.f32 %v1021, 0.0
    %v1026 = vmax.f32 %v740, 0.0
    %v1027 = vmax.f32 %v747, 0.0
    %v1028 = vmax.f32 %v754, 0.0
    %v1029 = vmax.f32 %v761, 0.0
    %v1030 = vand.u32 2147483647, %v740
    %v1031 = vand.u32 2147483647, %v747
    %v1032 = vand.u32 2147483647, %v754
    %v1033 = vand.u32 2147483647, %v761
    %v1034 = vsub.f32 0.0, %v1030
    %v1035 = vsub.f32 0.0, %v1031
    %v1036 = vsub.f32 0.0, %v1032
    %v1037 = vsub.f32 0.0, %v1033
    %v1038 = vmul.f32 %v1034, 1.442695
    %v1039 = vpow.pop %v1038
    %v1040 = vmul.f32 %v1035, 1.442695
    %v1041 = vpow.pop %v1040
    %v1042 = vmul.f32 %v1036, 1.442695
    %v1043 = vpow.pop %v1042
    %v1044 = vmul.f32 %v1037, 1.442695
    %v1045 = vpow.pop %v1044
    %v1046 = vadd.f32 %v1039, 1.0
    %v1047 = vlog2.pop %v1046
    %v1048 = vmul.f32 %v1047, 0.6931472
    %v1049 = vmul.f32 -0.5, %v1039
    %v1050 = vadd.f32 %v1049, 1.0
    %v1051 = vmul.f32 %v1050, %v1039
    %v1052 = vand.u32 2147483647, %v1039
    %vm1053 = vcmp.lt.f32.partialorder %v1052, 0.0004427343
    %v1054 = vsel %vm1053, %v1051, %v1048
    %v1055 = vadd.f32 %v1041, 1.0
    %v1056 = vlog2.pop %v1055
    %v1057 = vmul.f32 %v1056, 0.6931472
    %v1058 = vmul.f32 -0.5, %v1041
    %v1059 = vadd.f32 %v1058, 1.0
    %v1060 = vmul.f32 %v1059, %v1041
    %v1061 = vand.u32 2147483647, %v1041
    %vm1062 = vcmp.lt.f32.partialorder %v1061, 0.0004427343
    %v1063 = vsel %vm1062, %v1060, %v1057
    %v1064 = vadd.f32 %v1043, 1.0
    %v1065 = vlog2.pop %v1064
    %v1066 = vmul.f32 %v1065, 0.6931472
    %v1067 = vmul.f32 -0.5, %v1043
    %v1068 = vadd.f32 %v1067, 1.0
    %v1069 = vmul.f32 %v1068, %v1043
    %v1070 = vand.u32 2147483647, %v1043
    %vm1071 = vcmp.lt.f32.partialorder %v1070, 0.0004427343
    %v1072 = vsel %vm1071, %v1069, %v1066
    %v1073 = vadd.f32 %v1045, 1.0
    %v1074 = vlog2.pop %v1073
    %v1075 = vmul.f32 %v1074, 0.6931472
    %v1076 = vmul.f32 -0.5, %v1045
    %v1077 = vadd.f32 %v1076, 1.0
    %v1078 = vmul.f32 %v1077, %v1045
    %v1079 = vand.u32 2147483647, %v1045
    %vm1080 = vcmp.lt.f32.partialorder %v1079, 0.0004427343
    %v1081 = vsel %vm1080, %v1078, %v1075
    %v1082 = vadd.f32 %v1026, %v1054
    %v1083 = vadd.f32 %v1027, %v1063
    %v1084 = vadd.f32 %v1028, %v1072
    %v1085 = vadd.f32 %v1029, %v1081
    %v1086 = vadd.f32 %v1022, %v1082
    %v1087 = vadd.f32 %v1023, %v1083
    %v1088 = vadd.f32 %v1024, %v1084
    %v1089 = vadd.f32 %v1025, %v1085
    %v1090 = vsel %vm238, %v702, -inf
    %1091 = vmax.xlane.f32.xlu0 %v1090
    %v1092 = vpop.xlane.xlu0 %1091
    %v1093 = vsel %vm238, %v703, -inf
    %1094 = vmax.xlane.f32.xlu0 %v1093
    %v1095 = vpop.xlane.xlu0 %1094
    %v1096 = vsel %vm238, %v704, -inf
    %1097 = vmax.xlane.f32.xlu0 %v1096
    %v1098 = vpop.xlane.xlu0 %1097
    %v1099 = vsel %vm238, %v705, -inf
    %1100 = vmax.xlane.f32.xlu0 %v1099
    %v1101 = vpop.xlane.xlu0 %1100
    %v1102 = vsel %vm238, %v706, -inf
    %1103 = vmax.xlane.f32.xlu0 %v1102
    %v1104 = vpop.xlane.xlu0 %1103
    %v1105 = vsel %vm238, %v707, -inf
    %1106 = vmax.xlane.f32.xlu0 %v1105
    %v1107 = vpop.xlane.xlu0 %1106
    %v1108 = vsel %vm238, %v708, -inf
    %1109 = vmax.xlane.f32.xlu0 %v1108
    %v1110 = vpop.xlane.xlu0 %1109
    %v1111 = vsel %vm238, %v709, -inf
    %1112 = vmax.xlane.f32.xlu0 %v1111
    %v1113 = vpop.xlane.xlu0 %1112
    %v1114 = vmax.f32 %v1092, %v1095
    %v1115 = vrot.slane %v1114, 4
    %v1116 = vmax.f32 %v1114, %v1115
    %v1117 = vrot.slane %v1116, 2
    %v1118 = vmax.f32 %v1116, %v1117
    %v1119 = vrot.slane %v1118, 1
    %v1120 = vmax.f32 %v1118, %v1119
    %v1121 = vmax.f32 %v1098, %v1101
    %v1122 = vrot.slane %v1121, 4
    %v1123 = vmax.f32 %v1121, %v1122
    %v1124 = vrot.slane %v1123, 2
    %v1125 = vmax.f32 %v1123, %v1124
    %v1126 = vrot.slane %v1125, 1
    %v1127 = vmax.f32 %v1125, %v1126
    %v1128 = vmax.f32 %v1104, %v1107
    %v1129 = vrot.slane %v1128, 4
    %v1130 = vmax.f32 %v1128, %v1129
    %v1131 = vrot.slane %v1130, 2
    %v1132 = vmax.f32 %v1130, %v1131
    %v1133 = vrot.slane %v1132, 1
    %v1134 = vmax.f32 %v1132, %v1133
    %v1135 = vmax.f32 %v1110, %v1113
    %v1136 = vrot.slane %v1135, 4
    %v1137 = vmax.f32 %v1135, %v1136
    %v1138 = vrot.slane %v1137, 2
    %v1139 = vmax.f32 %v1137, %v1138
    %v1140 = vrot.slane %v1139, 1
    %v1141 = vmax.f32 %v1139, %v1140
    %vm1142 = vcmp.eq.f32.partialorder %v702, %v1120
    %vm1143 = vcmp.eq.f32.partialorder %v703, %v1120
    %vm1144 = vcmp.eq.f32.partialorder %v704, %v1127
    %vm1145 = vcmp.eq.f32.partialorder %v705, %v1127
    %vm1146 = vcmp.eq.f32.partialorder %v706, %v1134
    %vm1147 = vcmp.eq.f32.partialorder %v707, %v1134
    %vm1148 = vcmp.eq.f32.partialorder %v708, %v1141
    %vm1149 = vcmp.eq.f32.partialorder %v709, %v1141
    %v1150 = vsel %vm1142, %v460, 1073741824
    %v1151 = vsel %vm1143, %v461, 1073741824
    %v1152 = vsel %vm1144, %v460, 1073741824
    %v1153 = vsel %vm1145, %v461, 1073741824
    %v1154 = vsel %vm1146, %v460, 1073741824
    %v1155 = vsel %vm1147, %v461, 1073741824
    %v1156 = vsel %vm1148, %v460, 1073741824
    %v1157 = vsel %vm1149, %v461, 1073741824
    %v1158 = vsel %vm238, %v1150, 2147483647
    %v1159 = vand.u32 %v1158, 65535
    %v1160 = vshra.s32 %v1158, 16
    %v1161 = vcvt.s32.f32 %v1159
    %v1162 = vcvt.s32.f32 %v1160
    %1163 = vmin.xlane.f32.xlu0 %v1162
    %v1164 = vpop.xlane.xlu0 %1163
    %vm1165 = vcmp.eq.f32.partialorder %v1162, %v1164
    %v1166 = vsel %vm1165, %v1161, inf
    %1167 = vmin.xlane.f32.xlu0 %v1166
    %v1168 = vpop.xlane.xlu0 %1167
    %v1169 = vcvt.f32.s32 %v1168
    %v1170 = vcvt.f32.s32 %v1164
    %v1171 = vshll.u32 %v1170, 16
    %v1172 = vadd.s32 %v1171, %v1169
    %v1173 = vsel %vm238, %v1151, 2147483647
    %v1174 = vand.u32 %v1173, 65535
    %v1175 = vshra.s32 %v1173, 16
    %v1176 = vcvt.s32.f32 %v1174
    %v1177 = vcvt.s32.f32 %v1175
    %1178 = vmin.xlane.f32.xlu0 %v1177
    %v1179 = vpop.xlane.xlu0 %1178
    %vm1180 = vcmp.eq.f32.partialorder %v1177, %v1179
    %v1181 = vsel %vm1180, %v1176, inf
    %1182 = vmin.xlane.f32.xlu0 %v1181
    %v1183 = vpop.xlane.xlu0 %1182
    %v1184 = vcvt.f32.s32 %v1183
    %v1185 = vcvt.f32.s32 %v1179
    %v1186 = vshll.u32 %v1185, 16
    %v1187 = vadd.s32 %v1186, %v1184
    %v1188 = vsel %vm238, %v1152, 2147483647
    %v1189 = vand.u32 %v1188, 65535
    %v1190 = vshra.s32 %v1188, 16
    %v1191 = vcvt.s32.f32 %v1189
    %v1192 = vcvt.s32.f32 %v1190
    %1193 = vmin.xlane.f32.xlu0 %v1192
    %v1194 = vpop.xlane.xlu0 %1193
    %vm1195 = vcmp.eq.f32.partialorder %v1192, %v1194
    %v1196 = vsel %vm1195, %v1191, inf
    %1197 = vmin.xlane.f32.xlu0 %v1196
    %v1198 = vpop.xlane.xlu0 %1197
    %v1199 = vcvt.f32.s32 %v1198
    %v1200 = vcvt.f32.s32 %v1194
    %v1201 = vshll.u32 %v1200, 16
    %v1202 = vadd.s32 %v1201, %v1199
    %v1203 = vsel %vm238, %v1153, 2147483647
    %v1204 = vand.u32 %v1203, 65535
    %v1205 = vshra.s32 %v1203, 16
    %v1206 = vcvt.s32.f32 %v1204
    %v1207 = vcvt.s32.f32 %v1205
    %1208 = vmin.xlane.f32.xlu0 %v1207
    %v1209 = vpop.xlane.xlu0 %1208
    %vm1210 = vcmp.eq.f32.partialorder %v1207, %v1209
    %v1211 = vsel %vm1210, %v1206, inf
    %1212 = vmin.xlane.f32.xlu0 %v1211
    %v1213 = vpop.xlane.xlu0 %1212
    %v1214 = vcvt.f32.s32 %v1213
    %v1215 = vcvt.f32.s32 %v1209
    %v1216 = vshll.u32 %v1215, 16
    %v1217 = vadd.s32 %v1216, %v1214
    %v1218 = vsel %vm238, %v1154, 2147483647
    %v1219 = vand.u32 %v1218, 65535
    %v1220 = vshra.s32 %v1218, 16
    %v1221 = vcvt.s32.f32 %v1219
    %v1222 = vcvt.s32.f32 %v1220
    %1223 = vmin.xlane.f32.xlu0 %v1222
    %v1224 = vpop.xlane.xlu0 %1223
    %vm1225 = vcmp.eq.f32.partialorder %v1222, %v1224
    %v1226 = vsel %vm1225, %v1221, inf
    %1227 = vmin.xlane.f32.xlu0 %v1226
    %v1228 = vpop.xlane.xlu0 %1227
    %v1229 = vcvt.f32.s32 %v1228
    %v1230 = vcvt.f32.s32 %v1224
    %v1231 = vshll.u32 %v1230, 16
    %v1232 = vadd.s32 %v1231, %v1229
    %v1233 = vsel %vm238, %v1155, 2147483647
    %v1234 = vand.u32 %v1233, 65535
    %v1235 = vshra.s32 %v1233, 16
    %v1236 = vcvt.s32.f32 %v1234
    %v1237 = vcvt.s32.f32 %v1235
    %1238 = vmin.xlane.f32.xlu0 %v1237
    %v1239 = vpop.xlane.xlu0 %1238
    %vm1240 = vcmp.eq.f32.partialorder %v1237, %v1239
    %v1241 = vsel %vm1240, %v1236, inf
    %1242 = vmin.xlane.f32.xlu0 %v1241
    %v1243 = vpop.xlane.xlu0 %1242
    %v1244 = vcvt.f32.s32 %v1243
    %v1245 = vcvt.f32.s32 %v1239
    %v1246 = vshll.u32 %v1245, 16
    %v1247 = vadd.s32 %v1246, %v1244
    %v1248 = vsel %vm238, %v1156, 2147483647
    %v1249 = vand.u32 %v1248, 65535
    %v1250 = vshra.s32 %v1248, 16
    %v1251 = vcvt.s32.f32 %v1249
    %v1252 = vcvt.s32.f32 %v1250
    %1253 = vmin.xlane.f32.xlu0 %v1252
    %v1254 = vpop.xlane.xlu0 %1253
    %vm1255 = vcmp.eq.f32.partialorder %v1252, %v1254
    %v1256 = vsel %vm1255, %v1251, inf
    %1257 = vmin.xlane.f32.xlu0 %v1256
    %v1258 = vpop.xlane.xlu0 %1257
    %v1259 = vcvt.f32.s32 %v1258
    %v1260 = vcvt.f32.s32 %v1254
    %v1261 = vshll.u32 %v1260, 16
    %v1262 = vadd.s32 %v1261, %v1259
    %v1263 = vsel %vm238, %v1157, 2147483647
    %v1264 = vand.u32 %v1263, 65535
    %v1265 = vshra.s32 %v1263, 16
    %v1266 = vcvt.s32.f32 %v1264
    %v1267 = vcvt.s32.f32 %v1265
    %1268 = vmin.xlane.f32.xlu0 %v1267
    %v1269 = vpop.xlane.xlu0 %1268
    %vm1270 = vcmp.eq.f32.partialorder %v1267, %v1269
    %v1271 = vsel %vm1270, %v1266, inf
    %1272 = vmin.xlane.f32.xlu0 %v1271
    %v1273 = vpop.xlane.xlu0 %1272
    %v1274 = vcvt.f32.s32 %v1273
    %v1275 = vcvt.f32.s32 %v1269
    %v1276 = vshll.u32 %v1275, 16
    %v1277 = vadd.s32 %v1276, %v1274
    %vm1278 = vcmp.lt.s32.totalorder %v1172, %v1187
    %v1279 = vsel %vm1278, %v1172, %v1187
    %v1280 = vrot.slane %v1279, 4
    %vm1281 = vcmp.lt.s32.totalorder %v1279, %v1280
    %v1282 = vsel %vm1281, %v1279, %v1280
    %v1283 = vrot.slane %v1282, 2
    %vm1284 = vcmp.lt.s32.totalorder %v1282, %v1283
    %v1285 = vsel %vm1284, %v1282, %v1283
    %v1286 = vrot.slane %v1285, 1
    %vm1287 = vcmp.lt.s32.totalorder %v1285, %v1286
    %v1288 = vsel %vm1287, %v1285, %v1286
    %vm1289 = vcmp.lt.s32.totalorder %v1202, %v1217
    %v1290 = vsel %vm1289, %v1202, %v1217
    %v1291 = vrot.slane %v1290, 4
    %vm1292 = vcmp.lt.s32.totalorder %v1290, %v1291
    %v1293 = vsel %vm1292, %v1290, %v1291
    %v1294 = vrot.slane %v1293, 2
    %vm1295 = vcmp.lt.s32.totalorder %v1293, %v1294
    %v1296 = vsel %vm1295, %v1293, %v1294
    %v1297 = vrot.slane %v1296, 1
    %vm1298 = vcmp.lt.s32.totalorder %v1296, %v1297
    %v1299 = vsel %vm1298, %v1296, %v1297
    %vm1300 = vcmp.lt.s32.totalorder %v1232, %v1247
    %v1301 = vsel %vm1300, %v1232, %v1247
    %v1302 = vrot.slane %v1301, 4
    %vm1303 = vcmp.lt.s32.totalorder %v1301, %v1302
    %v1304 = vsel %vm1303, %v1301, %v1302
    %v1305 = vrot.slane %v1304, 2
    %vm1306 = vcmp.lt.s32.totalorder %v1304, %v1305
    %v1307 = vsel %vm1306, %v1304, %v1305
    %v1308 = vrot.slane %v1307, 1
    %vm1309 = vcmp.lt.s32.totalorder %v1307, %v1308
    %v1310 = vsel %vm1309, %v1307, %v1308
    %vm1311 = vcmp.lt.s32.totalorder %v1262, %v1277
    %v1312 = vsel %vm1311, %v1262, %v1277
    %v1313 = vrot.slane %v1312, 4
    %vm1314 = vcmp.lt.s32.totalorder %v1312, %v1313
    %v1315 = vsel %vm1314, %v1312, %v1313
    %v1316 = vrot.slane %v1315, 2
    %vm1317 = vcmp.lt.s32.totalorder %v1315, %v1316
    %v1318 = vsel %vm1317, %v1315, %v1316
    %v1319 = vrot.slane %v1318, 1
    %vm1320 = vcmp.lt.s32.totalorder %v1318, %v1319
    %v1321 = vsel %vm1320, %v1318, %v1319
    %vm1322 = vcmp.eq.s32.totalorder %v460, %v1288
    %vm1323 = vcmp.eq.s32.totalorder %v461, %v1288
    %vm1324 = vcmp.eq.s32.totalorder %v460, %v1299
    %vm1325 = vcmp.eq.s32.totalorder %v461, %v1299
    %vm1326 = vcmp.eq.s32.totalorder %v460, %v1310
    %vm1327 = vcmp.eq.s32.totalorder %v461, %v1310
    %vm1328 = vcmp.eq.s32.totalorder %v460, %v1321
    %vm1329 = vcmp.eq.s32.totalorder %v461, %v1321
    %v1330 = vsel %vm1322, -1e+30, %v702
    %v1331 = vsel %vm1323, -1e+30, %v703
    %v1332 = vsel %vm1324, -1e+30, %v704
    %v1333 = vsel %vm1325, -1e+30, %v705
    %v1334 = vsel %vm1326, -1e+30, %v706
    %v1335 = vsel %vm1327, -1e+30, %v707
    %v1336 = vsel %vm1328, -1e+30, %v708
    %v1337 = vsel %vm1329, -1e+30, %v709
    %v1338 = vsel %vm238, %v950, inf
    %1339 = vmin.xlane.f32.xlu0 %v1338
    %v1340 = vpop.xlane.xlu0 %1339
    %v1341 = vsel %vm238, %v951, inf
    %1342 = vmin.xlane.f32.xlu0 %v1341
    %v1343 = vpop.xlane.xlu0 %1342
    %v1344 = vsel %vm238, %v952, inf
    %1345 = vmin.xlane.f32.xlu0 %v1344
    %v1346 = vpop.xlane.xlu0 %1345
    %v1347 = vsel %vm238, %v953, inf
    %1348 = vmin.xlane.f32.xlu0 %v1347
    %v1349 = vpop.xlane.xlu0 %1348
    %v1350 = vsel %vm238, %v954, inf
    %1351 = vmin.xlane.f32.xlu0 %v1350
    %v1352 = vpop.xlane.xlu0 %1351
    %v1353 = vsel %vm238, %v955, inf
    %1354 = vmin.xlane.f32.xlu0 %v1353
    %v1355 = vpop.xlane.xlu0 %1354
    %v1356 = vsel %vm238, %v956, inf
    %1357 = vmin.xlane.f32.xlu0 %v1356
    %v1358 = vpop.xlane.xlu0 %1357
    %v1359 = vsel %vm238, %v957, inf
    %1360 = vmin.xlane.f32.xlu0 %v1359
    %v1361 = vpop.xlane.xlu0 %1360
    %v1362 = vmin.f32 %v1340, %v1343
    %v1363 = vrot.slane %v1362, 4
    %v1364 = vmin.f32 %v1362, %v1363
    %v1365 = vrot.slane %v1364, 2
    %v1366 = vmin.f32 %v1364, %v1365
    %v1367 = vrot.slane %v1366, 1
    %v1368 = vmin.f32 %v1366, %v1367
    %v1369 = vmin.f32 %v1346, %v1349
    %v1370 = vrot.slane %v1369, 4
    %v1371 = vmin.f32 %v1369, %v1370
    %v1372 = vrot.slane %v1371, 2
    %v1373 = vmin.f32 %v1371, %v1372
    %v1374 = vrot.slane %v1373, 1
    %v1375 = vmin.f32 %v1373, %v1374
    %v1376 = vmin.f32 %v1352, %v1355
    %v1377 = vrot.slane %v1376, 4
    %v1378 = vmin.f32 %v1376, %v1377
    %v1379 = vrot.slane %v1378, 2
    %v1380 = vmin.f32 %v1378, %v1379
    %v1381 = vrot.slane %v1380, 1
    %v1382 = vmin.f32 %v1380, %v1381
    %v1383 = vmin.f32 %v1358, %v1361
    %v1384 = vrot.slane %v1383, 4
    %v1385 = vmin.f32 %v1383, %v1384
    %v1386 = vrot.slane %v1385, 2
    %v1387 = vmin.f32 %v1385, %v1386
    %v1388 = vrot.slane %v1387, 1
    %v1389 = vmin.f32 %v1387, %v1388
    %vm1390 = vcmp.eq.f32.partialorder %v950, %v1368
    %vm1391 = vcmp.eq.f32.partialorder %v951, %v1368
    %vm1392 = vcmp.eq.f32.partialorder %v952, %v1375
    %vm1393 = vcmp.eq.f32.partialorder %v953, %v1375
    %vm1394 = vcmp.eq.f32.partialorder %v954, %v1382
    %vm1395 = vcmp.eq.f32.partialorder %v955, %v1382
    %vm1396 = vcmp.eq.f32.partialorder %v956, %v1389
    %vm1397 = vcmp.eq.f32.partialorder %v957, %v1389
    %v1398 = vsel %vm1390, %v460, 1073741824
    %v1399 = vsel %vm1391, %v461, 1073741824
    %v1400 = vsel %vm1392, %v460, 1073741824
    %v1401 = vsel %vm1393, %v461, 1073741824
    %v1402 = vsel %vm1394, %v460, 1073741824
    %v1403 = vsel %vm1395, %v461, 1073741824
    %v1404 = vsel %vm1396, %v460, 1073741824
    %v1405 = vsel %vm1397, %v461, 1073741824
    %v1406 = vsel %vm238, %v1398, 2147483647
    %v1407 = vand.u32 %v1406, 65535
    %v1408 = vshra.s32 %v1406, 16
    %v1409 = vcvt.s32.f32 %v1407
    %v1410 = vcvt.s32.f32 %v1408
    %1411 = vmin.xlane.f32.xlu0 %v1410
    %v1412 = vpop.xlane.xlu0 %1411
    %vm1413 = vcmp.eq.f32.partialorder %v1410, %v1412
    %v1414 = vsel %vm1413, %v1409, inf
    %1415 = vmin.xlane.f32.xlu0 %v1414
    %v1416 = vpop.xlane.xlu0 %1415
    %v1417 = vcvt.f32.s32 %v1416
    %v1418 = vcvt.f32.s32 %v1412
    %v1419 = vshll.u32 %v1418, 16
    %v1420 = vadd.s32 %v1419, %v1417
    %v1421 = vsel %vm238, %v1399, 2147483647
    %v1422 = vand.u32 %v1421, 65535
    %v1423 = vshra.s32 %v1421, 16
    %v1424 = vcvt.s32.f32 %v1422
    %v1425 = vcvt.s32.f32 %v1423
    %1426 = vmin.xlane.f32.xlu0 %v1425
    %v1427 = vpop.xlane.xlu0 %1426
    %vm1428 = vcmp.eq.f32.partialorder %v1425, %v1427
    %v1429 = vsel %vm1428, %v1424, inf
    %1430 = vmin.xlane.f32.xlu0 %v1429
    %v1431 = vpop.xlane.xlu0 %1430
    %v1432 = vcvt.f32.s32 %v1431
    %v1433 = vcvt.f32.s32 %v1427
    %v1434 = vshll.u32 %v1433, 16
    %v1435 = vadd.s32 %v1434, %v1432
    %v1436 = vsel %vm238, %v1400, 2147483647
    %v1437 = vand.u32 %v1436, 65535
    %v1438 = vshra.s32 %v1436, 16
    %v1439 = vcvt.s32.f32 %v1437
    %v1440 = vcvt.s32.f32 %v1438
    %1441 = vmin.xlane.f32.xlu0 %v1440
    %v1442 = vpop.xlane.xlu0 %1441
    %vm1443 = vcmp.eq.f32.partialorder %v1440, %v1442
    %v1444 = vsel %vm1443, %v1439, inf
    %1445 = vmin.xlane.f32.xlu0 %v1444
    %v1446 = vpop.xlane.xlu0 %1445
    %v1447 = vcvt.f32.s32 %v1446
    %v1448 = vcvt.f32.s32 %v1442
    %v1449 = vshll.u32 %v1448, 16
    %v1450 = vadd.s32 %v1449, %v1447
    %v1451 = vsel %vm238, %v1401, 2147483647
    %v1452 = vand.u32 %v1451, 65535
    %v1453 = vshra.s32 %v1451, 16
    %v1454 = vcvt.s32.f32 %v1452
    %v1455 = vcvt.s32.f32 %v1453
    %1456 = vmin.xlane.f32.xlu0 %v1455
    %v1457 = vpop.xlane.xlu0 %1456
    %vm1458 = vcmp.eq.f32.partialorder %v1455, %v1457
    %v1459 = vsel %vm1458, %v1454, inf
    %1460 = vmin.xlane.f32.xlu0 %v1459
    %v1461 = vpop.xlane.xlu0 %1460
    %v1462 = vcvt.f32.s32 %v1461
    %v1463 = vcvt.f32.s32 %v1457
    %v1464 = vshll.u32 %v1463, 16
    %v1465 = vadd.s32 %v1464, %v1462
    %v1466 = vsel %vm238, %v1402, 2147483647
    %v1467 = vand.u32 %v1466, 65535
    %v1468 = vshra.s32 %v1466, 16
    %v1469 = vcvt.s32.f32 %v1467
    %v1470 = vcvt.s32.f32 %v1468
    %1471 = vmin.xlane.f32.xlu0 %v1470
    %v1472 = vpop.xlane.xlu0 %1471
    %vm1473 = vcmp.eq.f32.partialorder %v1470, %v1472
    %v1474 = vsel %vm1473, %v1469, inf
    %1475 = vmin.xlane.f32.xlu0 %v1474
    %v1476 = vpop.xlane.xlu0 %1475
    %v1477 = vcvt.f32.s32 %v1476
    %v1478 = vcvt.f32.s32 %v1472
    %v1479 = vshll.u32 %v1478, 16
    %v1480 = vadd.s32 %v1479, %v1477
    %v1481 = vsel %vm238, %v1403, 2147483647
    %v1482 = vand.u32 %v1481, 65535
    %v1483 = vshra.s32 %v1481, 16
    %v1484 = vcvt.s32.f32 %v1482
    %v1485 = vcvt.s32.f32 %v1483
    %1486 = vmin.xlane.f32.xlu0 %v1485
    %v1487 = vpop.xlane.xlu0 %1486
    %vm1488 = vcmp.eq.f32.partialorder %v1485, %v1487
    %v1489 = vsel %vm1488, %v1484, inf
    %1490 = vmin.xlane.f32.xlu0 %v1489
    %v1491 = vpop.xlane.xlu0 %1490
    %v1492 = vcvt.f32.s32 %v1491
    %v1493 = vcvt.f32.s32 %v1487
    %v1494 = vshll.u32 %v1493, 16
    %v1495 = vadd.s32 %v1494, %v1492
    %v1496 = vsel %vm238, %v1404, 2147483647
    %v1497 = vand.u32 %v1496, 65535
    %v1498 = vshra.s32 %v1496, 16
    %v1499 = vcvt.s32.f32 %v1497
    %v1500 = vcvt.s32.f32 %v1498
    %1501 = vmin.xlane.f32.xlu0 %v1500
    %v1502 = vpop.xlane.xlu0 %1501
    %vm1503 = vcmp.eq.f32.partialorder %v1500, %v1502
    %v1504 = vsel %vm1503, %v1499, inf
    %1505 = vmin.xlane.f32.xlu0 %v1504
    %v1506 = vpop.xlane.xlu0 %1505
    %v1507 = vcvt.f32.s32 %v1506
    %v1508 = vcvt.f32.s32 %v1502
    %v1509 = vshll.u32 %v1508, 16
    %v1510 = vadd.s32 %v1509, %v1507
    %v1511 = vsel %vm238, %v1405, 2147483647
    %v1512 = vand.u32 %v1511, 65535
    %v1513 = vshra.s32 %v1511, 16
    %v1514 = vcvt.s32.f32 %v1512
    %v1515 = vcvt.s32.f32 %v1513
    %1516 = vmin.xlane.f32.xlu0 %v1515
    %v1517 = vpop.xlane.xlu0 %1516
    %vm1518 = vcmp.eq.f32.partialorder %v1515, %v1517
    %v1519 = vsel %vm1518, %v1514, inf
    %1520 = vmin.xlane.f32.xlu0 %v1519
    %v1521 = vpop.xlane.xlu0 %1520
    %v1522 = vcvt.f32.s32 %v1521
    %v1523 = vcvt.f32.s32 %v1517
    %v1524 = vshll.u32 %v1523, 16
    %v1525 = vadd.s32 %v1524, %v1522
    %vm1526 = vcmp.lt.s32.totalorder %v1420, %v1435
    %v1527 = vsel %vm1526, %v1420, %v1435
    %v1528 = vrot.slane %v1527, 4
    %vm1529 = vcmp.lt.s32.totalorder %v1527, %v1528
    %v1530 = vsel %vm1529, %v1527, %v1528
    %v1531 = vrot.slane %v1530, 2
    %vm1532 = vcmp.lt.s32.totalorder %v1530, %v1531
    %v1533 = vsel %vm1532, %v1530, %v1531
    %v1534 = vrot.slane %v1533, 1
    %vm1535 = vcmp.lt.s32.totalorder %v1533, %v1534
    %v1536 = vsel %vm1535, %v1533, %v1534
    %vm1537 = vcmp.lt.s32.totalorder %v1450, %v1465
    %v1538 = vsel %vm1537, %v1450, %v1465
    %v1539 = vrot.slane %v1538, 4
    %vm1540 = vcmp.lt.s32.totalorder %v1538, %v1539
    %v1541 = vsel %vm1540, %v1538, %v1539
    %v1542 = vrot.slane %v1541, 2
    %vm1543 = vcmp.lt.s32.totalorder %v1541, %v1542
    %v1544 = vsel %vm1543, %v1541, %v1542
    %v1545 = vrot.slane %v1544, 1
    %vm1546 = vcmp.lt.s32.totalorder %v1544, %v1545
    %v1547 = vsel %vm1546, %v1544, %v1545
    %vm1548 = vcmp.lt.s32.totalorder %v1480, %v1495
    %v1549 = vsel %vm1548, %v1480, %v1495
    %v1550 = vrot.slane %v1549, 4
    %vm1551 = vcmp.lt.s32.totalorder %v1549, %v1550
    %v1552 = vsel %vm1551, %v1549, %v1550
    %v1553 = vrot.slane %v1552, 2
    %vm1554 = vcmp.lt.s32.totalorder %v1552, %v1553
    %v1555 = vsel %vm1554, %v1552, %v1553
    %v1556 = vrot.slane %v1555, 1
    %vm1557 = vcmp.lt.s32.totalorder %v1555, %v1556
    %v1558 = vsel %vm1557, %v1555, %v1556
    %vm1559 = vcmp.lt.s32.totalorder %v1510, %v1525
    %v1560 = vsel %vm1559, %v1510, %v1525
    %v1561 = vrot.slane %v1560, 4
    %vm1562 = vcmp.lt.s32.totalorder %v1560, %v1561
    %v1563 = vsel %vm1562, %v1560, %v1561
    %v1564 = vrot.slane %v1563, 2
    %vm1565 = vcmp.lt.s32.totalorder %v1563, %v1564
    %v1566 = vsel %vm1565, %v1563, %v1564
    %v1567 = vrot.slane %v1566, 1
    %vm1568 = vcmp.lt.s32.totalorder %v1566, %v1567
    %v1569 = vsel %vm1568, %v1566, %v1567
    %vm1570 = vcmp.eq.s32.totalorder %v460, %v1536
    %vm1571 = vcmp.eq.s32.totalorder %v461, %v1536
    %vm1572 = vcmp.eq.s32.totalorder %v460, %v1547
    %vm1573 = vcmp.eq.s32.totalorder %v461, %v1547
    %vm1574 = vcmp.eq.s32.totalorder %v460, %v1558
    %vm1575 = vcmp.eq.s32.totalorder %v461, %v1558
    %vm1576 = vcmp.eq.s32.totalorder %v460, %v1569
    %vm1577 = vcmp.eq.s32.totalorder %v461, %v1569
    %v1578 = vsel %vm1570, 1e+30, %v950
    %v1579 = vsel %vm1571, 1e+30, %v951
    %v1580 = vsel %vm1572, 1e+30, %v952
    %v1581 = vsel %vm1573, 1e+30, %v953
    %v1582 = vsel %vm1574, 1e+30, %v954
    %v1583 = vsel %vm1575, 1e+30, %v955
    %v1584 = vsel %vm1576, 1e+30, %v956
    %v1585 = vsel %vm1577, 1e+30, %v957
    %v1586 = vsub.f32 0.0, %v1120
    %v1587 = vsub.f32 0.0, %v1127
    %v1588 = vsub.f32 0.0, %v1134
    %v1589 = vsub.f32 0.0, %v1141
    %v1590 = vmax.f32 %v1586, 0.0
    %v1591 = vmax.f32 %v1587, 0.0
    %v1592 = vmax.f32 %v1588, 0.0
    %v1593 = vmax.f32 %v1589, 0.0
    %v1594 = vand.u32 2147483647, %v1586
    %v1595 = vand.u32 2147483647, %v1587
    %v1596 = vand.u32 2147483647, %v1588
    %v1597 = vand.u32 2147483647, %v1589
    %v1598 = vsub.f32 0.0, %v1594
    %v1599 = vsub.f32 0.0, %v1595
    %v1600 = vsub.f32 0.0, %v1596
    %v1601 = vsub.f32 0.0, %v1597
    %v1602 = vmul.f32 %v1598, 1.442695
    %v1603 = vpow.pop %v1602
    %v1604 = vmul.f32 %v1599, 1.442695
    %v1605 = vpow.pop %v1604
    %v1606 = vmul.f32 %v1600, 1.442695
    %v1607 = vpow.pop %v1606
    %v1608 = vmul.f32 %v1601, 1.442695
    %v1609 = vpow.pop %v1608
    %v1610 = vadd.f32 %v1603, 1.0
    %v1611 = vlog2.pop %v1610
    %v1612 = vmul.f32 %v1611, 0.6931472
    %v1613 = vmul.f32 -0.5, %v1603
    %v1614 = vadd.f32 %v1613, 1.0
    %v1615 = vmul.f32 %v1614, %v1603
    %v1616 = vand.u32 2147483647, %v1603
    %vm1617 = vcmp.lt.f32.partialorder %v1616, 0.0004427343
    %v1618 = vsel %vm1617, %v1615, %v1612
    %v1619 = vadd.f32 %v1605, 1.0
    %v1620 = vlog2.pop %v1619
    %v1621 = vmul.f32 %v1620, 0.6931472
    %v1622 = vmul.f32 -0.5, %v1605
    %v1623 = vadd.f32 %v1622, 1.0
    %v1624 = vmul.f32 %v1623, %v1605
    %v1625 = vand.u32 2147483647, %v1605
    %vm1626 = vcmp.lt.f32.partialorder %v1625, 0.0004427343
    %v1627 = vsel %vm1626, %v1624, %v1621
    %v1628 = vadd.f32 %v1607, 1.0
    %v1629 = vlog2.pop %v1628
    %v1630 = vmul.f32 %v1629, 0.6931472
    %v1631 = vmul.f32 -0.5, %v1607
    %v1632 = vadd.f32 %v1631, 1.0
    %v1633 = vmul.f32 %v1632, %v1607
    %v1634 = vand.u32 2147483647, %v1607
    %vm1635 = vcmp.lt.f32.partialorder %v1634, 0.0004427343
    %v1636 = vsel %vm1635, %v1633, %v1630
    %v1637 = vadd.f32 %v1609, 1.0
    %v1638 = vlog2.pop %v1637
    %v1639 = vmul.f32 %v1638, 0.6931472
    %v1640 = vmul.f32 -0.5, %v1609
    %v1641 = vadd.f32 %v1640, 1.0
    %v1642 = vmul.f32 %v1641, %v1609
    %v1643 = vand.u32 2147483647, %v1609
    %vm1644 = vcmp.lt.f32.partialorder %v1643, 0.0004427343
    %v1645 = vsel %vm1644, %v1642, %v1639
    %v1646 = vadd.f32 %v1590, %v1618
    %v1647 = vadd.f32 %v1591, %v1627
    %v1648 = vadd.f32 %v1592, %v1636
    %v1649 = vadd.f32 %v1593, %v1645
    %v1650 = vadd.f32 %v1086, %v1646
    %v1651 = vadd.f32 %v1087, %v1647
    %v1652 = vadd.f32 %v1088, %v1648
    %v1653 = vadd.f32 %v1089, %v1649
    %v1654 = vmax.f32 %v1368, 0.0
    %v1655 = vmax.f32 %v1375, 0.0
    %v1656 = vmax.f32 %v1382, 0.0
    %v1657 = vmax.f32 %v1389, 0.0
    %v1658 = vand.u32 2147483647, %v1368
    %v1659 = vand.u32 2147483647, %v1375
    %v1660 = vand.u32 2147483647, %v1382
    %v1661 = vand.u32 2147483647, %v1389
    %v1662 = vsub.f32 0.0, %v1658
    %v1663 = vsub.f32 0.0, %v1659
    %v1664 = vsub.f32 0.0, %v1660
    %v1665 = vsub.f32 0.0, %v1661
    %v1666 = vmul.f32 %v1662, 1.442695
    %v1667 = vpow.pop %v1666
    %v1668 = vmul.f32 %v1663, 1.442695
    %v1669 = vpow.pop %v1668
    %v1670 = vmul.f32 %v1664, 1.442695
    %v1671 = vpow.pop %v1670
    %v1672 = vmul.f32 %v1665, 1.442695
    %v1673 = vpow.pop %v1672
    %v1674 = vadd.f32 %v1667, 1.0
    %v1675 = vlog2.pop %v1674
    %v1676 = vmul.f32 %v1675, 0.6931472
    %v1677 = vmul.f32 -0.5, %v1667
    %v1678 = vadd.f32 %v1677, 1.0
    %v1679 = vmul.f32 %v1678, %v1667
    %v1680 = vand.u32 2147483647, %v1667
    %vm1681 = vcmp.lt.f32.partialorder %v1680, 0.0004427343
    %v1682 = vsel %vm1681, %v1679, %v1676
    %v1683 = vadd.f32 %v1669, 1.0
    %v1684 = vlog2.pop %v1683
    %v1685 = vmul.f32 %v1684, 0.6931472
    %v1686 = vmul.f32 -0.5, %v1669
    %v1687 = vadd.f32 %v1686, 1.0
    %v1688 = vmul.f32 %v1687, %v1669
    %v1689 = vand.u32 2147483647, %v1669
    %vm1690 = vcmp.lt.f32.partialorder %v1689, 0.0004427343
    %v1691 = vsel %vm1690, %v1688, %v1685
    %v1692 = vadd.f32 %v1671, 1.0
    %v1693 = vlog2.pop %v1692
    %v1694 = vmul.f32 %v1693, 0.6931472
    %v1695 = vmul.f32 -0.5, %v1671
    %v1696 = vadd.f32 %v1695, 1.0
    %v1697 = vmul.f32 %v1696, %v1671
    %v1698 = vand.u32 2147483647, %v1671
    %vm1699 = vcmp.lt.f32.partialorder %v1698, 0.0004427343
    %v1700 = vsel %vm1699, %v1697, %v1694
    %v1701 = vadd.f32 %v1673, 1.0
    %v1702 = vlog2.pop %v1701
    %v1703 = vmul.f32 %v1702, 0.6931472
    %v1704 = vmul.f32 -0.5, %v1673
    %v1705 = vadd.f32 %v1704, 1.0
    %v1706 = vmul.f32 %v1705, %v1673
    %v1707 = vand.u32 2147483647, %v1673
    %vm1708 = vcmp.lt.f32.partialorder %v1707, 0.0004427343
    %v1709 = vsel %vm1708, %v1706, %v1703
    %v1710 = vadd.f32 %v1654, %v1682
    %v1711 = vadd.f32 %v1655, %v1691
    %v1712 = vadd.f32 %v1656, %v1700
    %v1713 = vadd.f32 %v1657, %v1709
    %v1714 = vadd.f32 %v1650, %v1710
    %v1715 = vadd.f32 %v1651, %v1711
    %v1716 = vadd.f32 %v1652, %v1712
    %v1717 = vadd.f32 %v1653, %v1713
    %v1718 = vsel %vm238, %v1330, -inf
    %1719 = vmax.xlane.f32.xlu0 %v1718
    %v1720 = vpop.xlane.xlu0 %1719
    %v1721 = vsel %vm238, %v1331, -inf
    %1722 = vmax.xlane.f32.xlu0 %v1721
    %v1723 = vpop.xlane.xlu0 %1722
    %v1724 = vsel %vm238, %v1332, -inf
    %1725 = vmax.xlane.f32.xlu0 %v1724
    %v1726 = vpop.xlane.xlu0 %1725
    %v1727 = vsel %vm238, %v1333, -inf
    %1728 = vmax.xlane.f32.xlu0 %v1727
    %v1729 = vpop.xlane.xlu0 %1728
    %v1730 = vsel %vm238, %v1334, -inf
    %1731 = vmax.xlane.f32.xlu0 %v1730
    %v1732 = vpop.xlane.xlu0 %1731
    %v1733 = vsel %vm238, %v1335, -inf
    %1734 = vmax.xlane.f32.xlu0 %v1733
    %v1735 = vpop.xlane.xlu0 %1734
    %v1736 = vsel %vm238, %v1336, -inf
    %1737 = vmax.xlane.f32.xlu0 %v1736
    %v1738 = vpop.xlane.xlu0 %1737
    %v1739 = vsel %vm238, %v1337, -inf
    %1740 = vmax.xlane.f32.xlu0 %v1739
    %v1741 = vpop.xlane.xlu0 %1740
    %v1742 = vmax.f32 %v1720, %v1723
    %v1743 = vrot.slane %v1742, 4
    %v1744 = vmax.f32 %v1742, %v1743
    %v1745 = vrot.slane %v1744, 2
    %v1746 = vmax.f32 %v1744, %v1745
    %v1747 = vrot.slane %v1746, 1
    %v1748 = vmax.f32 %v1746, %v1747
    %v1749 = vmax.f32 %v1726, %v1729
    %v1750 = vrot.slane %v1749, 4
    %v1751 = vmax.f32 %v1749, %v1750
    %v1752 = vrot.slane %v1751, 2
    %v1753 = vmax.f32 %v1751, %v1752
    %v1754 = vrot.slane %v1753, 1
    %v1755 = vmax.f32 %v1753, %v1754
    %v1756 = vmax.f32 %v1732, %v1735
    %v1757 = vrot.slane %v1756, 4
    %v1758 = vmax.f32 %v1756, %v1757
    %v1759 = vrot.slane %v1758, 2
    %v1760 = vmax.f32 %v1758, %v1759
    %v1761 = vrot.slane %v1760, 1
    %v1762 = vmax.f32 %v1760, %v1761
    %v1763 = vmax.f32 %v1738, %v1741
    %v1764 = vrot.slane %v1763, 4
    %v1765 = vmax.f32 %v1763, %v1764
    %v1766 = vrot.slane %v1765, 2
    %v1767 = vmax.f32 %v1765, %v1766
    %v1768 = vrot.slane %v1767, 1
    %v1769 = vmax.f32 %v1767, %v1768
    %vm1770 = vcmp.eq.f32.partialorder %v1330, %v1748
    %vm1771 = vcmp.eq.f32.partialorder %v1331, %v1748
    %vm1772 = vcmp.eq.f32.partialorder %v1332, %v1755
    %vm1773 = vcmp.eq.f32.partialorder %v1333, %v1755
    %vm1774 = vcmp.eq.f32.partialorder %v1334, %v1762
    %vm1775 = vcmp.eq.f32.partialorder %v1335, %v1762
    %vm1776 = vcmp.eq.f32.partialorder %v1336, %v1769
    %vm1777 = vcmp.eq.f32.partialorder %v1337, %v1769
    %v1778 = vsel %vm1770, %v460, 1073741824
    %v1779 = vsel %vm1771, %v461, 1073741824
    %v1780 = vsel %vm1772, %v460, 1073741824
    %v1781 = vsel %vm1773, %v461, 1073741824
    %v1782 = vsel %vm1774, %v460, 1073741824
    %v1783 = vsel %vm1775, %v461, 1073741824
    %v1784 = vsel %vm1776, %v460, 1073741824
    %v1785 = vsel %vm1777, %v461, 1073741824
    %v1786 = vsel %vm238, %v1778, 2147483647
    %v1787 = vand.u32 %v1786, 65535
    %v1788 = vshra.s32 %v1786, 16
    %v1789 = vcvt.s32.f32 %v1787
    %v1790 = vcvt.s32.f32 %v1788
    %1791 = vmin.xlane.f32.xlu0 %v1790
    %v1792 = vpop.xlane.xlu0 %1791
    %vm1793 = vcmp.eq.f32.partialorder %v1790, %v1792
    %v1794 = vsel %vm1793, %v1789, inf
    %1795 = vmin.xlane.f32.xlu0 %v1794
    %v1796 = vpop.xlane.xlu0 %1795
    %v1797 = vcvt.f32.s32 %v1796
    %v1798 = vcvt.f32.s32 %v1792
    %v1799 = vshll.u32 %v1798, 16
    %v1800 = vadd.s32 %v1799, %v1797
    %v1801 = vsel %vm238, %v1779, 2147483647
    %v1802 = vand.u32 %v1801, 65535
    %v1803 = vshra.s32 %v1801, 16
    %v1804 = vcvt.s32.f32 %v1802
    %v1805 = vcvt.s32.f32 %v1803
    %1806 = vmin.xlane.f32.xlu0 %v1805
    %v1807 = vpop.xlane.xlu0 %1806
    %vm1808 = vcmp.eq.f32.partialorder %v1805, %v1807
    %v1809 = vsel %vm1808, %v1804, inf
    %1810 = vmin.xlane.f32.xlu0 %v1809
    %v1811 = vpop.xlane.xlu0 %1810
    %v1812 = vcvt.f32.s32 %v1811
    %v1813 = vcvt.f32.s32 %v1807
    %v1814 = vshll.u32 %v1813, 16
    %v1815 = vadd.s32 %v1814, %v1812
    %v1816 = vsel %vm238, %v1780, 2147483647
    %v1817 = vand.u32 %v1816, 65535
    %v1818 = vshra.s32 %v1816, 16
    %v1819 = vcvt.s32.f32 %v1817
    %v1820 = vcvt.s32.f32 %v1818
    %1821 = vmin.xlane.f32.xlu0 %v1820
    %v1822 = vpop.xlane.xlu0 %1821
    %vm1823 = vcmp.eq.f32.partialorder %v1820, %v1822
    %v1824 = vsel %vm1823, %v1819, inf
    %1825 = vmin.xlane.f32.xlu0 %v1824
    %v1826 = vpop.xlane.xlu0 %1825
    %v1827 = vcvt.f32.s32 %v1826
    %v1828 = vcvt.f32.s32 %v1822
    %v1829 = vshll.u32 %v1828, 16
    %v1830 = vadd.s32 %v1829, %v1827
    %v1831 = vsel %vm238, %v1781, 2147483647
    %v1832 = vand.u32 %v1831, 65535
    %v1833 = vshra.s32 %v1831, 16
    %v1834 = vcvt.s32.f32 %v1832
    %v1835 = vcvt.s32.f32 %v1833
    %1836 = vmin.xlane.f32.xlu0 %v1835
    %v1837 = vpop.xlane.xlu0 %1836
    %vm1838 = vcmp.eq.f32.partialorder %v1835, %v1837
    %v1839 = vsel %vm1838, %v1834, inf
    %1840 = vmin.xlane.f32.xlu0 %v1839
    %v1841 = vpop.xlane.xlu0 %1840
    %v1842 = vcvt.f32.s32 %v1841
    %v1843 = vcvt.f32.s32 %v1837
    %v1844 = vshll.u32 %v1843, 16
    %v1845 = vadd.s32 %v1844, %v1842
    %v1846 = vsel %vm238, %v1782, 2147483647
    %v1847 = vand.u32 %v1846, 65535
    %v1848 = vshra.s32 %v1846, 16
    %v1849 = vcvt.s32.f32 %v1847
    %v1850 = vcvt.s32.f32 %v1848
    %1851 = vmin.xlane.f32.xlu0 %v1850
    %v1852 = vpop.xlane.xlu0 %1851
    %vm1853 = vcmp.eq.f32.partialorder %v1850, %v1852
    %v1854 = vsel %vm1853, %v1849, inf
    %1855 = vmin.xlane.f32.xlu0 %v1854
    %v1856 = vpop.xlane.xlu0 %1855
    %v1857 = vcvt.f32.s32 %v1856
    %v1858 = vcvt.f32.s32 %v1852
    %v1859 = vshll.u32 %v1858, 16
    %v1860 = vadd.s32 %v1859, %v1857
    %v1861 = vsel %vm238, %v1783, 2147483647
    %v1862 = vand.u32 %v1861, 65535
    %v1863 = vshra.s32 %v1861, 16
    %v1864 = vcvt.s32.f32 %v1862
    %v1865 = vcvt.s32.f32 %v1863
    %1866 = vmin.xlane.f32.xlu0 %v1865
    %v1867 = vpop.xlane.xlu0 %1866
    %vm1868 = vcmp.eq.f32.partialorder %v1865, %v1867
    %v1869 = vsel %vm1868, %v1864, inf
    %1870 = vmin.xlane.f32.xlu0 %v1869
    %v1871 = vpop.xlane.xlu0 %1870
    %v1872 = vcvt.f32.s32 %v1871
    %v1873 = vcvt.f32.s32 %v1867
    %v1874 = vshll.u32 %v1873, 16
    %v1875 = vadd.s32 %v1874, %v1872
    %v1876 = vsel %vm238, %v1784, 2147483647
    %v1877 = vand.u32 %v1876, 65535
    %v1878 = vshra.s32 %v1876, 16
    %v1879 = vcvt.s32.f32 %v1877
    %v1880 = vcvt.s32.f32 %v1878
    %1881 = vmin.xlane.f32.xlu0 %v1880
    %v1882 = vpop.xlane.xlu0 %1881
    %vm1883 = vcmp.eq.f32.partialorder %v1880, %v1882
    %v1884 = vsel %vm1883, %v1879, inf
    %1885 = vmin.xlane.f32.xlu0 %v1884
    %v1886 = vpop.xlane.xlu0 %1885
    %v1887 = vcvt.f32.s32 %v1886
    %v1888 = vcvt.f32.s32 %v1882
    %v1889 = vshll.u32 %v1888, 16
    %v1890 = vadd.s32 %v1889, %v1887
    %v1891 = vsel %vm238, %v1785, 2147483647
    %v1892 = vand.u32 %v1891, 65535
    %v1893 = vshra.s32 %v1891, 16
    %v1894 = vcvt.s32.f32 %v1892
    %v1895 = vcvt.s32.f32 %v1893
    %1896 = vmin.xlane.f32.xlu0 %v1895
    %v1897 = vpop.xlane.xlu0 %1896
    %vm1898 = vcmp.eq.f32.partialorder %v1895, %v1897
    %v1899 = vsel %vm1898, %v1894, inf
    %1900 = vmin.xlane.f32.xlu0 %v1899
    %v1901 = vpop.xlane.xlu0 %1900
    %v1902 = vcvt.f32.s32 %v1901
    %v1903 = vcvt.f32.s32 %v1897
    %v1904 = vshll.u32 %v1903, 16
    %v1905 = vadd.s32 %v1904, %v1902
    %vm1906 = vcmp.lt.s32.totalorder %v1800, %v1815
    %v1907 = vsel %vm1906, %v1800, %v1815
    %v1908 = vrot.slane %v1907, 4
    %vm1909 = vcmp.lt.s32.totalorder %v1907, %v1908
    %v1910 = vsel %vm1909, %v1907, %v1908
    %v1911 = vrot.slane %v1910, 2
    %vm1912 = vcmp.lt.s32.totalorder %v1910, %v1911
    %v1913 = vsel %vm1912, %v1910, %v1911
    %v1914 = vrot.slane %v1913, 1
    %vm1915 = vcmp.lt.s32.totalorder %v1913, %v1914
    %v1916 = vsel %vm1915, %v1913, %v1914
    %vm1917 = vcmp.lt.s32.totalorder %v1830, %v1845
    %v1918 = vsel %vm1917, %v1830, %v1845
    %v1919 = vrot.slane %v1918, 4
    %vm1920 = vcmp.lt.s32.totalorder %v1918, %v1919
    %v1921 = vsel %vm1920, %v1918, %v1919
    %v1922 = vrot.slane %v1921, 2
    %vm1923 = vcmp.lt.s32.totalorder %v1921, %v1922
    %v1924 = vsel %vm1923, %v1921, %v1922
    %v1925 = vrot.slane %v1924, 1
    %vm1926 = vcmp.lt.s32.totalorder %v1924, %v1925
    %v1927 = vsel %vm1926, %v1924, %v1925
    %vm1928 = vcmp.lt.s32.totalorder %v1860, %v1875
    %v1929 = vsel %vm1928, %v1860, %v1875
    %v1930 = vrot.slane %v1929, 4
    %vm1931 = vcmp.lt.s32.totalorder %v1929, %v1930
    %v1932 = vsel %vm1931, %v1929, %v1930
    %v1933 = vrot.slane %v1932, 2
    %vm1934 = vcmp.lt.s32.totalorder %v1932, %v1933
    %v1935 = vsel %vm1934, %v1932, %v1933
    %v1936 = vrot.slane %v1935, 1
    %vm1937 = vcmp.lt.s32.totalorder %v1935, %v1936
    %v1938 = vsel %vm1937, %v1935, %v1936
    %vm1939 = vcmp.lt.s32.totalorder %v1890, %v1905
    %v1940 = vsel %vm1939, %v1890, %v1905
    %v1941 = vrot.slane %v1940, 4
    %vm1942 = vcmp.lt.s32.totalorder %v1940, %v1941
    %v1943 = vsel %vm1942, %v1940, %v1941
    %v1944 = vrot.slane %v1943, 2
    %vm1945 = vcmp.lt.s32.totalorder %v1943, %v1944
    %v1946 = vsel %vm1945, %v1943, %v1944
    %v1947 = vrot.slane %v1946, 1
    %vm1948 = vcmp.lt.s32.totalorder %v1946, %v1947
    %v1949 = vsel %vm1948, %v1946, %v1947
    %vm1950 = vcmp.eq.s32.totalorder %v460, %v1916
    %vm1951 = vcmp.eq.s32.totalorder %v461, %v1916
    %vm1952 = vcmp.eq.s32.totalorder %v460, %v1927
    %vm1953 = vcmp.eq.s32.totalorder %v461, %v1927
    %vm1954 = vcmp.eq.s32.totalorder %v460, %v1938
    %vm1955 = vcmp.eq.s32.totalorder %v461, %v1938
    %vm1956 = vcmp.eq.s32.totalorder %v460, %v1949
    %vm1957 = vcmp.eq.s32.totalorder %v461, %v1949
    %v1958 = vsel %vm1950, -1e+30, %v1330
    %v1959 = vsel %vm1951, -1e+30, %v1331
    %v1960 = vsel %vm1952, -1e+30, %v1332
    %v1961 = vsel %vm1953, -1e+30, %v1333
    %v1962 = vsel %vm1954, -1e+30, %v1334
    %v1963 = vsel %vm1955, -1e+30, %v1335
    %v1964 = vsel %vm1956, -1e+30, %v1336
    %v1965 = vsel %vm1957, -1e+30, %v1337
    %v1966 = vsel %vm238, %v1578, inf
    %1967 = vmin.xlane.f32.xlu0 %v1966
    %v1968 = vpop.xlane.xlu0 %1967
    %v1969 = vsel %vm238, %v1579, inf
    %1970 = vmin.xlane.f32.xlu0 %v1969
    %v1971 = vpop.xlane.xlu0 %1970
    %v1972 = vsel %vm238, %v1580, inf
    %1973 = vmin.xlane.f32.xlu0 %v1972
    %v1974 = vpop.xlane.xlu0 %1973
    %v1975 = vsel %vm238, %v1581, inf
    %1976 = vmin.xlane.f32.xlu0 %v1975
    %v1977 = vpop.xlane.xlu0 %1976
    %v1978 = vsel %vm238, %v1582, inf
    %1979 = vmin.xlane.f32.xlu0 %v1978
    %v1980 = vpop.xlane.xlu0 %1979
    %v1981 = vsel %vm238, %v1583, inf
    %1982 = vmin.xlane.f32.xlu0 %v1981
    %v1983 = vpop.xlane.xlu0 %1982
    %v1984 = vsel %vm238, %v1584, inf
    %1985 = vmin.xlane.f32.xlu0 %v1984
    %v1986 = vpop.xlane.xlu0 %1985
    %v1987 = vsel %vm238, %v1585, inf
    %1988 = vmin.xlane.f32.xlu0 %v1987
    %v1989 = vpop.xlane.xlu0 %1988
    %v1990 = vmin.f32 %v1968, %v1971
    %v1991 = vrot.slane %v1990, 4
    %v1992 = vmin.f32 %v1990, %v1991
    %v1993 = vrot.slane %v1992, 2
    %v1994 = vmin.f32 %v1992, %v1993
    %v1995 = vrot.slane %v1994, 1
    %v1996 = vmin.f32 %v1994, %v1995
    %v1997 = vmin.f32 %v1974, %v1977
    %v1998 = vrot.slane %v1997, 4
    %v1999 = vmin.f32 %v1997, %v1998
    %v2000 = vrot.slane %v1999, 2
    %v2001 = vmin.f32 %v1999, %v2000
    %v2002 = vrot.slane %v2001, 1
    %v2003 = vmin.f32 %v2001, %v2002
    %v2004 = vmin.f32 %v1980, %v1983
    %v2005 = vrot.slane %v2004, 4
    %v2006 = vmin.f32 %v2004, %v2005
    %v2007 = vrot.slane %v2006, 2
    %v2008 = vmin.f32 %v2006, %v2007
    %v2009 = vrot.slane %v2008, 1
    %v2010 = vmin.f32 %v2008, %v2009
    %v2011 = vmin.f32 %v1986, %v1989
    %v2012 = vrot.slane %v2011, 4
    %v2013 = vmin.f32 %v2011, %v2012
    %v2014 = vrot.slane %v2013, 2
    %v2015 = vmin.f32 %v2013, %v2014
    %v2016 = vrot.slane %v2015, 1
    %v2017 = vmin.f32 %v2015, %v2016
    %vm2018 = vcmp.eq.f32.partialorder %v1578, %v1996
    %vm2019 = vcmp.eq.f32.partialorder %v1579, %v1996
    %vm2020 = vcmp.eq.f32.partialorder %v1580, %v2003
    %vm2021 = vcmp.eq.f32.partialorder %v1581, %v2003
    %vm2022 = vcmp.eq.f32.partialorder %v1582, %v2010
    %vm2023 = vcmp.eq.f32.partialorder %v1583, %v2010
    %vm2024 = vcmp.eq.f32.partialorder %v1584, %v2017
    %vm2025 = vcmp.eq.f32.partialorder %v1585, %v2017
    %v2026 = vsel %vm2018, %v460, 1073741824
    %v2027 = vsel %vm2019, %v461, 1073741824
    %v2028 = vsel %vm2020, %v460, 1073741824
    %v2029 = vsel %vm2021, %v461, 1073741824
    %v2030 = vsel %vm2022, %v460, 1073741824
    %v2031 = vsel %vm2023, %v461, 1073741824
    %v2032 = vsel %vm2024, %v460, 1073741824
    %v2033 = vsel %vm2025, %v461, 1073741824
    %v2034 = vsel %vm238, %v2026, 2147483647
    %v2035 = vand.u32 %v2034, 65535
    %v2036 = vshra.s32 %v2034, 16
    %v2037 = vcvt.s32.f32 %v2035
    %v2038 = vcvt.s32.f32 %v2036
    %2039 = vmin.xlane.f32.xlu0 %v2038
    %v2040 = vpop.xlane.xlu0 %2039
    %vm2041 = vcmp.eq.f32.partialorder %v2038, %v2040
    %v2042 = vsel %vm2041, %v2037, inf
    %2043 = vmin.xlane.f32.xlu0 %v2042
    %v2044 = vpop.xlane.xlu0 %2043
    %v2045 = vcvt.f32.s32 %v2044
    %v2046 = vcvt.f32.s32 %v2040
    %v2047 = vshll.u32 %v2046, 16
    %v2048 = vadd.s32 %v2047, %v2045
    %v2049 = vsel %vm238, %v2027, 2147483647
    %v2050 = vand.u32 %v2049, 65535
    %v2051 = vshra.s32 %v2049, 16
    %v2052 = vcvt.s32.f32 %v2050
    %v2053 = vcvt.s32.f32 %v2051
    %2054 = vmin.xlane.f32.xlu0 %v2053
    %v2055 = vpop.xlane.xlu0 %2054
    %vm2056 = vcmp.eq.f32.partialorder %v2053, %v2055
    %v2057 = vsel %vm2056, %v2052, inf
    %2058 = vmin.xlane.f32.xlu0 %v2057
    %v2059 = vpop.xlane.xlu0 %2058
    %v2060 = vcvt.f32.s32 %v2059
    %v2061 = vcvt.f32.s32 %v2055
    %v2062 = vshll.u32 %v2061, 16
    %v2063 = vadd.s32 %v2062, %v2060
    %v2064 = vsel %vm238, %v2028, 2147483647
    %v2065 = vand.u32 %v2064, 65535
    %v2066 = vshra.s32 %v2064, 16
    %v2067 = vcvt.s32.f32 %v2065
    %v2068 = vcvt.s32.f32 %v2066
    %2069 = vmin.xlane.f32.xlu0 %v2068
    %v2070 = vpop.xlane.xlu0 %2069
    %vm2071 = vcmp.eq.f32.partialorder %v2068, %v2070
    %v2072 = vsel %vm2071, %v2067, inf
    %2073 = vmin.xlane.f32.xlu0 %v2072
    %v2074 = vpop.xlane.xlu0 %2073
    %v2075 = vcvt.f32.s32 %v2074
    %v2076 = vcvt.f32.s32 %v2070
    %v2077 = vshll.u32 %v2076, 16
    %v2078 = vadd.s32 %v2077, %v2075
    %v2079 = vsel %vm238, %v2029, 2147483647
    %v2080 = vand.u32 %v2079, 65535
    %v2081 = vshra.s32 %v2079, 16
    %v2082 = vcvt.s32.f32 %v2080
    %v2083 = vcvt.s32.f32 %v2081
    %2084 = vmin.xlane.f32.xlu0 %v2083
    %v2085 = vpop.xlane.xlu0 %2084
    %vm2086 = vcmp.eq.f32.partialorder %v2083, %v2085
    %v2087 = vsel %vm2086, %v2082, inf
    %2088 = vmin.xlane.f32.xlu0 %v2087
    %v2089 = vpop.xlane.xlu0 %2088
    %v2090 = vcvt.f32.s32 %v2089
    %v2091 = vcvt.f32.s32 %v2085
    %v2092 = vshll.u32 %v2091, 16
    %v2093 = vadd.s32 %v2092, %v2090
    %v2094 = vsel %vm238, %v2030, 2147483647
    %v2095 = vand.u32 %v2094, 65535
    %v2096 = vshra.s32 %v2094, 16
    %v2097 = vcvt.s32.f32 %v2095
    %v2098 = vcvt.s32.f32 %v2096
    %2099 = vmin.xlane.f32.xlu0 %v2098
    %v2100 = vpop.xlane.xlu0 %2099
    %vm2101 = vcmp.eq.f32.partialorder %v2098, %v2100
    %v2102 = vsel %vm2101, %v2097, inf
    %2103 = vmin.xlane.f32.xlu0 %v2102
    %v2104 = vpop.xlane.xlu0 %2103
    %v2105 = vcvt.f32.s32 %v2104
    %v2106 = vcvt.f32.s32 %v2100
    %v2107 = vshll.u32 %v2106, 16
    %v2108 = vadd.s32 %v2107, %v2105
    %v2109 = vsel %vm238, %v2031, 2147483647
    %v2110 = vand.u32 %v2109, 65535
    %v2111 = vshra.s32 %v2109, 16
    %v2112 = vcvt.s32.f32 %v2110
    %v2113 = vcvt.s32.f32 %v2111
    %2114 = vmin.xlane.f32.xlu0 %v2113
    %v2115 = vpop.xlane.xlu0 %2114
    %vm2116 = vcmp.eq.f32.partialorder %v2113, %v2115
    %v2117 = vsel %vm2116, %v2112, inf
    %2118 = vmin.xlane.f32.xlu0 %v2117
    %v2119 = vpop.xlane.xlu0 %2118
    %v2120 = vcvt.f32.s32 %v2119
    %v2121 = vcvt.f32.s32 %v2115
    %v2122 = vshll.u32 %v2121, 16
    %v2123 = vadd.s32 %v2122, %v2120
    %v2124 = vsel %vm238, %v2032, 2147483647
    %v2125 = vand.u32 %v2124, 65535
    %v2126 = vshra.s32 %v2124, 16
    %v2127 = vcvt.s32.f32 %v2125
    %v2128 = vcvt.s32.f32 %v2126
    %2129 = vmin.xlane.f32.xlu0 %v2128
    %v2130 = vpop.xlane.xlu0 %2129
    %vm2131 = vcmp.eq.f32.partialorder %v2128, %v2130
    %v2132 = vsel %vm2131, %v2127, inf
    %2133 = vmin.xlane.f32.xlu0 %v2132
    %v2134 = vpop.xlane.xlu0 %2133
    %v2135 = vcvt.f32.s32 %v2134
    %v2136 = vcvt.f32.s32 %v2130
    %v2137 = vshll.u32 %v2136, 16
    %v2138 = vadd.s32 %v2137, %v2135
    %v2139 = vsel %vm238, %v2033, 2147483647
    %v2140 = vand.u32 %v2139, 65535
    %v2141 = vshra.s32 %v2139, 16
    %v2142 = vcvt.s32.f32 %v2140
    %v2143 = vcvt.s32.f32 %v2141
    %2144 = vmin.xlane.f32.xlu0 %v2143
    %v2145 = vpop.xlane.xlu0 %2144
    %vm2146 = vcmp.eq.f32.partialorder %v2143, %v2145
    %v2147 = vsel %vm2146, %v2142, inf
    %2148 = vmin.xlane.f32.xlu0 %v2147
    %v2149 = vpop.xlane.xlu0 %2148
    %v2150 = vcvt.f32.s32 %v2149
    %v2151 = vcvt.f32.s32 %v2145
    %v2152 = vshll.u32 %v2151, 16
    %v2153 = vadd.s32 %v2152, %v2150
    %vm2154 = vcmp.lt.s32.totalorder %v2048, %v2063
    %v2155 = vsel %vm2154, %v2048, %v2063
    %v2156 = vrot.slane %v2155, 4
    %vm2157 = vcmp.lt.s32.totalorder %v2155, %v2156
    %v2158 = vsel %vm2157, %v2155, %v2156
    %v2159 = vrot.slane %v2158, 2
    %vm2160 = vcmp.lt.s32.totalorder %v2158, %v2159
    %v2161 = vsel %vm2160, %v2158, %v2159
    %v2162 = vrot.slane %v2161, 1
    %vm2163 = vcmp.lt.s32.totalorder %v2161, %v2162
    %v2164 = vsel %vm2163, %v2161, %v2162
    %vm2165 = vcmp.lt.s32.totalorder %v2078, %v2093
    %v2166 = vsel %vm2165, %v2078, %v2093
    %v2167 = vrot.slane %v2166, 4
    %vm2168 = vcmp.lt.s32.totalorder %v2166, %v2167
    %v2169 = vsel %vm2168, %v2166, %v2167
    %v2170 = vrot.slane %v2169, 2
    %vm2171 = vcmp.lt.s32.totalorder %v2169, %v2170
    %v2172 = vsel %vm2171, %v2169, %v2170
    %v2173 = vrot.slane %v2172, 1
    %vm2174 = vcmp.lt.s32.totalorder %v2172, %v2173
    %v2175 = vsel %vm2174, %v2172, %v2173
    %vm2176 = vcmp.lt.s32.totalorder %v2108, %v2123
    %v2177 = vsel %vm2176, %v2108, %v2123
    %v2178 = vrot.slane %v2177, 4
    %vm2179 = vcmp.lt.s32.totalorder %v2177, %v2178
    %v2180 = vsel %vm2179, %v2177, %v2178
    %v2181 = vrot.slane %v2180, 2
    %vm2182 = vcmp.lt.s32.totalorder %v2180, %v2181
    %v2183 = vsel %vm2182, %v2180, %v2181
    %v2184 = vrot.slane %v2183, 1
    %vm2185 = vcmp.lt.s32.totalorder %v2183, %v2184
    %v2186 = vsel %vm2185, %v2183, %v2184
    %vm2187 = vcmp.lt.s32.totalorder %v2138, %v2153
    %v2188 = vsel %vm2187, %v2138, %v2153
    %v2189 = vrot.slane %v2188, 4
    %vm2190 = vcmp.lt.s32.totalorder %v2188, %v2189
    %v2191 = vsel %vm2190, %v2188, %v2189
    %v2192 = vrot.slane %v2191, 2
    %vm2193 = vcmp.lt.s32.totalorder %v2191, %v2192
    %v2194 = vsel %vm2193, %v2191, %v2192
    %v2195 = vrot.slane %v2194, 1
    %vm2196 = vcmp.lt.s32.totalorder %v2194, %v2195
    %v2197 = vsel %vm2196, %v2194, %v2195
    %vm2198 = vcmp.eq.s32.totalorder %v460, %v2164
    %vm2199 = vcmp.eq.s32.totalorder %v461, %v2164
    %vm2200 = vcmp.eq.s32.totalorder %v460, %v2175
    %vm2201 = vcmp.eq.s32.totalorder %v461, %v2175
    %vm2202 = vcmp.eq.s32.totalorder %v460, %v2186
    %vm2203 = vcmp.eq.s32.totalorder %v461, %v2186
    %vm2204 = vcmp.eq.s32.totalorder %v460, %v2197
    %vm2205 = vcmp.eq.s32.totalorder %v461, %v2197
    %v2206 = vsel %vm2198, 1e+30, %v1578
    %v2207 = vsel %vm2199, 1e+30, %v1579
    %v2208 = vsel %vm2200, 1e+30, %v1580
    %v2209 = vsel %vm2201, 1e+30, %v1581
    %v2210 = vsel %vm2202, 1e+30, %v1582
    %v2211 = vsel %vm2203, 1e+30, %v1583
    %v2212 = vsel %vm2204, 1e+30, %v1584
    %v2213 = vsel %vm2205, 1e+30, %v1585
    %v2214 = vsub.f32 0.0, %v1748
    %v2215 = vsub.f32 0.0, %v1755
    %v2216 = vsub.f32 0.0, %v1762
    %v2217 = vsub.f32 0.0, %v1769
    %v2218 = vmax.f32 %v2214, 0.0
    %v2219 = vmax.f32 %v2215, 0.0
    %v2220 = vmax.f32 %v2216, 0.0
    %v2221 = vmax.f32 %v2217, 0.0
    %v2222 = vand.u32 2147483647, %v2214
    %v2223 = vand.u32 2147483647, %v2215
    %v2224 = vand.u32 2147483647, %v2216
    %v2225 = vand.u32 2147483647, %v2217
    %v2226 = vsub.f32 0.0, %v2222
    %v2227 = vsub.f32 0.0, %v2223
    %v2228 = vsub.f32 0.0, %v2224
    %v2229 = vsub.f32 0.0, %v2225
    %v2230 = vmul.f32 %v2226, 1.442695
    %v2231 = vpow.pop %v2230
    %v2232 = vmul.f32 %v2227, 1.442695
    %v2233 = vpow.pop %v2232
    %v2234 = vmul.f32 %v2228, 1.442695
    %v2235 = vpow.pop %v2234
    %v2236 = vmul.f32 %v2229, 1.442695
    %v2237 = vpow.pop %v2236
    %v2238 = vadd.f32 %v2231, 1.0
    %v2239 = vlog2.pop %v2238
    %v2240 = vmul.f32 %v2239, 0.6931472
    %v2241 = vmul.f32 -0.5, %v2231
    %v2242 = vadd.f32 %v2241, 1.0
    %v2243 = vmul.f32 %v2242, %v2231
    %v2244 = vand.u32 2147483647, %v2231
    %vm2245 = vcmp.lt.f32.partialorder %v2244, 0.0004427343
    %v2246 = vsel %vm2245, %v2243, %v2240
    %v2247 = vadd.f32 %v2233, 1.0
    %v2248 = vlog2.pop %v2247
    %v2249 = vmul.f32 %v2248, 0.6931472
    %v2250 = vmul.f32 -0.5, %v2233
    %v2251 = vadd.f32 %v2250, 1.0
    %v2252 = vmul.f32 %v2251, %v2233
    %v2253 = vand.u32 2147483647, %v2233
    %vm2254 = vcmp.lt.f32.partialorder %v2253, 0.0004427343
    %v2255 = vsel %vm2254, %v2252, %v2249
    %v2256 = vadd.f32 %v2235, 1.0
    %v2257 = vlog2.pop %v2256
    %v2258 = vmul.f32 %v2257, 0.6931472
    %v2259 = vmul.f32 -0.5, %v2235
    %v2260 = vadd.f32 %v2259, 1.0
    %v2261 = vmul.f32 %v2260, %v2235
    %v2262 = vand.u32 2147483647, %v2235
    %vm2263 = vcmp.lt.f32.partialorder %v2262, 0.0004427343
    %v2264 = vsel %vm2263, %v2261, %v2258
    %v2265 = vadd.f32 %v2237, 1.0
    %v2266 = vlog2.pop %v2265
    %v2267 = vmul.f32 %v2266, 0.6931472
    %v2268 = vmul.f32 -0.5, %v2237
    %v2269 = vadd.f32 %v2268, 1.0
    %v2270 = vmul.f32 %v2269, %v2237
    %v2271 = vand.u32 2147483647, %v2237
    %vm2272 = vcmp.lt.f32.partialorder %v2271, 0.0004427343
    %v2273 = vsel %vm2272, %v2270, %v2267
    %v2274 = vadd.f32 %v2218, %v2246
    %v2275 = vadd.f32 %v2219, %v2255
    %v2276 = vadd.f32 %v2220, %v2264
    %v2277 = vadd.f32 %v2221, %v2273
    %v2278 = vadd.f32 %v1714, %v2274
    %v2279 = vadd.f32 %v1715, %v2275
    %v2280 = vadd.f32 %v1716, %v2276
    %v2281 = vadd.f32 %v1717, %v2277
    %v2282 = vmax.f32 %v1996, 0.0
    %v2283 = vmax.f32 %v2003, 0.0
    %v2284 = vmax.f32 %v2010, 0.0
    %v2285 = vmax.f32 %v2017, 0.0
    %v2286 = vand.u32 2147483647, %v1996
    %v2287 = vand.u32 2147483647, %v2003
    %v2288 = vand.u32 2147483647, %v2010
    %v2289 = vand.u32 2147483647, %v2017
    %v2290 = vsub.f32 0.0, %v2286
    %v2291 = vsub.f32 0.0, %v2287
    %v2292 = vsub.f32 0.0, %v2288
    %v2293 = vsub.f32 0.0, %v2289
    %v2294 = vmul.f32 %v2290, 1.442695
    %v2295 = vpow.pop %v2294
    %v2296 = vmul.f32 %v2291, 1.442695
    %v2297 = vpow.pop %v2296
    %v2298 = vmul.f32 %v2292, 1.442695
    %v2299 = vpow.pop %v2298
    %v2300 = vmul.f32 %v2293, 1.442695
    %v2301 = vpow.pop %v2300
    %v2302 = vadd.f32 %v2295, 1.0
    %v2303 = vlog2.pop %v2302
    %v2304 = vmul.f32 %v2303, 0.6931472
    %v2305 = vmul.f32 -0.5, %v2295
    %v2306 = vadd.f32 %v2305, 1.0
    %v2307 = vmul.f32 %v2306, %v2295
    %v2308 = vand.u32 2147483647, %v2295
    %vm2309 = vcmp.lt.f32.partialorder %v2308, 0.0004427343
    %v2310 = vsel %vm2309, %v2307, %v2304
    %v2311 = vadd.f32 %v2297, 1.0
    %v2312 = vlog2.pop %v2311
    %v2313 = vmul.f32 %v2312, 0.6931472
    %v2314 = vmul.f32 -0.5, %v2297
    %v2315 = vadd.f32 %v2314, 1.0
    %v2316 = vmul.f32 %v2315, %v2297
    %v2317 = vand.u32 2147483647, %v2297
    %vm2318 = vcmp.lt.f32.partialorder %v2317, 0.0004427343
    %v2319 = vsel %vm2318, %v2316, %v2313
    %v2320 = vadd.f32 %v2299, 1.0
    %v2321 = vlog2.pop %v2320
    %v2322 = vmul.f32 %v2321, 0.6931472
    %v2323 = vmul.f32 -0.5, %v2299
    %v2324 = vadd.f32 %v2323, 1.0
    %v2325 = vmul.f32 %v2324, %v2299
    %v2326 = vand.u32 2147483647, %v2299
    %vm2327 = vcmp.lt.f32.partialorder %v2326, 0.0004427343
    %v2328 = vsel %vm2327, %v2325, %v2322
    %v2329 = vadd.f32 %v2301, 1.0
    %v2330 = vlog2.pop %v2329
    %v2331 = vmul.f32 %v2330, 0.6931472
    %v2332 = vmul.f32 -0.5, %v2301
    %v2333 = vadd.f32 %v2332, 1.0
    %v2334 = vmul.f32 %v2333, %v2301
    %v2335 = vand.u32 2147483647, %v2301
    %vm2336 = vcmp.lt.f32.partialorder %v2335, 0.0004427343
    %v2337 = vsel %vm2336, %v2334, %v2331
    %v2338 = vadd.f32 %v2282, %v2310
    %v2339 = vadd.f32 %v2283, %v2319
    %v2340 = vadd.f32 %v2284, %v2328
    %v2341 = vadd.f32 %v2285, %v2337
    %v2342 = vadd.f32 %v2278, %v2338
    %v2343 = vadd.f32 %v2279, %v2339
    %v2344 = vadd.f32 %v2280, %v2340
    %v2345 = vadd.f32 %v2281, %v2341
    %v2346 = vsel %vm238, %v1958, -inf
    %2347 = vmax.xlane.f32.xlu0 %v2346
    %v2348 = vpop.xlane.xlu0 %2347
    %v2349 = vsel %vm238, %v1959, -inf
    %2350 = vmax.xlane.f32.xlu0 %v2349
    %v2351 = vpop.xlane.xlu0 %2350
    %v2352 = vsel %vm238, %v1960, -inf
    %2353 = vmax.xlane.f32.xlu0 %v2352
    %v2354 = vpop.xlane.xlu0 %2353
    %v2355 = vsel %vm238, %v1961, -inf
    %2356 = vmax.xlane.f32.xlu0 %v2355
    %v2357 = vpop.xlane.xlu0 %2356
    %v2358 = vsel %vm238, %v1962, -inf
    %2359 = vmax.xlane.f32.xlu0 %v2358
    %v2360 = vpop.xlane.xlu0 %2359
    %v2361 = vsel %vm238, %v1963, -inf
    %2362 = vmax.xlane.f32.xlu0 %v2361
    %v2363 = vpop.xlane.xlu0 %2362
    %v2364 = vsel %vm238, %v1964, -inf
    %2365 = vmax.xlane.f32.xlu0 %v2364
    %v2366 = vpop.xlane.xlu0 %2365
    %v2367 = vsel %vm238, %v1965, -inf
    %2368 = vmax.xlane.f32.xlu0 %v2367
    %v2369 = vpop.xlane.xlu0 %2368
    %v2370 = vmax.f32 %v2348, %v2351
    %v2371 = vrot.slane %v2370, 4
    %v2372 = vmax.f32 %v2370, %v2371
    %v2373 = vrot.slane %v2372, 2
    %v2374 = vmax.f32 %v2372, %v2373
    %v2375 = vrot.slane %v2374, 1
    %v2376 = vmax.f32 %v2374, %v2375
    %v2377 = vmax.f32 %v2354, %v2357
    %v2378 = vrot.slane %v2377, 4
    %v2379 = vmax.f32 %v2377, %v2378
    %v2380 = vrot.slane %v2379, 2
    %v2381 = vmax.f32 %v2379, %v2380
    %v2382 = vrot.slane %v2381, 1
    %v2383 = vmax.f32 %v2381, %v2382
    %v2384 = vmax.f32 %v2360, %v2363
    %v2385 = vrot.slane %v2384, 4
    %v2386 = vmax.f32 %v2384, %v2385
    %v2387 = vrot.slane %v2386, 2
    %v2388 = vmax.f32 %v2386, %v2387
    %v2389 = vrot.slane %v2388, 1
    %v2390 = vmax.f32 %v2388, %v2389
    %v2391 = vmax.f32 %v2366, %v2369
    %v2392 = vrot.slane %v2391, 4
    %v2393 = vmax.f32 %v2391, %v2392
    %v2394 = vrot.slane %v2393, 2
    %v2395 = vmax.f32 %v2393, %v2394
    %v2396 = vrot.slane %v2395, 1
    %v2397 = vmax.f32 %v2395, %v2396
    %vm2398 = vcmp.eq.f32.partialorder %v1958, %v2376
    %vm2399 = vcmp.eq.f32.partialorder %v1959, %v2376
    %vm2400 = vcmp.eq.f32.partialorder %v1960, %v2383
    %vm2401 = vcmp.eq.f32.partialorder %v1961, %v2383
    %vm2402 = vcmp.eq.f32.partialorder %v1962, %v2390
    %vm2403 = vcmp.eq.f32.partialorder %v1963, %v2390
    %vm2404 = vcmp.eq.f32.partialorder %v1964, %v2397
    %vm2405 = vcmp.eq.f32.partialorder %v1965, %v2397
    %v2406 = vsel %vm2398, %v460, 1073741824
    %v2407 = vsel %vm2399, %v461, 1073741824
    %v2408 = vsel %vm2400, %v460, 1073741824
    %v2409 = vsel %vm2401, %v461, 1073741824
    %v2410 = vsel %vm2402, %v460, 1073741824
    %v2411 = vsel %vm2403, %v461, 1073741824
    %v2412 = vsel %vm2404, %v460, 1073741824
    %v2413 = vsel %vm2405, %v461, 1073741824
    %v2414 = vsel %vm238, %v2406, 2147483647
    %v2415 = vand.u32 %v2414, 65535
    %v2416 = vshra.s32 %v2414, 16
    %v2417 = vcvt.s32.f32 %v2415
    %v2418 = vcvt.s32.f32 %v2416
    %2419 = vmin.xlane.f32.xlu0 %v2418
    %v2420 = vpop.xlane.xlu0 %2419
    %vm2421 = vcmp.eq.f32.partialorder %v2418, %v2420
    %v2422 = vsel %vm2421, %v2417, inf
    %2423 = vmin.xlane.f32.xlu0 %v2422
    %v2424 = vpop.xlane.xlu0 %2423
    %v2425 = vcvt.f32.s32 %v2424
    %v2426 = vcvt.f32.s32 %v2420
    %v2427 = vshll.u32 %v2426, 16
    %v2428 = vadd.s32 %v2427, %v2425
    %v2429 = vsel %vm238, %v2407, 2147483647
    %v2430 = vand.u32 %v2429, 65535
    %v2431 = vshra.s32 %v2429, 16
    %v2432 = vcvt.s32.f32 %v2430
    %v2433 = vcvt.s32.f32 %v2431
    %2434 = vmin.xlane.f32.xlu0 %v2433
    %v2435 = vpop.xlane.xlu0 %2434
    %vm2436 = vcmp.eq.f32.partialorder %v2433, %v2435
    %v2437 = vsel %vm2436, %v2432, inf
    %2438 = vmin.xlane.f32.xlu0 %v2437
    %v2439 = vpop.xlane.xlu0 %2438
    %v2440 = vcvt.f32.s32 %v2439
    %v2441 = vcvt.f32.s32 %v2435
    %v2442 = vshll.u32 %v2441, 16
    %v2443 = vadd.s32 %v2442, %v2440
    %v2444 = vsel %vm238, %v2408, 2147483647
    %v2445 = vand.u32 %v2444, 65535
    %v2446 = vshra.s32 %v2444, 16
    %v2447 = vcvt.s32.f32 %v2445
    %v2448 = vcvt.s32.f32 %v2446
    %2449 = vmin.xlane.f32.xlu0 %v2448
    %v2450 = vpop.xlane.xlu0 %2449
    %vm2451 = vcmp.eq.f32.partialorder %v2448, %v2450
    %v2452 = vsel %vm2451, %v2447, inf
    %2453 = vmin.xlane.f32.xlu0 %v2452
    %v2454 = vpop.xlane.xlu0 %2453
    %v2455 = vcvt.f32.s32 %v2454
    %v2456 = vcvt.f32.s32 %v2450
    %v2457 = vshll.u32 %v2456, 16
    %v2458 = vadd.s32 %v2457, %v2455
    %v2459 = vsel %vm238, %v2409, 2147483647
    %v2460 = vand.u32 %v2459, 65535
    %v2461 = vshra.s32 %v2459, 16
    %v2462 = vcvt.s32.f32 %v2460
    %v2463 = vcvt.s32.f32 %v2461
    %2464 = vmin.xlane.f32.xlu0 %v2463
    %v2465 = vpop.xlane.xlu0 %2464
    %vm2466 = vcmp.eq.f32.partialorder %v2463, %v2465
    %v2467 = vsel %vm2466, %v2462, inf
    %2468 = vmin.xlane.f32.xlu0 %v2467
    %v2469 = vpop.xlane.xlu0 %2468
    %v2470 = vcvt.f32.s32 %v2469
    %v2471 = vcvt.f32.s32 %v2465
    %v2472 = vshll.u32 %v2471, 16
    %v2473 = vadd.s32 %v2472, %v2470
    %v2474 = vsel %vm238, %v2410, 2147483647
    %v2475 = vand.u32 %v2474, 65535
    %v2476 = vshra.s32 %v2474, 16
    %v2477 = vcvt.s32.f32 %v2475
    %v2478 = vcvt.s32.f32 %v2476
    %2479 = vmin.xlane.f32.xlu0 %v2478
    %v2480 = vpop.xlane.xlu0 %2479
    %vm2481 = vcmp.eq.f32.partialorder %v2478, %v2480
    %v2482 = vsel %vm2481, %v2477, inf
    %2483 = vmin.xlane.f32.xlu0 %v2482
    %v2484 = vpop.xlane.xlu0 %2483
    %v2485 = vcvt.f32.s32 %v2484
    %v2486 = vcvt.f32.s32 %v2480
    %v2487 = vshll.u32 %v2486, 16
    %v2488 = vadd.s32 %v2487, %v2485
    %v2489 = vsel %vm238, %v2411, 2147483647
    %v2490 = vand.u32 %v2489, 65535
    %v2491 = vshra.s32 %v2489, 16
    %v2492 = vcvt.s32.f32 %v2490
    %v2493 = vcvt.s32.f32 %v2491
    %2494 = vmin.xlane.f32.xlu0 %v2493
    %v2495 = vpop.xlane.xlu0 %2494
    %vm2496 = vcmp.eq.f32.partialorder %v2493, %v2495
    %v2497 = vsel %vm2496, %v2492, inf
    %2498 = vmin.xlane.f32.xlu0 %v2497
    %v2499 = vpop.xlane.xlu0 %2498
    %v2500 = vcvt.f32.s32 %v2499
    %v2501 = vcvt.f32.s32 %v2495
    %v2502 = vshll.u32 %v2501, 16
    %v2503 = vadd.s32 %v2502, %v2500
    %v2504 = vsel %vm238, %v2412, 2147483647
    %v2505 = vand.u32 %v2504, 65535
    %v2506 = vshra.s32 %v2504, 16
    %v2507 = vcvt.s32.f32 %v2505
    %v2508 = vcvt.s32.f32 %v2506
    %2509 = vmin.xlane.f32.xlu0 %v2508
    %v2510 = vpop.xlane.xlu0 %2509
    %vm2511 = vcmp.eq.f32.partialorder %v2508, %v2510
    %v2512 = vsel %vm2511, %v2507, inf
    %2513 = vmin.xlane.f32.xlu0 %v2512
    %v2514 = vpop.xlane.xlu0 %2513
    %v2515 = vcvt.f32.s32 %v2514
    %v2516 = vcvt.f32.s32 %v2510
    %v2517 = vshll.u32 %v2516, 16
    %v2518 = vadd.s32 %v2517, %v2515
    %v2519 = vsel %vm238, %v2413, 2147483647
    %v2520 = vand.u32 %v2519, 65535
    %v2521 = vshra.s32 %v2519, 16
    %v2522 = vcvt.s32.f32 %v2520
    %v2523 = vcvt.s32.f32 %v2521
    %2524 = vmin.xlane.f32.xlu0 %v2523
    %v2525 = vpop.xlane.xlu0 %2524
    %vm2526 = vcmp.eq.f32.partialorder %v2523, %v2525
    %v2527 = vsel %vm2526, %v2522, inf
    %2528 = vmin.xlane.f32.xlu0 %v2527
    %v2529 = vpop.xlane.xlu0 %2528
    %v2530 = vcvt.f32.s32 %v2529
    %v2531 = vcvt.f32.s32 %v2525
    %v2532 = vshll.u32 %v2531, 16
    %v2533 = vadd.s32 %v2532, %v2530
    %vm2534 = vcmp.lt.s32.totalorder %v2428, %v2443
    %v2535 = vsel %vm2534, %v2428, %v2443
    %v2536 = vrot.slane %v2535, 4
    %vm2537 = vcmp.lt.s32.totalorder %v2535, %v2536
    %v2538 = vsel %vm2537, %v2535, %v2536
    %v2539 = vrot.slane %v2538, 2
    %vm2540 = vcmp.lt.s32.totalorder %v2538, %v2539
    %v2541 = vsel %vm2540, %v2538, %v2539
    %v2542 = vrot.slane %v2541, 1
    %vm2543 = vcmp.lt.s32.totalorder %v2541, %v2542
    %v2544 = vsel %vm2543, %v2541, %v2542
    %vm2545 = vcmp.lt.s32.totalorder %v2458, %v2473
    %v2546 = vsel %vm2545, %v2458, %v2473
    %v2547 = vrot.slane %v2546, 4
    %vm2548 = vcmp.lt.s32.totalorder %v2546, %v2547
    %v2549 = vsel %vm2548, %v2546, %v2547
    %v2550 = vrot.slane %v2549, 2
    %vm2551 = vcmp.lt.s32.totalorder %v2549, %v2550
    %v2552 = vsel %vm2551, %v2549, %v2550
    %v2553 = vrot.slane %v2552, 1
    %vm2554 = vcmp.lt.s32.totalorder %v2552, %v2553
    %v2555 = vsel %vm2554, %v2552, %v2553
    %vm2556 = vcmp.lt.s32.totalorder %v2488, %v2503
    %v2557 = vsel %vm2556, %v2488, %v2503
    %v2558 = vrot.slane %v2557, 4
    %vm2559 = vcmp.lt.s32.totalorder %v2557, %v2558
    %v2560 = vsel %vm2559, %v2557, %v2558
    %v2561 = vrot.slane %v2560, 2
    %vm2562 = vcmp.lt.s32.totalorder %v2560, %v2561
    %v2563 = vsel %vm2562, %v2560, %v2561
    %v2564 = vrot.slane %v2563, 1
    %vm2565 = vcmp.lt.s32.totalorder %v2563, %v2564
    %v2566 = vsel %vm2565, %v2563, %v2564
    %vm2567 = vcmp.lt.s32.totalorder %v2518, %v2533
    %v2568 = vsel %vm2567, %v2518, %v2533
    %v2569 = vrot.slane %v2568, 4
    %vm2570 = vcmp.lt.s32.totalorder %v2568, %v2569
    %v2571 = vsel %vm2570, %v2568, %v2569
    %v2572 = vrot.slane %v2571, 2
    %vm2573 = vcmp.lt.s32.totalorder %v2571, %v2572
    %v2574 = vsel %vm2573, %v2571, %v2572
    %v2575 = vrot.slane %v2574, 1
    %vm2576 = vcmp.lt.s32.totalorder %v2574, %v2575
    %v2577 = vsel %vm2576, %v2574, %v2575
    %vm2578 = vcmp.eq.s32.totalorder %v460, %v2544
    %vm2579 = vcmp.eq.s32.totalorder %v461, %v2544
    %vm2580 = vcmp.eq.s32.totalorder %v460, %v2555
    %vm2581 = vcmp.eq.s32.totalorder %v461, %v2555
    %vm2582 = vcmp.eq.s32.totalorder %v460, %v2566
    %vm2583 = vcmp.eq.s32.totalorder %v461, %v2566
    %vm2584 = vcmp.eq.s32.totalorder %v460, %v2577
    %vm2585 = vcmp.eq.s32.totalorder %v461, %v2577
    %v2586 = vsel %vm2578, -1e+30, %v1958
    %v2587 = vsel %vm2579, -1e+30, %v1959
    %v2588 = vsel %vm2580, -1e+30, %v1960
    %v2589 = vsel %vm2581, -1e+30, %v1961
    %v2590 = vsel %vm2582, -1e+30, %v1962
    %v2591 = vsel %vm2583, -1e+30, %v1963
    %v2592 = vsel %vm2584, -1e+30, %v1964
    %v2593 = vsel %vm2585, -1e+30, %v1965
    %v2594 = vsel %vm238, %v2206, inf
    %2595 = vmin.xlane.f32.xlu0 %v2594
    %v2596 = vpop.xlane.xlu0 %2595
    %v2597 = vsel %vm238, %v2207, inf
    %2598 = vmin.xlane.f32.xlu0 %v2597
    %v2599 = vpop.xlane.xlu0 %2598
    %v2600 = vsel %vm238, %v2208, inf
    %2601 = vmin.xlane.f32.xlu0 %v2600
    %v2602 = vpop.xlane.xlu0 %2601
    %v2603 = vsel %vm238, %v2209, inf
    %2604 = vmin.xlane.f32.xlu0 %v2603
    %v2605 = vpop.xlane.xlu0 %2604
    %v2606 = vsel %vm238, %v2210, inf
    %2607 = vmin.xlane.f32.xlu0 %v2606
    %v2608 = vpop.xlane.xlu0 %2607
    %v2609 = vsel %vm238, %v2211, inf
    %2610 = vmin.xlane.f32.xlu0 %v2609
    %v2611 = vpop.xlane.xlu0 %2610
    %v2612 = vsel %vm238, %v2212, inf
    %2613 = vmin.xlane.f32.xlu0 %v2612
    %v2614 = vpop.xlane.xlu0 %2613
    %v2615 = vsel %vm238, %v2213, inf
    %2616 = vmin.xlane.f32.xlu0 %v2615
    %v2617 = vpop.xlane.xlu0 %2616
    %v2618 = vmin.f32 %v2596, %v2599
    %v2619 = vrot.slane %v2618, 4
    %v2620 = vmin.f32 %v2618, %v2619
    %v2621 = vrot.slane %v2620, 2
    %v2622 = vmin.f32 %v2620, %v2621
    %v2623 = vrot.slane %v2622, 1
    %v2624 = vmin.f32 %v2622, %v2623
    %v2625 = vmin.f32 %v2602, %v2605
    %v2626 = vrot.slane %v2625, 4
    %v2627 = vmin.f32 %v2625, %v2626
    %v2628 = vrot.slane %v2627, 2
    %v2629 = vmin.f32 %v2627, %v2628
    %v2630 = vrot.slane %v2629, 1
    %v2631 = vmin.f32 %v2629, %v2630
    %v2632 = vmin.f32 %v2608, %v2611
    %v2633 = vrot.slane %v2632, 4
    %v2634 = vmin.f32 %v2632, %v2633
    %v2635 = vrot.slane %v2634, 2
    %v2636 = vmin.f32 %v2634, %v2635
    %v2637 = vrot.slane %v2636, 1
    %v2638 = vmin.f32 %v2636, %v2637
    %v2639 = vmin.f32 %v2614, %v2617
    %v2640 = vrot.slane %v2639, 4
    %v2641 = vmin.f32 %v2639, %v2640
    %v2642 = vrot.slane %v2641, 2
    %v2643 = vmin.f32 %v2641, %v2642
    %v2644 = vrot.slane %v2643, 1
    %v2645 = vmin.f32 %v2643, %v2644
    %vm2646 = vcmp.eq.f32.partialorder %v2206, %v2624
    %vm2647 = vcmp.eq.f32.partialorder %v2207, %v2624
    %vm2648 = vcmp.eq.f32.partialorder %v2208, %v2631
    %vm2649 = vcmp.eq.f32.partialorder %v2209, %v2631
    %vm2650 = vcmp.eq.f32.partialorder %v2210, %v2638
    %vm2651 = vcmp.eq.f32.partialorder %v2211, %v2638
    %vm2652 = vcmp.eq.f32.partialorder %v2212, %v2645
    %vm2653 = vcmp.eq.f32.partialorder %v2213, %v2645
    %v2654 = vsel %vm2646, %v460, 1073741824
    %v2655 = vsel %vm2647, %v461, 1073741824
    %v2656 = vsel %vm2648, %v460, 1073741824
    %v2657 = vsel %vm2649, %v461, 1073741824
    %v2658 = vsel %vm2650, %v460, 1073741824
    %v2659 = vsel %vm2651, %v461, 1073741824
    %v2660 = vsel %vm2652, %v460, 1073741824
    %v2661 = vsel %vm2653, %v461, 1073741824
    %v2662 = vsel %vm238, %v2654, 2147483647
    %v2663 = vand.u32 %v2662, 65535
    %v2664 = vshra.s32 %v2662, 16
    %v2665 = vcvt.s32.f32 %v2663
    %v2666 = vcvt.s32.f32 %v2664
    %2667 = vmin.xlane.f32.xlu0 %v2666
    %v2668 = vpop.xlane.xlu0 %2667
    %vm2669 = vcmp.eq.f32.partialorder %v2666, %v2668
    %v2670 = vsel %vm2669, %v2665, inf
    %2671 = vmin.xlane.f32.xlu0 %v2670
    %v2672 = vpop.xlane.xlu0 %2671
    %v2673 = vcvt.f32.s32 %v2672
    %v2674 = vcvt.f32.s32 %v2668
    %v2675 = vshll.u32 %v2674, 16
    %v2676 = vadd.s32 %v2675, %v2673
    %v2677 = vsel %vm238, %v2655, 2147483647
    %v2678 = vand.u32 %v2677, 65535
    %v2679 = vshra.s32 %v2677, 16
    %v2680 = vcvt.s32.f32 %v2678
    %v2681 = vcvt.s32.f32 %v2679
    %2682 = vmin.xlane.f32.xlu0 %v2681
    %v2683 = vpop.xlane.xlu0 %2682
    %vm2684 = vcmp.eq.f32.partialorder %v2681, %v2683
    %v2685 = vsel %vm2684, %v2680, inf
    %2686 = vmin.xlane.f32.xlu0 %v2685
    %v2687 = vpop.xlane.xlu0 %2686
    %v2688 = vcvt.f32.s32 %v2687
    %v2689 = vcvt.f32.s32 %v2683
    %v2690 = vshll.u32 %v2689, 16
    %v2691 = vadd.s32 %v2690, %v2688
    %v2692 = vsel %vm238, %v2656, 2147483647
    %v2693 = vand.u32 %v2692, 65535
    %v2694 = vshra.s32 %v2692, 16
    %v2695 = vcvt.s32.f32 %v2693
    %v2696 = vcvt.s32.f32 %v2694
    %2697 = vmin.xlane.f32.xlu0 %v2696
    %v2698 = vpop.xlane.xlu0 %2697
    %vm2699 = vcmp.eq.f32.partialorder %v2696, %v2698
    %v2700 = vsel %vm2699, %v2695, inf
    %2701 = vmin.xlane.f32.xlu0 %v2700
    %v2702 = vpop.xlane.xlu0 %2701
    %v2703 = vcvt.f32.s32 %v2702
    %v2704 = vcvt.f32.s32 %v2698
    %v2705 = vshll.u32 %v2704, 16
    %v2706 = vadd.s32 %v2705, %v2703
    %v2707 = vsel %vm238, %v2657, 2147483647
    %v2708 = vand.u32 %v2707, 65535
    %v2709 = vshra.s32 %v2707, 16
    %v2710 = vcvt.s32.f32 %v2708
    %v2711 = vcvt.s32.f32 %v2709
    %2712 = vmin.xlane.f32.xlu0 %v2711
    %v2713 = vpop.xlane.xlu0 %2712
    %vm2714 = vcmp.eq.f32.partialorder %v2711, %v2713
    %v2715 = vsel %vm2714, %v2710, inf
    %2716 = vmin.xlane.f32.xlu0 %v2715
    %v2717 = vpop.xlane.xlu0 %2716
    %v2718 = vcvt.f32.s32 %v2717
    %v2719 = vcvt.f32.s32 %v2713
    %v2720 = vshll.u32 %v2719, 16
    %v2721 = vadd.s32 %v2720, %v2718
    %v2722 = vsel %vm238, %v2658, 2147483647
    %v2723 = vand.u32 %v2722, 65535
    %v2724 = vshra.s32 %v2722, 16
    %v2725 = vcvt.s32.f32 %v2723
    %v2726 = vcvt.s32.f32 %v2724
    %2727 = vmin.xlane.f32.xlu0 %v2726
    %v2728 = vpop.xlane.xlu0 %2727
    %vm2729 = vcmp.eq.f32.partialorder %v2726, %v2728
    %v2730 = vsel %vm2729, %v2725, inf
    %2731 = vmin.xlane.f32.xlu0 %v2730
    %v2732 = vpop.xlane.xlu0 %2731
    %v2733 = vcvt.f32.s32 %v2732
    %v2734 = vcvt.f32.s32 %v2728
    %v2735 = vshll.u32 %v2734, 16
    %v2736 = vadd.s32 %v2735, %v2733
    %v2737 = vsel %vm238, %v2659, 2147483647
    %v2738 = vand.u32 %v2737, 65535
    %v2739 = vshra.s32 %v2737, 16
    %v2740 = vcvt.s32.f32 %v2738
    %v2741 = vcvt.s32.f32 %v2739
    %2742 = vmin.xlane.f32.xlu0 %v2741
    %v2743 = vpop.xlane.xlu0 %2742
    %vm2744 = vcmp.eq.f32.partialorder %v2741, %v2743
    %v2745 = vsel %vm2744, %v2740, inf
    %2746 = vmin.xlane.f32.xlu0 %v2745
    %v2747 = vpop.xlane.xlu0 %2746
    %v2748 = vcvt.f32.s32 %v2747
    %v2749 = vcvt.f32.s32 %v2743
    %v2750 = vshll.u32 %v2749, 16
    %v2751 = vadd.s32 %v2750, %v2748
    %v2752 = vsel %vm238, %v2660, 2147483647
    %v2753 = vand.u32 %v2752, 65535
    %v2754 = vshra.s32 %v2752, 16
    %v2755 = vcvt.s32.f32 %v2753
    %v2756 = vcvt.s32.f32 %v2754
    %2757 = vmin.xlane.f32.xlu0 %v2756
    %v2758 = vpop.xlane.xlu0 %2757
    %vm2759 = vcmp.eq.f32.partialorder %v2756, %v2758
    %v2760 = vsel %vm2759, %v2755, inf
    %2761 = vmin.xlane.f32.xlu0 %v2760
    %v2762 = vpop.xlane.xlu0 %2761
    %v2763 = vcvt.f32.s32 %v2762
    %v2764 = vcvt.f32.s32 %v2758
    %v2765 = vshll.u32 %v2764, 16
    %v2766 = vadd.s32 %v2765, %v2763
    %v2767 = vsel %vm238, %v2661, 2147483647
    %v2768 = vand.u32 %v2767, 65535
    %v2769 = vshra.s32 %v2767, 16
    %v2770 = vcvt.s32.f32 %v2768
    %v2771 = vcvt.s32.f32 %v2769
    %2772 = vmin.xlane.f32.xlu0 %v2771
    %v2773 = vpop.xlane.xlu0 %2772
    %vm2774 = vcmp.eq.f32.partialorder %v2771, %v2773
    %v2775 = vsel %vm2774, %v2770, inf
    %2776 = vmin.xlane.f32.xlu0 %v2775
    %v2777 = vpop.xlane.xlu0 %2776
    %v2778 = vcvt.f32.s32 %v2777
    %v2779 = vcvt.f32.s32 %v2773
    %v2780 = vshll.u32 %v2779, 16
    %v2781 = vadd.s32 %v2780, %v2778
    %vm2782 = vcmp.lt.s32.totalorder %v2676, %v2691
    %v2783 = vsel %vm2782, %v2676, %v2691
    %v2784 = vrot.slane %v2783, 4
    %vm2785 = vcmp.lt.s32.totalorder %v2783, %v2784
    %v2786 = vsel %vm2785, %v2783, %v2784
    %v2787 = vrot.slane %v2786, 2
    %vm2788 = vcmp.lt.s32.totalorder %v2786, %v2787
    %v2789 = vsel %vm2788, %v2786, %v2787
    %v2790 = vrot.slane %v2789, 1
    %vm2791 = vcmp.lt.s32.totalorder %v2789, %v2790
    %v2792 = vsel %vm2791, %v2789, %v2790
    %vm2793 = vcmp.lt.s32.totalorder %v2706, %v2721
    %v2794 = vsel %vm2793, %v2706, %v2721
    %v2795 = vrot.slane %v2794, 4
    %vm2796 = vcmp.lt.s32.totalorder %v2794, %v2795
    %v2797 = vsel %vm2796, %v2794, %v2795
    %v2798 = vrot.slane %v2797, 2
    %vm2799 = vcmp.lt.s32.totalorder %v2797, %v2798
    %v2800 = vsel %vm2799, %v2797, %v2798
    %v2801 = vrot.slane %v2800, 1
    %vm2802 = vcmp.lt.s32.totalorder %v2800, %v2801
    %v2803 = vsel %vm2802, %v2800, %v2801
    %vm2804 = vcmp.lt.s32.totalorder %v2736, %v2751
    %v2805 = vsel %vm2804, %v2736, %v2751
    %v2806 = vrot.slane %v2805, 4
    %vm2807 = vcmp.lt.s32.totalorder %v2805, %v2806
    %v2808 = vsel %vm2807, %v2805, %v2806
    %v2809 = vrot.slane %v2808, 2
    %vm2810 = vcmp.lt.s32.totalorder %v2808, %v2809
    %v2811 = vsel %vm2810, %v2808, %v2809
    %v2812 = vrot.slane %v2811, 1
    %vm2813 = vcmp.lt.s32.totalorder %v2811, %v2812
    %v2814 = vsel %vm2813, %v2811, %v2812
    %vm2815 = vcmp.lt.s32.totalorder %v2766, %v2781
    %v2816 = vsel %vm2815, %v2766, %v2781
    %v2817 = vrot.slane %v2816, 4
    %vm2818 = vcmp.lt.s32.totalorder %v2816, %v2817
    %v2819 = vsel %vm2818, %v2816, %v2817
    %v2820 = vrot.slane %v2819, 2
    %vm2821 = vcmp.lt.s32.totalorder %v2819, %v2820
    %v2822 = vsel %vm2821, %v2819, %v2820
    %v2823 = vrot.slane %v2822, 1
    %vm2824 = vcmp.lt.s32.totalorder %v2822, %v2823
    %v2825 = vsel %vm2824, %v2822, %v2823
    %vm2826 = vcmp.eq.s32.totalorder %v460, %v2792
    %vm2827 = vcmp.eq.s32.totalorder %v461, %v2792
    %vm2828 = vcmp.eq.s32.totalorder %v460, %v2803
    %vm2829 = vcmp.eq.s32.totalorder %v461, %v2803
    %vm2830 = vcmp.eq.s32.totalorder %v460, %v2814
    %vm2831 = vcmp.eq.s32.totalorder %v461, %v2814
    %vm2832 = vcmp.eq.s32.totalorder %v460, %v2825
    %vm2833 = vcmp.eq.s32.totalorder %v461, %v2825
    %v2834 = vsel %vm2826, 1e+30, %v2206
    %v2835 = vsel %vm2827, 1e+30, %v2207
    %v2836 = vsel %vm2828, 1e+30, %v2208
    %v2837 = vsel %vm2829, 1e+30, %v2209
    %v2838 = vsel %vm2830, 1e+30, %v2210
    %v2839 = vsel %vm2831, 1e+30, %v2211
    %v2840 = vsel %vm2832, 1e+30, %v2212
    %v2841 = vsel %vm2833, 1e+30, %v2213
    %v2842 = vsub.f32 0.0, %v2376
    %v2843 = vsub.f32 0.0, %v2383
    %v2844 = vsub.f32 0.0, %v2390
    %v2845 = vsub.f32 0.0, %v2397
    %v2846 = vmax.f32 %v2842, 0.0
    %v2847 = vmax.f32 %v2843, 0.0
    %v2848 = vmax.f32 %v2844, 0.0
    %v2849 = vmax.f32 %v2845, 0.0
    %v2850 = vand.u32 2147483647, %v2842
    %v2851 = vand.u32 2147483647, %v2843
    %v2852 = vand.u32 2147483647, %v2844
    %v2853 = vand.u32 2147483647, %v2845
    %v2854 = vsub.f32 0.0, %v2850
    %v2855 = vsub.f32 0.0, %v2851
    %v2856 = vsub.f32 0.0, %v2852
    %v2857 = vsub.f32 0.0, %v2853
    %v2858 = vmul.f32 %v2854, 1.442695
    %v2859 = vpow.pop %v2858
    %v2860 = vmul.f32 %v2855, 1.442695
    %v2861 = vpow.pop %v2860
    %v2862 = vmul.f32 %v2856, 1.442695
    %v2863 = vpow.pop %v2862
    %v2864 = vmul.f32 %v2857, 1.442695
    %v2865 = vpow.pop %v2864
    %v2866 = vadd.f32 %v2859, 1.0
    %v2867 = vlog2.pop %v2866
    %v2868 = vmul.f32 %v2867, 0.6931472
    %v2869 = vmul.f32 -0.5, %v2859
    %v2870 = vadd.f32 %v2869, 1.0
    %v2871 = vmul.f32 %v2870, %v2859
    %v2872 = vand.u32 2147483647, %v2859
    %vm2873 = vcmp.lt.f32.partialorder %v2872, 0.0004427343
    %v2874 = vsel %vm2873, %v2871, %v2868
    %v2875 = vadd.f32 %v2861, 1.0
    %v2876 = vlog2.pop %v2875
    %v2877 = vmul.f32 %v2876, 0.6931472
    %v2878 = vmul.f32 -0.5, %v2861
    %v2879 = vadd.f32 %v2878, 1.0
    %v2880 = vmul.f32 %v2879, %v2861
    %v2881 = vand.u32 2147483647, %v2861
    %vm2882 = vcmp.lt.f32.partialorder %v2881, 0.0004427343
    %v2883 = vsel %vm2882, %v2880, %v2877
    %v2884 = vadd.f32 %v2863, 1.0
    %v2885 = vlog2.pop %v2884
    %v2886 = vmul.f32 %v2885, 0.6931472
    %v2887 = vmul.f32 -0.5, %v2863
    %v2888 = vadd.f32 %v2887, 1.0
    %v2889 = vmul.f32 %v2888, %v2863
    %v2890 = vand.u32 2147483647, %v2863
    %vm2891 = vcmp.lt.f32.partialorder %v2890, 0.0004427343
    %v2892 = vsel %vm2891, %v2889, %v2886
    %v2893 = vadd.f32 %v2865, 1.0
    %v2894 = vlog2.pop %v2893
    %v2895 = vmul.f32 %v2894, 0.6931472
    %v2896 = vmul.f32 -0.5, %v2865
    %v2897 = vadd.f32 %v2896, 1.0
    %v2898 = vmul.f32 %v2897, %v2865
    %v2899 = vand.u32 2147483647, %v2865
    %vm2900 = vcmp.lt.f32.partialorder %v2899, 0.0004427343
    %v2901 = vsel %vm2900, %v2898, %v2895
    %v2902 = vadd.f32 %v2846, %v2874
    %v2903 = vadd.f32 %v2847, %v2883
    %v2904 = vadd.f32 %v2848, %v2892
    %v2905 = vadd.f32 %v2849, %v2901
    %v2906 = vadd.f32 %v2342, %v2902
    %v2907 = vadd.f32 %v2343, %v2903
    %v2908 = vadd.f32 %v2344, %v2904
    %v2909 = vadd.f32 %v2345, %v2905
    %v2910 = vmax.f32 %v2624, 0.0
    %v2911 = vmax.f32 %v2631, 0.0
    %v2912 = vmax.f32 %v2638, 0.0
    %v2913 = vmax.f32 %v2645, 0.0
    %v2914 = vand.u32 2147483647, %v2624
    %v2915 = vand.u32 2147483647, %v2631
    %v2916 = vand.u32 2147483647, %v2638
    %v2917 = vand.u32 2147483647, %v2645
    %v2918 = vsub.f32 0.0, %v2914
    %v2919 = vsub.f32 0.0, %v2915
    %v2920 = vsub.f32 0.0, %v2916
    %v2921 = vsub.f32 0.0, %v2917
    %v2922 = vmul.f32 %v2918, 1.442695
    %v2923 = vpow.pop %v2922
    %v2924 = vmul.f32 %v2919, 1.442695
    %v2925 = vpow.pop %v2924
    %v2926 = vmul.f32 %v2920, 1.442695
    %v2927 = vpow.pop %v2926
    %v2928 = vmul.f32 %v2921, 1.442695
    %v2929 = vpow.pop %v2928
    %v2930 = vadd.f32 %v2923, 1.0
    %v2931 = vlog2.pop %v2930
    %v2932 = vmul.f32 %v2931, 0.6931472
    %v2933 = vmul.f32 -0.5, %v2923
    %v2934 = vadd.f32 %v2933, 1.0
    %v2935 = vmul.f32 %v2934, %v2923
    %v2936 = vand.u32 2147483647, %v2923
    %vm2937 = vcmp.lt.f32.partialorder %v2936, 0.0004427343
    %v2938 = vsel %vm2937, %v2935, %v2932
    %v2939 = vadd.f32 %v2925, 1.0
    %v2940 = vlog2.pop %v2939
    %v2941 = vmul.f32 %v2940, 0.6931472
    %v2942 = vmul.f32 -0.5, %v2925
    %v2943 = vadd.f32 %v2942, 1.0
    %v2944 = vmul.f32 %v2943, %v2925
    %v2945 = vand.u32 2147483647, %v2925
    %vm2946 = vcmp.lt.f32.partialorder %v2945, 0.0004427343
    %v2947 = vsel %vm2946, %v2944, %v2941
    %v2948 = vadd.f32 %v2927, 1.0
    %v2949 = vlog2.pop %v2948
    %v2950 = vmul.f32 %v2949, 0.6931472
    %v2951 = vmul.f32 -0.5, %v2927
    %v2952 = vadd.f32 %v2951, 1.0
    %v2953 = vmul.f32 %v2952, %v2927
    %v2954 = vand.u32 2147483647, %v2927
    %vm2955 = vcmp.lt.f32.partialorder %v2954, 0.0004427343
    %v2956 = vsel %vm2955, %v2953, %v2950
    %v2957 = vadd.f32 %v2929, 1.0
    %v2958 = vlog2.pop %v2957
    %v2959 = vmul.f32 %v2958, 0.6931472
    %v2960 = vmul.f32 -0.5, %v2929
    %v2961 = vadd.f32 %v2960, 1.0
    %v2962 = vmul.f32 %v2961, %v2929
    %v2963 = vand.u32 2147483647, %v2929
    %vm2964 = vcmp.lt.f32.partialorder %v2963, 0.0004427343
    %v2965 = vsel %vm2964, %v2962, %v2959
    %v2966 = vadd.f32 %v2910, %v2938
    %v2967 = vadd.f32 %v2911, %v2947
    %v2968 = vadd.f32 %v2912, %v2956
    %v2969 = vadd.f32 %v2913, %v2965
    %v2970 = vadd.f32 %v2906, %v2966
    %v2971 = vadd.f32 %v2907, %v2967
    %v2972 = vadd.f32 %v2908, %v2968
    %v2973 = vadd.f32 %v2909, %v2969
    %v2974 = vsel %vm238, %v2586, -inf
    %2975 = vmax.xlane.f32.xlu0 %v2974
    %v2976 = vpop.xlane.xlu0 %2975
    %v2977 = vsel %vm238, %v2587, -inf
    %2978 = vmax.xlane.f32.xlu0 %v2977
    %v2979 = vpop.xlane.xlu0 %2978
    %v2980 = vsel %vm238, %v2588, -inf
    %2981 = vmax.xlane.f32.xlu0 %v2980
    %v2982 = vpop.xlane.xlu0 %2981
    %v2983 = vsel %vm238, %v2589, -inf
    %2984 = vmax.xlane.f32.xlu0 %v2983
    %v2985 = vpop.xlane.xlu0 %2984
    %v2986 = vsel %vm238, %v2590, -inf
    %2987 = vmax.xlane.f32.xlu0 %v2986
    %v2988 = vpop.xlane.xlu0 %2987
    %v2989 = vsel %vm238, %v2591, -inf
    %2990 = vmax.xlane.f32.xlu0 %v2989
    %v2991 = vpop.xlane.xlu0 %2990
    %v2992 = vsel %vm238, %v2592, -inf
    %2993 = vmax.xlane.f32.xlu0 %v2992
    %v2994 = vpop.xlane.xlu0 %2993
    %v2995 = vsel %vm238, %v2593, -inf
    %2996 = vmax.xlane.f32.xlu0 %v2995
    %v2997 = vpop.xlane.xlu0 %2996
    %v2998 = vmax.f32 %v2976, %v2979
    %v2999 = vrot.slane %v2998, 4
    %v3000 = vmax.f32 %v2998, %v2999
    %v3001 = vrot.slane %v3000, 2
    %v3002 = vmax.f32 %v3000, %v3001
    %v3003 = vrot.slane %v3002, 1
    %v3004 = vmax.f32 %v3002, %v3003
    %v3005 = vmax.f32 %v2982, %v2985
    %v3006 = vrot.slane %v3005, 4
    %v3007 = vmax.f32 %v3005, %v3006
    %v3008 = vrot.slane %v3007, 2
    %v3009 = vmax.f32 %v3007, %v3008
    %v3010 = vrot.slane %v3009, 1
    %v3011 = vmax.f32 %v3009, %v3010
    %v3012 = vmax.f32 %v2988, %v2991
    %v3013 = vrot.slane %v3012, 4
    %v3014 = vmax.f32 %v3012, %v3013
    %v3015 = vrot.slane %v3014, 2
    %v3016 = vmax.f32 %v3014, %v3015
    %v3017 = vrot.slane %v3016, 1
    %v3018 = vmax.f32 %v3016, %v3017
    %v3019 = vmax.f32 %v2994, %v2997
    %v3020 = vrot.slane %v3019, 4
    %v3021 = vmax.f32 %v3019, %v3020
    %v3022 = vrot.slane %v3021, 2
    %v3023 = vmax.f32 %v3021, %v3022
    %v3024 = vrot.slane %v3023, 1
    %v3025 = vmax.f32 %v3023, %v3024
    %v3026 = vsel %vm238, %v2834, inf
    %3027 = vmin.xlane.f32.xlu0 %v3026
    %v3028 = vpop.xlane.xlu0 %3027
    %v3029 = vsel %vm238, %v2835, inf
    %3030 = vmin.xlane.f32.xlu0 %v3029
    %v3031 = vpop.xlane.xlu0 %3030
    %v3032 = vsel %vm238, %v2836, inf
    %3033 = vmin.xlane.f32.xlu0 %v3032
    %v3034 = vpop.xlane.xlu0 %3033
    %v3035 = vsel %vm238, %v2837, inf
    %3036 = vmin.xlane.f32.xlu0 %v3035
    %v3037 = vpop.xlane.xlu0 %3036
    %v3038 = vsel %vm238, %v2838, inf
    %3039 = vmin.xlane.f32.xlu0 %v3038
    %v3040 = vpop.xlane.xlu0 %3039
    %v3041 = vsel %vm238, %v2839, inf
    %3042 = vmin.xlane.f32.xlu0 %v3041
    %v3043 = vpop.xlane.xlu0 %3042
    %v3044 = vsel %vm238, %v2840, inf
    %3045 = vmin.xlane.f32.xlu0 %v3044
    %v3046 = vpop.xlane.xlu0 %3045
    %v3047 = vsel %vm238, %v2841, inf
    %3048 = vmin.xlane.f32.xlu0 %v3047
    %v3049 = vpop.xlane.xlu0 %3048
    %v3050 = vmin.f32 %v3028, %v3031
    %v3051 = vrot.slane %v3050, 4
    %v3052 = vmin.f32 %v3050, %v3051
    %v3053 = vrot.slane %v3052, 2
    %v3054 = vmin.f32 %v3052, %v3053
    %v3055 = vrot.slane %v3054, 1
    %v3056 = vmin.f32 %v3054, %v3055
    %v3057 = vmin.f32 %v3034, %v3037
    %v3058 = vrot.slane %v3057, 4
    %v3059 = vmin.f32 %v3057, %v3058
    %v3060 = vrot.slane %v3059, 2
    %v3061 = vmin.f32 %v3059, %v3060
    %v3062 = vrot.slane %v3061, 1
    %v3063 = vmin.f32 %v3061, %v3062
    %v3064 = vmin.f32 %v3040, %v3043
    %v3065 = vrot.slane %v3064, 4
    %v3066 = vmin.f32 %v3064, %v3065
    %v3067 = vrot.slane %v3066, 2
    %v3068 = vmin.f32 %v3066, %v3067
    %v3069 = vrot.slane %v3068, 1
    %v3070 = vmin.f32 %v3068, %v3069
    %v3071 = vmin.f32 %v3046, %v3049
    %v3072 = vrot.slane %v3071, 4
    %v3073 = vmin.f32 %v3071, %v3072
    %v3074 = vrot.slane %v3073, 2
    %v3075 = vmin.f32 %v3073, %v3074
    %v3076 = vrot.slane %v3075, 1
    %v3077 = vmin.f32 %v3075, %v3076
    %v3078 = vsub.f32 0.0, %v3004
    %v3079 = vsub.f32 0.0, %v3011
    %v3080 = vsub.f32 0.0, %v3018
    %v3081 = vsub.f32 0.0, %v3025
    %v3082 = vmax.f32 %v3078, 0.0
    %v3083 = vmax.f32 %v3079, 0.0
    %v3084 = vmax.f32 %v3080, 0.0
    %v3085 = vmax.f32 %v3081, 0.0
    %v3086 = vand.u32 2147483647, %v3078
    %v3087 = vand.u32 2147483647, %v3079
    %v3088 = vand.u32 2147483647, %v3080
    %v3089 = vand.u32 2147483647, %v3081
    %v3090 = vsub.f32 0.0, %v3086
    %v3091 = vsub.f32 0.0, %v3087
    %v3092 = vsub.f32 0.0, %v3088
    %v3093 = vsub.f32 0.0, %v3089
    %v3094 = vmul.f32 %v3090, 1.442695
    %v3095 = vpow.pop %v3094
    %v3096 = vmul.f32 %v3091, 1.442695
    %v3097 = vpow.pop %v3096
    %v3098 = vmul.f32 %v3092, 1.442695
    %v3099 = vpow.pop %v3098
    %v3100 = vmul.f32 %v3093, 1.442695
    %v3101 = vpow.pop %v3100
    %v3102 = vadd.f32 %v3095, 1.0
    %v3103 = vlog2.pop %v3102
    %v3104 = vmul.f32 %v3103, 0.6931472
    %v3105 = vmul.f32 -0.5, %v3095
    %v3106 = vadd.f32 %v3105, 1.0
    %v3107 = vmul.f32 %v3106, %v3095
    %v3108 = vand.u32 2147483647, %v3095
    %vm3109 = vcmp.lt.f32.partialorder %v3108, 0.0004427343
    %v3110 = vsel %vm3109, %v3107, %v3104
    %v3111 = vadd.f32 %v3097, 1.0
    %v3112 = vlog2.pop %v3111
    %v3113 = vmul.f32 %v3112, 0.6931472
    %v3114 = vmul.f32 -0.5, %v3097
    %v3115 = vadd.f32 %v3114, 1.0
    %v3116 = vmul.f32 %v3115, %v3097
    %v3117 = vand.u32 2147483647, %v3097
    %vm3118 = vcmp.lt.f32.partialorder %v3117, 0.0004427343
    %v3119 = vsel %vm3118, %v3116, %v3113
    %v3120 = vadd.f32 %v3099, 1.0
    %v3121 = vlog2.pop %v3120
    %v3122 = vmul.f32 %v3121, 0.6931472
    %v3123 = vmul.f32 -0.5, %v3099
    %v3124 = vadd.f32 %v3123, 1.0
    %v3125 = vmul.f32 %v3124, %v3099
    %v3126 = vand.u32 2147483647, %v3099
    %vm3127 = vcmp.lt.f32.partialorder %v3126, 0.0004427343
    %v3128 = vsel %vm3127, %v3125, %v3122
    %v3129 = vadd.f32 %v3101, 1.0
    %v3130 = vlog2.pop %v3129
    %v3131 = vmul.f32 %v3130, 0.6931472
    %v3132 = vmul.f32 -0.5, %v3101
    %v3133 = vadd.f32 %v3132, 1.0
    %v3134 = vmul.f32 %v3133, %v3101
    %v3135 = vand.u32 2147483647, %v3101
    %vm3136 = vcmp.lt.f32.partialorder %v3135, 0.0004427343
    %v3137 = vsel %vm3136, %v3134, %v3131
    %v3138 = vadd.f32 %v3082, %v3110
    %v3139 = vadd.f32 %v3083, %v3119
    %v3140 = vadd.f32 %v3084, %v3128
    %v3141 = vadd.f32 %v3085, %v3137
    %v3142 = vadd.f32 %v2970, %v3138
    %v3143 = vadd.f32 %v2971, %v3139
    %v3144 = vadd.f32 %v2972, %v3140
    %v3145 = vadd.f32 %v2973, %v3141
    %v3146 = vmax.f32 %v3056, 0.0
    %v3147 = vmax.f32 %v3063, 0.0
    %v3148 = vmax.f32 %v3070, 0.0
    %v3149 = vmax.f32 %v3077, 0.0
    %v3150 = vand.u32 2147483647, %v3056
    %v3151 = vand.u32 2147483647, %v3063
    %v3152 = vand.u32 2147483647, %v3070
    %v3153 = vand.u32 2147483647, %v3077
    %v3154 = vsub.f32 0.0, %v3150
    %v3155 = vsub.f32 0.0, %v3151
    %v3156 = vsub.f32 0.0, %v3152
    %v3157 = vsub.f32 0.0, %v3153
    %v3158 = vmul.f32 %v3154, 1.442695
    %v3159 = vpow.pop %v3158
    %v3160 = vmul.f32 %v3155, 1.442695
    %v3161 = vpow.pop %v3160
    %v3162 = vmul.f32 %v3156, 1.442695
    %v3163 = vpow.pop %v3162
    %v3164 = vmul.f32 %v3157, 1.442695
    %v3165 = vpow.pop %v3164
    %v3166 = vadd.f32 %v3159, 1.0
    %v3167 = vlog2.pop %v3166
    %v3168 = vmul.f32 %v3167, 0.6931472
    %v3169 = vmul.f32 -0.5, %v3159
    %v3170 = vadd.f32 %v3169, 1.0
    %v3171 = vmul.f32 %v3170, %v3159
    %v3172 = vand.u32 2147483647, %v3159
    %vm3173 = vcmp.lt.f32.partialorder %v3172, 0.0004427343
    %v3174 = vsel %vm3173, %v3171, %v3168
    %v3175 = vadd.f32 %v3161, 1.0
    %v3176 = vlog2.pop %v3175
    %v3177 = vmul.f32 %v3176, 0.6931472
    %v3178 = vmul.f32 -0.5, %v3161
    %v3179 = vadd.f32 %v3178, 1.0
    %v3180 = vmul.f32 %v3179, %v3161
    %v3181 = vand.u32 2147483647, %v3161
    %vm3182 = vcmp.lt.f32.partialorder %v3181, 0.0004427343
    %v3183 = vsel %vm3182, %v3180, %v3177
    %v3184 = vadd.f32 %v3163, 1.0
    %v3185 = vlog2.pop %v3184
    %v3186 = vmul.f32 %v3185, 0.6931472
    %v3187 = vmul.f32 -0.5, %v3163
    %v3188 = vadd.f32 %v3187, 1.0
    %v3189 = vmul.f32 %v3188, %v3163
    %v3190 = vand.u32 2147483647, %v3163
    %vm3191 = vcmp.lt.f32.partialorder %v3190, 0.0004427343
    %v3192 = vsel %vm3191, %v3189, %v3186
    %v3193 = vadd.f32 %v3165, 1.0
    %v3194 = vlog2.pop %v3193
    %v3195 = vmul.f32 %v3194, 0.6931472
    %v3196 = vmul.f32 -0.5, %v3165
    %v3197 = vadd.f32 %v3196, 1.0
    %v3198 = vmul.f32 %v3197, %v3165
    %v3199 = vand.u32 2147483647, %v3165
    %vm3200 = vcmp.lt.f32.partialorder %v3199, 0.0004427343
    %v3201 = vsel %vm3200, %v3198, %v3195
    %v3202 = vadd.f32 %v3146, %v3174
    %v3203 = vadd.f32 %v3147, %v3183
    %v3204 = vadd.f32 %v3148, %v3192
    %v3205 = vadd.f32 %v3149, %v3201
    %v3206 = vadd.f32 %v3142, %v3202
    %v3207 = vadd.f32 %v3143, %v3203
    %v3208 = vadd.f32 %v3144, %v3204
    %v3209 = vadd.f32 %v3145, %v3205
    %vm3210 = vcmask 0
    %v3211 = vsel %vm3210, %v3206, 0.0
    %v3212 = vsel %vm3210, %v3207, 0.0
    %v3213 = vadd.f32 %v3211, %v3212
    %v3214 = vsel %vm3210, %v3208, 0.0
    %v3215 = vadd.f32 %v3213, %v3214
    %v3216 = vsel %vm3210, %v3209, 0.0
    %v3217 = vadd.f32 %v3215, %v3216
    %3218 = vadd.xlane.f32.xlu0 %v3217
    %v3219 = vpop.xlane.xlu0 %3218
    %v3220 = vrot.slane %v3219, 4
    %v3221 = vadd.f32 %v3219, %v3220
    %v3222 = vrot.slane %v3221, 2
    %v3223 = vadd.f32 %v3221, %v3222
    %v3224 = vrot.slane %v3223, 1
    %v3225 = vadd.f32 %v3223, %v3224
    %s3226 = vtos %v3225
    %v3227 = vrcp.pop 40.0
    %v3228 = vmul.f32 40.0, %v3227
    %v3229 = vsub.f32 1.0, %v3228
    %v3230 = vmul.f32 %v3227, %v3229
    %v3231 = vadd.f32 %v3227, %v3230
    %vm3232 = vweird.f32 %v3227
    %v3233 = vsel %vm3232, %v3227, %v3231
    %s3234 = vtos %v3233
    %s3235 = smul.f32 %s3226, %s3234
    %v3236 = vstv %s3235
    %v3237 = vadd.f32 %v3236, 0.0
    %3238 = vst.msk [vmem:[#allocation6] sm:$0x1] %vm3210, %v3237
    // Predicated region
    $region34: #{forward.1} parent=1 // pred_check
      _
    $region35: #{forward.1} parent=1 // pred_check_branch
      %3240 = sbr.rel (0) target = $region37
    $region36: #{forward.1} parent=1 // pred_region
      %3242 = vsyncadd [#allocation3], 0
      %s3243 = sshll.u32 [#allocation2], 4
      %s3244 = int_to_ptr.vmem [resolvable:$true] %s3243
      %s3245 = sshll.u32 %s8, 4
      %s3246 = int_to_ptr.hbm [resolvable:$true] %s3245
      %3251 = dma.vmem_to_hbm [thread:$0]  %s3244, 256, %s3246, [#allocation3], 128, 128, 8
    $region37: #{forward.1} parent=1 // pred_fallthru
      _
    // Predicated region
    $region38: #{forward.1} parent=1 // pred_check
      _
    $region39: #{forward.1} parent=1 // pred_check_branch
      %3253 = sbr.rel (0) target = $region41
    $region40: #{forward.1} parent=1 // pred_region
      %3255 = vsyncadd [#allocation5], 0
      %s3257 = sshll.u32 [#allocation4], 4
      %s3258 = int_to_ptr.vmem [resolvable:$true] %s3257
      %s3259 = sshll.u32 %s9, 4
      %s3260 = int_to_ptr.hbm [resolvable:$true] %s3259
      %3262 = dma.vmem_to_hbm [thread:$0]  %s3258, 128, %s3260, [#allocation5]
    $region41: #{forward.1} parent=1 // pred_fallthru
      _
    // Predicated region
    $region42: #{forward.1} parent=1 // pred_check
      _
    $region43: #{forward.1} parent=1 // pred_check_branch
      %3264 = sbr.rel (0) target = $region45
    $region44: #{forward.1} parent=1 // pred_region
      %3266 = vsyncadd [#allocation5], 0
      %s3268 = sshll.u32 [#allocation6], 4
      %s3269 = int_to_ptr.vmem [resolvable:$true] %s3268
      %s3270 = sshll.u32 %s10, 4
      %s3271 = int_to_ptr.hbm [resolvable:$true] %s3270
      %3273 = dma.vmem_to_hbm [thread:$0]  %s3269, 16, %s3271, [#allocation5]
    $region45: #{forward.1} parent=1 // pred_fallthru
      _
    // Predicated region
    $region46: #{forward.1} parent=1 // pred_check
      _
    $region47: #{forward.1} parent=1 // pred_check_branch
      %3275 = sbr.rel (0) target = $region49
    $region48: #{forward.1} parent=1 // pred_region
      %3277 = dma.done [#allocation3], 256
    $region49: #{forward.1} parent=1 // pred_fallthru
      _
    // Predicated region
    $region50: #{forward.1} parent=1 // pred_check
      _
    $region51: #{forward.1} parent=1 // pred_check_branch
      %3279 = sbr.rel (0) target = $region53
    $region52: #{forward.1} parent=1 // pred_region
      %3281 = dma.done [#allocation5], 128
    $region53: #{forward.1} parent=1 // pred_fallthru
      _
    // Predicated region
    $region54: #{forward.1} parent=1 // pred_check
      _
    $region55: #{forward.1} parent=1 // pred_check_branch
      %3283 = sbr.rel (0) target = $region57
    $region56: #{forward.1} parent=1 // pred_region
      %3285 = dma.done [#allocation5], 16
    $region57: #{forward.1} parent=1 // pred_fallthru
      _
    %3286 = vsyncpa [#allocation3], 1
    %3287 = vsyncpa [#allocation5], 1

</llo_original>
